<compile_context>
chip_gen: v7x
topology: tpu7x:2x2x1
jax: 0.10.0
libtpu: 0.0.40
codegen_flags: <defaults>
</compile_context>

<pallas_src>
import functools

import jax
import jax.numpy as jnp
from jax import lax
from jax.experimental import pallas as pl
from jax.experimental.pallas import tpu as pltpu


# ----------------------------- in-kernel math --------------------------------

def _layer_norm(x, g, b, eps=1e-5):
    mu = jnp.mean(x, axis=-1, keepdims=True)
    var = jnp.mean((x - mu) ** 2, axis=-1, keepdims=True)
    return (x - mu) * lax.rsqrt(var + eps) * g + b


def fused_encoder_kernel(feat_ref,
                         wq_ref, wk_ref, wv_ref, bq_ref, bk_ref, bv_ref,
                         wo_ref, bo_ref, ln1g_ref, ln1b_ref,
                         w1_ref, b1_ref, w2_ref, b2_ref, ln2g_ref, ln2b_ref,
                         hw1a_ref, hw1b_ref, hw1c_ref, hb1_ref,
                         hw2_ref, hb2_ref,
                         out_ref, x_scratch, *, num_heads):
    """grid = (batch, layer).  x_scratch carries the activation across layers."""
    l = pl.program_id(1)

    # First layer step of this batch element: load the input features.
    @pl.when(l == 0)
    def _():
        x_scratch[...] = feat_ref[0].astype(jnp.float32)

    x = x_scratch[...]                              # (S, D) f32
    S, D = x.shape
    dh = D // num_heads
    scale = 1.0 / (dh ** 0.5)

    # Per-layer weights, already head-split / transposed on the host.
    wq = wq_ref[0]                                  # (H, D, dh)
    wk = wk_ref[0]
    wv = wv_ref[0]
    bq = bq_ref[0]                                  # (H, 1, dh)
    bk = bk_ref[0]
    bv = bv_ref[0]
    wo = wo_ref[0]                                  # (H, dh, D)
    bo = bo_ref[0]                                  # (1, D)

    # ---- multi-head self-attention (batched over the head axis) ----
    xh = jnp.broadcast_to(x, (num_heads, S, D))     # (H, S, D)
    q = jnp.einsum("hsd,hde->hse", xh, wq, preferred_element_type=jnp.float32) + bq
    k = jnp.einsum("hsd,hde->hse", xh, wk, preferred_element_type=jnp.float32) + bk
    v = jnp.einsum("hsd,hde->hse", xh, wv, preferred_element_type=jnp.float32) + bv

    s = jnp.einsum("hqe,hke->hqk", q, k, preferred_element_type=jnp.float32) * scale
    s = s - jnp.max(s, axis=-1, keepdims=True)
    p = jnp.exp(s)
    p = p * pl.reciprocal(jnp.sum(p, axis=-1, keepdims=True), approx=True)
    ctx = jnp.einsum("hqk,hke->hqe", p, v, preferred_element_type=jnp.float32)

    # output projection == concat-over-heads @ Wo^T, done as batched matmul + sum
    attn = jnp.sum(
        jnp.einsum("hqe,hed->hqd", ctx, wo, preferred_element_type=jnp.float32),
        axis=0) + bo                                # (S, D)

    x1 = _layer_norm(x + attn, ln1g_ref[0], ln1b_ref[0])     # norm1 (post-norm)

    # ---- feed-forward ----
    h1 = jnp.maximum(
        jnp.dot(x1, w1_ref[0], preferred_element_type=jnp.float32) + b1_ref[0],
        0.0)                                                  # linear1 + relu
    ff = jnp.dot(h1, w2_ref[0], preferred_element_type=jnp.float32) + b2_ref[0]
    x2 = _layer_norm(x1 + ff, ln2g_ref[0], ln2b_ref[0])       # norm2

    x_scratch[...] = x2

    # ---- pool + classification head at the last layer step ----
    @pl.when(l == pl.num_programs(1) - 1)
    def _():
        mx = jnp.max(x2, axis=0, keepdims=True)               # (1, D)
        mn = jnp.min(x2, axis=0, keepdims=True)
        av = jnp.mean(x2, axis=0, keepdims=True)
        h = (jnp.dot(mx, hw1a_ref[...], preferred_element_type=jnp.float32)
             + jnp.dot(mn, hw1b_ref[...], preferred_element_type=jnp.float32)
             + jnp.dot(av, hw1c_ref[...], preferred_element_type=jnp.float32)
             + hb1_ref[...])
        h = jnp.maximum(h, 0.0)
        # nn.Dropout(p=0.3) -> identity in eval mode
        logits = jnp.dot(h, hw2_ref[...], preferred_element_type=jnp.float32) \
            + hb2_ref[...]
        out_ref[0] = logits.astype(out_ref.dtype)


# ----------------------------- host-side weight prep -------------------------

def prepare_params(params, num_heads):
    """Torch-layout (out,in) weights -> kernel layout (in,out), head-split,
    stacked over layers with a leading L axis."""
    layers = params["layers"]
    L = len(layers)
    D = layers[0]["wq"].shape[0]
    H = num_heads
    dh = D // H
    F = layers[0]["w1"].shape[0]

    def stack(name):
        return jnp.stack([lp[name] for lp in layers])          # (L, ...)

    # q/k/v:   W (D_out, D_in) -> (H, D_in, dh) per layer.
    def split_qkv(w):                                          # (L, D, D)
        return w.reshape(L, H, dh, D).transpose(0, 1, 3, 2)    # (L, H, D, dh)

    def split_bias(b):                                         # (L, 1, D)
        return b.reshape(L, H, 1, dh)                          # (L, H, 1, dh)

    # out-proj: W (D_out, D_in=H*dh) -> (H, dh, D_out) per layer.
    wo = stack("wo").reshape(L, D, H, dh).transpose(0, 2, 3, 1)  # (L, H, dh, D)

    head_w1_t = params["head_w1"].T                            # (3D, D)
    kp = dict(
        wq=split_qkv(stack("wq")), wk=split_qkv(stack("wk")),
        wv=split_qkv(stack("wv")),
        bq=split_bias(stack("bq")), bk=split_bias(stack("bk")),
        bv=split_bias(stack("bv")),
        wo=wo, bo=stack("bo"),
        ln1g=stack("ln1_g"), ln1b=stack("ln1_b"),
        ln2g=stack("ln2_g"), ln2b=stack("ln2_b"),
        w1=stack("w1").transpose(0, 2, 1),                     # (L, D, F)
        b1=stack("b1"),                                        # (L, 1, F)
        w2=stack("w2").transpose(0, 2, 1),                     # (L, F, D)
        b2=stack("b2"),                                        # (L, 1, D)
        hw1a=head_w1_t[0 * D:1 * D],                           # (D, D) max slab
        hw1b=head_w1_t[1 * D:2 * D],                           # (D, D) min slab
        hw1c=head_w1_t[2 * D:3 * D],                           # (D, D) avg slab
        hb1=params["head_b1"],                                 # (1, D)
        hw2=params["head_w2"].T,                               # (D, out_dim)
        hb2=params["head_b2"],                                 # (1, out_dim)
    )
    assert kp["w1"].shape == (L, D, F)
    return kp


# ----------------------------- fused forward ---------------------------------

def encoder_sentiment_forward(lemma_pos_embed, pos_indices, params, *, num_heads):
    # Embedding gather + add is glue; XLA fuses the add into the gather.
    pos_embeds = jnp.take(params["pos_embedding"], pos_indices, axis=0)
    features = (pos_embeds + lemma_pos_embed).astype(jnp.float32)  # (B, S, D)

    kp = prepare_params(params, num_heads)
    B, S, D = features.shape
    H = num_heads
    dh = D // H
    L = kp["wq"].shape[0]
    F = kp["w1"].shape[-1]
    out_dim = kp["hw2"].shape[-1]

    lmap4 = lambda b, l: (l, 0, 0, 0)       # per-layer 4D weights
    lmap3 = lambda b, l: (l, 0, 0)          # per-layer 3D weights / biases
    full2 = lambda b, l: (0, 0)             # head weights (same every step)

    in_specs = [
        pl.BlockSpec((1, S, D), lambda b, l: (b, 0, 0)),       # features
        pl.BlockSpec((1, H, D, dh), lmap4),                    # wq
        pl.BlockSpec((1, H, D, dh), lmap4),                    # wk
        pl.BlockSpec((1, H, D, dh), lmap4),                    # wv
        pl.BlockSpec((1, H, 1, dh), lmap4),                    # bq
        pl.BlockSpec((1, H, 1, dh), lmap4),                    # bk
        pl.BlockSpec((1, H, 1, dh), lmap4),                    # bv
        pl.BlockSpec((1, H, dh, D), lmap4),                    # wo
        pl.BlockSpec((1, 1, D), lmap3),                        # bo
        pl.BlockSpec((1, 1, D), lmap3),                        # ln1_g
        pl.BlockSpec((1, 1, D), lmap3),                        # ln1_b
        pl.BlockSpec((1, D, F), lmap3),                        # w1
        pl.BlockSpec((1, 1, F), lmap3),                        # b1
        pl.BlockSpec((1, F, D), lmap3),                        # w2
        pl.BlockSpec((1, 1, D), lmap3),                        # b2
        pl.BlockSpec((1, 1, D), lmap3),                        # ln2_g
        pl.BlockSpec((1, 1, D), lmap3),                        # ln2_b
        pl.BlockSpec((D, D), full2),                           # hw1a (max)
        pl.BlockSpec((D, D), full2),                           # hw1b (min)
        pl.BlockSpec((D, D), full2),                           # hw1c (avg)
        pl.BlockSpec((1, D), full2),                           # hb1
        pl.BlockSpec((D, out_dim), full2),                     # hw2
        pl.BlockSpec((1, out_dim), full2),                     # hb2
    ]

    out = pl.pallas_call(
        functools.partial(fused_encoder_kernel, num_heads=num_heads),
        out_shape=jax.ShapeDtypeStruct((B, 1, out_dim), jnp.float32),
        grid_spec=pltpu.PrefetchScalarGridSpec(
            num_scalar_prefetch=0,
            grid=(B, L),
            in_specs=in_specs,
            out_specs=pl.BlockSpec((1, 1, out_dim), lambda b, l: (b, 0, 0)),
            scratch_shapes=[pltpu.VMEM((S, D), jnp.float32)],
        ),
        compiler_params=pltpu.CompilerParams(
            dimension_semantics=("parallel", "arbitrary")),
    )(features,
      kp["wq"], kp["wk"], kp["wv"], kp["bq"], kp["bk"], kp["bv"],
      kp["wo"], kp["bo"], kp["ln1g"], kp["ln1b"],
      kp["w1"], kp["b1"], kp["w2"], kp["b2"], kp["ln2g"], kp["ln2b"],
      kp["hw1a"], kp["hw1b"], kp["hw1c"], kp["hb1"], kp["hw2"], kp["hb2"])

    return out[:, 0, :]                                        # (B, out_dim)


# ----------------------------- pure-JAX reference ----------------------------

def _ref_dense(x, w, b):
    return jnp.einsum("bsd,ed->bse", x, w) + b


def _ref_layer_norm(x, g, b, eps=1e-5):
    mu = jnp.mean(x, axis=-1, keepdims=True)
    var = jnp.mean((x - mu) ** 2, axis=-1, keepdims=True)
    return (x - mu) * lax.rsqrt(var + eps) * g + b


def _ref_encoder_layer(x, lp, num_heads):
    D = x.shape[-1]
    dh = D // num_heads
    scale = 1.0 / (dh ** 0.5)
    q = _ref_dense(x, lp["wq"], lp["bq"])
    k = _ref_dense(x, lp["wk"], lp["bk"])
    v = _ref_dense(x, lp["wv"], lp["bv"])
    heads = []
    for h in range(num_heads):
        sl = slice(h * dh, (h + 1) * dh)
        s = jnp.einsum("bqd,bkd->bqk", q[..., sl], k[..., sl]) * scale
        p = jax.nn.softmax(s, axis=-1)
        heads.append(jnp.einsum("bqk,bkd->bqd", p, v[..., sl]))
    ctx = jnp.concatenate(heads, axis=-1)
    attn = _ref_dense(ctx, lp["wo"], lp["bo"])
    x1 = _ref_layer_norm(x + attn, lp["ln1_g"], lp["ln1_b"])
    h1 = jnp.maximum(_ref_dense(x1, lp["w1"], lp["b1"]), 0.0)
    ff = _ref_dense(h1, lp["w2"], lp["b2"])
    return _ref_layer_norm(x1 + ff, lp["ln2_g"], lp["ln2_b"])


def reference_forward(lemma_pos_embed, pos_indices, params, *, num_heads):
    pos_embeds = jnp.take(params["pos_embedding"], pos_indices, axis=0)
    x = (pos_embeds + lemma_pos_embed).astype(jnp.float32)
    for lp in params["layers"]:
        x = _ref_encoder_layer(x, lp, num_heads)
    max_pool = jnp.max(x, axis=1)
    min_pool = jnp.min(x, axis=1)
    avg_pool = jnp.mean(x, axis=1)
    cat = jnp.concatenate([max_pool, min_pool, avg_pool], axis=-1)
    h = jnp.maximum(cat @ params["head_w1"].T + params["head_b1"], 0.0)
    return h @ params["head_w2"].T + params["head_b2"]


# ----------------------------- deterministic params --------------------------

def init_params(key, *, d_model, dim_ff, num_layers, vocab_len, out_dim,
                pad_idx=0):
    def nrm(k, shape, s=0.05):
        return jax.random.normal(k, shape, jnp.float32) * s

    keys = jax.random.split(key, num_layers + 2)
    layers = []
    for l in range(num_layers):
        ks = jax.random.split(keys[l], 12)
        layers.append(dict(
            wq=nrm(ks[0], (d_model, d_model)), bq=nrm(ks[1], (1, d_model)),
            wk=nrm(ks[2], (d_model, d_model)), bk=nrm(ks[3], (1, d_model)),
            wv=nrm(ks[4], (d_model, d_model)), bv=nrm(ks[5], (1, d_model)),
            wo=nrm(ks[6], (d_model, d_model)), bo=nrm(ks[7], (1, d_model)),
            w1=nrm(ks[8], (dim_ff, d_model)), b1=nrm(ks[9], (1, dim_ff)),
            w2=nrm(ks[10], (d_model, dim_ff)), b2=nrm(ks[11], (1, d_model)),
            ln1_g=jnp.ones((1, d_model), jnp.float32),
            ln1_b=jnp.zeros((1, d_model), jnp.float32),
            ln2_g=jnp.ones((1, d_model), jnp.float32),
            ln2_b=jnp.zeros((1, d_model), jnp.float32),
        ))

    kh = jax.random.split(keys[num_layers], 5)
    pos_emb = nrm(kh[0], (vocab_len, d_model), 0.1)
    pos_emb = pos_emb.at[pad_idx].set(0.0)   # nn.Embedding padding_idx row = 0

    return dict(
        layers=layers,
        pos_embedding=pos_emb,
        head_w1=nrm(kh[1], (d_model, 3 * d_model)),
        head_b1=nrm(kh[2], (1, d_model)),
        head_w2=nrm(kh[3], (out_dim, d_model)),
        head_b2=nrm(kh[4], (1, out_dim)),
    )


# ----------------------------- main -------------------------------------------

if __name__ == "__main__":
    # Small, module-consistent shapes.
    B, S, D = 2, 8, 32          # batch, seq_len, input_dim (d_model)
    NUM_HEADS = 4
    DIM_FF = 64
    NUM_LAYERS = 2
    POS_VOCAB_LEN = 12          # stand-in for len(POS_VOCAB), '<PAD>' = index 0
    OUT_DIM = 3

    key = jax.random.PRNGKey(0)
    k_emb, k_idx, k_par = jax.random.split(key, 3)

    lemma_plus_pos = jax.random.normal(k_emb, (B, S, D), jnp.float32)
    pos_tag_indices = jax.random.randint(k_idx, (B, S), 0, POS_VOCAB_LEN,
                                         dtype=jnp.int32)

    params = init_params(k_par, d_model=D, dim_ff=DIM_FF,
                         num_layers=NUM_LAYERS, vocab_len=POS_VOCAB_LEN,
                         out_dim=OUT_DIM, pad_idx=0)

    logits = encoder_sentiment_forward(lemma_plus_pos, pos_tag_indices, params,
                                       num_heads=NUM_HEADS)
    logits = jax.block_until_ready(logits)

    ref = reference_forward(lemma_plus_pos, pos_tag_indices, params,
                            num_heads=NUM_HEADS)
    assert logits.shape == (B, OUT_DIM)
    # Tolerance bounded by the approximate (EUP) reciprocal in the softmax;
    # everything else is exact f32.
    assert jnp.allclose(logits, ref, atol=1e-2, rtol=1e-2), (
        f"max diff {jnp.max(jnp.abs(logits - ref))}")

    print("KERNEL_OK")
</pallas_src>

<mosaic_0001>
module attributes {stable_mosaic.version = 11 : i64} {
  func.func @fused_encoder_kernel(%arg0: i32, %arg1: i32, %arg2: memref<1x8x32xf32, #tpu.memory_space<vmem>>, %arg3: memref<1x4x32x8xf32, #tpu.memory_space<vmem>>, %arg4: memref<1x4x32x8xf32, #tpu.memory_space<vmem>>, %arg5: memref<1x4x32x8xf32, #tpu.memory_space<vmem>>, %arg6: memref<1x4x1x8xf32, #tpu.memory_space<vmem>>, %arg7: memref<1x4x1x8xf32, #tpu.memory_space<vmem>>, %arg8: memref<1x4x1x8xf32, #tpu.memory_space<vmem>>, %arg9: memref<1x4x8x32xf32, #tpu.memory_space<vmem>>, %arg10: memref<1x1x32xf32, #tpu.memory_space<vmem>>, %arg11: memref<1x1x32xf32, #tpu.memory_space<vmem>>, %arg12: memref<1x1x32xf32, #tpu.memory_space<vmem>>, %arg13: memref<1x32x64xf32, #tpu.memory_space<vmem>>, %arg14: memref<1x1x64xf32, #tpu.memory_space<vmem>>, %arg15: memref<1x64x32xf32, #tpu.memory_space<vmem>>, %arg16: memref<1x1x32xf32, #tpu.memory_space<vmem>>, %arg17: memref<1x1x32xf32, #tpu.memory_space<vmem>>, %arg18: memref<1x1x32xf32, #tpu.memory_space<vmem>>, %arg19: memref<32x32xf32, #tpu.memory_space<vmem>>, %arg20: memref<32x32xf32, #tpu.memory_space<vmem>>, %arg21: memref<32x32xf32, #tpu.memory_space<vmem>>, %arg22: memref<1x32xf32, #tpu.memory_space<vmem>>, %arg23: memref<32x3xf32, #tpu.memory_space<vmem>>, %arg24: memref<1x3xf32, #tpu.memory_space<vmem>>, %arg25: memref<1x1x3xf32, #tpu.memory_space<vmem>>, %arg26: memref<8x32xf32, #tpu.memory_space<vmem>>) attributes {dimension_semantics = [#tpu.dimension_semantics<parallel>, #tpu.dimension_semantics<arbitrary>], iteration_bounds = array<i64: 2, 2>, scalar_prefetch = 0 : i64, scratch_operands = 1 : i64, tpu.core_type = #tpu.core_type<tc>, window_params = [{transform_indices = @transform_0, window_bounds = array<i64: 1, 8, 32>}, {transform_indices = @transform_1, window_bounds = array<i64: 1, 4, 32, 8>}, {transform_indices = @transform_2, window_bounds = array<i64: 1, 4, 32, 8>}, {transform_indices = @transform_3, window_bounds = array<i64: 1, 4, 32, 8>}, {transform_indices = @transform_4, window_bounds = array<i64: 1, 4, 1, 8>}, {transform_indices = @transform_5, window_bounds = array<i64: 1, 4, 1, 8>}, {transform_indices = @transform_6, window_bounds = array<i64: 1, 4, 1, 8>}, {transform_indices = @transform_7, window_bounds = array<i64: 1, 4, 8, 32>}, {transform_indices = @transform_8, window_bounds = array<i64: 1, 1, 32>}, {transform_indices = @transform_9, window_bounds = array<i64: 1, 1, 32>}, {transform_indices = @transform_10, window_bounds = array<i64: 1, 1, 32>}, {transform_indices = @transform_11, window_bounds = array<i64: 1, 32, 64>}, {transform_indices = @transform_12, window_bounds = array<i64: 1, 1, 64>}, {transform_indices = @transform_13, window_bounds = array<i64: 1, 64, 32>}, {transform_indices = @transform_14, window_bounds = array<i64: 1, 1, 32>}, {transform_indices = @transform_15, window_bounds = array<i64: 1, 1, 32>}, {transform_indices = @transform_16, window_bounds = array<i64: 1, 1, 32>}, {pipeline_mode = #tpu.pipeline_mode<synchronous>, transform_indices = @transform_17, window_bounds = array<i64: 32, 32>}, {pipeline_mode = #tpu.pipeline_mode<synchronous>, transform_indices = @transform_18, window_bounds = array<i64: 32, 32>}, {pipeline_mode = #tpu.pipeline_mode<synchronous>, transform_indices = @transform_19, window_bounds = array<i64: 32, 32>}, {pipeline_mode = #tpu.pipeline_mode<synchronous>, transform_indices = @transform_20, window_bounds = array<i64: 1, 32>}, {pipeline_mode = #tpu.pipeline_mode<synchronous>, transform_indices = @transform_21, window_bounds = array<i64: 32, 3>}, {pipeline_mode = #tpu.pipeline_mode<synchronous>, transform_indices = @transform_22, window_bounds = array<i64: 1, 3>}, {transform_indices = @transform_23, window_bounds = array<i64: 1, 1, 3>}]} {
    %c0_i32 = arith.constant 0 : i32
    %0 = arith.cmpi eq, %arg1, %c0_i32 : i32
    %1 = arith.extui %0 : i1 to i32
    %c0_i32_0 = arith.constant 0 : i32
    %2 = arith.cmpi ne, %1, %c0_i32_0 : i32
    scf.if %2 {
      %c0_82 = arith.constant 0 : index
      %c0_83 = arith.constant 0 : index
      %c0_84 = arith.constant 0 : index
      %123 = vector.load %arg2[%c0_82, %c0_83, %c0_84] : memref<1x8x32xf32, #tpu.memory_space<vmem>>, vector<1x8x32xf32>
      %124 = vector.shape_cast %123 : vector<1x8x32xf32> to vector<8x32xf32>
      %c0_85 = arith.constant 0 : index
      %c0_86 = arith.constant 0 : index
      %125 = vector.load %arg26[%c0_85, %c0_86] : memref<8x32xf32, #tpu.memory_space<vmem>>, vector<8x32xf32>
      tpu.vector_store %arg26[%c0_85, %c0_86], %124 {strides = array<i32>} : memref<8x32xf32, #tpu.memory_space<vmem>>, vector<8x32xf32>,
    } else {
    }
    %c0 = arith.constant 0 : index
    %c0_1 = arith.constant 0 : index
    %3 = vector.load %arg26[%c0, %c0_1] : memref<8x32xf32, #tpu.memory_space<vmem>>, vector<8x32xf32>
    %c0_2 = arith.constant 0 : index
    %c0_3 = arith.constant 0 : index
    %c0_4 = arith.constant 0 : index
    %c0_5 = arith.constant 0 : index
    %4 = vector.load %arg3[%c0_2, %c0_3, %c0_4, %c0_5] : memref<1x4x32x8xf32, #tpu.memory_space<vmem>>, vector<1x4x32x8xf32>
    %5 = vector.shape_cast %4 : vector<1x4x32x8xf32> to vector<4x32x8xf32>
    %c0_6 = arith.constant 0 : index
    %c0_7 = arith.constant 0 : index
    %c0_8 = arith.constant 0 : index
    %c0_9 = arith.constant 0 : index
    %6 = vector.load %arg4[%c0_6, %c0_7, %c0_8, %c0_9] : memref<1x4x32x8xf32, #tpu.memory_space<vmem>>, vector<1x4x32x8xf32>
    %7 = vector.shape_cast %6 : vector<1x4x32x8xf32> to vector<4x32x8xf32>
    %c0_10 = arith.constant 0 : index
    %c0_11 = arith.constant 0 : index
    %c0_12 = arith.constant 0 : index
    %c0_13 = arith.constant 0 : index
    %8 = vector.load %arg5[%c0_10, %c0_11, %c0_12, %c0_13] : memref<1x4x32x8xf32, #tpu.memory_space<vmem>>, vector<1x4x32x8xf32>
    %9 = vector.shape_cast %8 : vector<1x4x32x8xf32> to vector<4x32x8xf32>
    %c0_14 = arith.constant 0 : index
    %c0_15 = arith.constant 0 : index
    %c0_16 = arith.constant 0 : index
    %c0_17 = arith.constant 0 : index
    %10 = vector.load %arg6[%c0_14, %c0_15, %c0_16, %c0_17] : memref<1x4x1x8xf32, #tpu.memory_space<vmem>>, vector<1x4x1x8xf32>
    %11 = vector.shape_cast %10 : vector<1x4x1x8xf32> to vector<4x1x8xf32>
    %c0_18 = arith.constant 0 : index
    %c0_19 = arith.constant 0 : index
    %c0_20 = arith.constant 0 : index
    %c0_21 = arith.constant 0 : index
    %12 = vector.load %arg7[%c0_18, %c0_19, %c0_20, %c0_21] : memref<1x4x1x8xf32, #tpu.memory_space<vmem>>, vector<1x4x1x8xf32>
    %13 = vector.shape_cast %12 : vector<1x4x1x8xf32> to vector<4x1x8xf32>
    %c0_22 = arith.constant 0 : index
    %c0_23 = arith.constant 0 : index
    %c0_24 = arith.constant 0 : index
    %c0_25 = arith.constant 0 : index
    %14 = vector.load %arg8[%c0_22, %c0_23, %c0_24, %c0_25] : memref<1x4x1x8xf32, #tpu.memory_space<vmem>>, vector<1x4x1x8xf32>
    %15 = vector.shape_cast %14 : vector<1x4x1x8xf32> to vector<4x1x8xf32>
    %c0_26 = arith.constant 0 : index
    %c0_27 = arith.constant 0 : index
    %c0_28 = arith.constant 0 : index
    %c0_29 = arith.constant 0 : index
    %16 = vector.load %arg9[%c0_26, %c0_27, %c0_28, %c0_29] : memref<1x4x8x32xf32, #tpu.memory_space<vmem>>, vector<1x4x8x32xf32>
    %17 = vector.shape_cast %16 : vector<1x4x8x32xf32> to vector<4x8x32xf32>
    %c0_30 = arith.constant 0 : index
    %c0_31 = arith.constant 0 : index
    %c0_32 = arith.constant 0 : index
    %18 = vector.load %arg10[%c0_30, %c0_31, %c0_32] : memref<1x1x32xf32, #tpu.memory_space<vmem>>, vector<1x1x32xf32>
    %19 = vector.shape_cast %18 : vector<1x1x32xf32> to vector<1x32xf32>
    %20 = vector.shape_cast %3 : vector<8x32xf32> to vector<1x8x32xf32>
    %21 = vector.broadcast %20 : vector<1x8x32xf32> to vector<4x8x32xf32>
    "tpu.trace_start"() <{level = 10 : i32, message = "hsd,hde->hse"}> : () -> ()
    %cst = arith.constant dense<0.000000e+00> : vector<4x8x8xf32>
    %22 = tpu.matmul %21, %5, %cst {dimension_numbers = #tpu.dot_dimension_numbers<[2], [1], [1], [2], [0, 0, 0, 1, 1, 2], [0], [0]>} : vector<4x8x32xf32>, vector<4x32x8xf32>, vector<4x8x8xf32> -> vector<4x8x8xf32>
    "tpu.trace_stop"() : () -> ()
    %23 = vector.broadcast %11 : vector<4x1x8xf32> to vector<4x8x8xf32>
    %24 = arith.addf %22, %23 : vector<4x8x8xf32>
    "tpu.trace_start"() <{level = 10 : i32, message = "hsd,hde->hse"}> : () -> ()
    %cst_33 = arith.constant dense<0.000000e+00> : vector<4x8x8xf32>
    %25 = tpu.matmul %21, %7, %cst_33 {dimension_numbers = #tpu.dot_dimension_numbers<[2], [1], [1], [2], [0, 0, 0, 1, 1, 2], [0], [0]>} : vector<4x8x32xf32>, vector<4x32x8xf32>, vector<4x8x8xf32> -> vector<4x8x8xf32>
    "tpu.trace_stop"() : () -> ()
    %26 = vector.broadcast %13 : vector<4x1x8xf32> to vector<4x8x8xf32>
    %27 = arith.addf %25, %26 : vector<4x8x8xf32>
    "tpu.trace_start"() <{level = 10 : i32, message = "hsd,hde->hse"}> : () -> ()
    %cst_34 = arith.constant dense<0.000000e+00> : vector<4x8x8xf32>
    %28 = tpu.matmul %21, %9, %cst_34 {dimension_numbers = #tpu.dot_dimension_numbers<[2], [1], [1], [2], [0, 0, 0, 1, 1, 2], [0], [0]>} : vector<4x8x32xf32>, vector<4x32x8xf32>, vector<4x8x8xf32> -> vector<4x8x8xf32>
    "tpu.trace_stop"() : () -> ()
    %29 = vector.broadcast %15 : vector<4x1x8xf32> to vector<4x8x8xf32>
    %30 = arith.addf %28, %29 : vector<4x8x8xf32>
    "tpu.trace_start"() <{level = 10 : i32, message = "hqe,hke->hqk"}> : () -> ()
    %cst_35 = arith.constant dense<0.000000e+00> : vector<4x8x8xf32>
    %31 = tpu.matmul %24, %27, %cst_35 {dimension_numbers = #tpu.dot_dimension_numbers<[2], [2], [1], [1], [0, 0, 0, 1, 1, 1], [0], [0]>} : vector<4x8x8xf32>, vector<4x8x8xf32>, vector<4x8x8xf32> -> vector<4x8x8xf32>
    "tpu.trace_stop"() : () -> ()
    %cst_36 = arith.constant 0.353553385 : f32
    %32 = vector.broadcast %cst_36 : f32 to vector<4x8x8xf32>
    %33 = arith.mulf %31, %32 : vector<4x8x8xf32>
    %cst_37 = arith.constant dense<0xFF800000> : vector<4x8xf32>
    %34 = vector.multi_reduction <maximumf>, %33, %cst_37 [2] : vector<4x8x8xf32> to vector<4x8xf32>
    %35 = vector.shape_cast %34 : vector<4x8xf32> to vector<4x8x1xf32>
    %36 = vector.broadcast %35 : vector<4x8x1xf32> to vector<4x8x8xf32>
    %37 = arith.subf %33, %36 : vector<4x8x8xf32>
    %38 = math.exp %37 : vector<4x8x8xf32>
    %cst_38 = arith.constant dense<0.000000e+00> : vector<4x8xf32>
    %39 = vector.multi_reduction <add>, %38, %cst_38 [2] : vector<4x8x8xf32> to vector<4x8xf32>
    %40 = vector.shape_cast %39 : vector<4x8xf32> to vector<4x8x1xf32>
    %41 = tpu.reciprocal %40 {approx = true} : vector<4x8x1xf32> -> vector<4x8x1xf32>
    %42 = vector.broadcast %41 : vector<4x8x1xf32> to vector<4x8x8xf32>
    %43 = arith.mulf %38, %42 : vector<4x8x8xf32>
    "tpu.trace_start"() <{level = 10 : i32, message = "hqk,hke->hqe"}> : () -> ()
    %cst_39 = arith.constant dense<0.000000e+00> : vector<4x8x8xf32>
    %44 = tpu.matmul %43, %30, %cst_39 {dimension_numbers = #tpu.dot_dimension_numbers<[2], [1], [1], [2], [0, 0, 0, 1, 1, 2], [0], [0]>} : vector<4x8x8xf32>, vector<4x8x8xf32>, vector<4x8x8xf32> -> vector<4x8x8xf32>
    "tpu.trace_stop"() : () -> ()
    "tpu.trace_start"() <{level = 10 : i32, message = "hqe,hed->hqd"}> : () -> ()
    %cst_40 = arith.constant dense<0.000000e+00> : vector<4x8x32xf32>
    %45 = tpu.matmul %44, %17, %cst_40 {dimension_numbers = #tpu.dot_dimension_numbers<[2], [1], [1], [2], [0, 0, 0, 1, 1, 2], [0], [0]>} : vector<4x8x8xf32>, vector<4x8x32xf32>, vector<4x8x32xf32> -> vector<4x8x32xf32>
    "tpu.trace_stop"() : () -> ()
    %cst_41 = arith.constant dense<0.000000e+00> : vector<8x32xf32>
    %46 = vector.multi_reduction <add>, %45, %cst_41 [0] : vector<4x8x32xf32> to vector<8x32xf32>
    %47 = vector.broadcast %19 : vector<1x32xf32> to vector<8x32xf32>
    %48 = arith.addf %46, %47 : vector<8x32xf32>
    %49 = arith.addf %3, %48 : vector<8x32xf32>
    %c0_42 = arith.constant 0 : index
    %c0_43 = arith.constant 0 : index
    %c0_44 = arith.constant 0 : index
    %50 = vector.load %arg11[%c0_42, %c0_43, %c0_44] : memref<1x1x32xf32, #tpu.memory_space<vmem>>, vector<1x1x32xf32>
    %51 = vector.shape_cast %50 : vector<1x1x32xf32> to vector<1x32xf32>
    %c0_45 = arith.constant 0 : index
    %c0_46 = arith.constant 0 : index
    %c0_47 = arith.constant 0 : index
    %52 = vector.load %arg12[%c0_45, %c0_46, %c0_47] : memref<1x1x32xf32, #tpu.memory_space<vmem>>, vector<1x1x32xf32>
    %53 = vector.shape_cast %52 : vector<1x1x32xf32> to vector<1x32xf32>
    %cst_48 = arith.constant dense<0.000000e+00> : vector<8xf32>
    %54 = vector.multi_reduction <add>, %49, %cst_48 [1] : vector<8x32xf32> to vector<8xf32>
    %55 = vector.shape_cast %54 : vector<8xf32> to vector<8x1xf32>
    %cst_49 = arith.constant 3.200000e+01 : f32
    %56 = vector.broadcast %cst_49 : f32 to vector<8x1xf32>
    %57 = arith.divf %55, %56 : vector<8x1xf32>
    %58 = vector.broadcast %57 : vector<8x1xf32> to vector<8x32xf32>
    %59 = arith.subf %49, %58 : vector<8x32xf32>
    %60 = arith.mulf %59, %59 : vector<8x32xf32>
    %cst_50 = arith.constant dense<0.000000e+00> : vector<8xf32>
    %61 = vector.multi_reduction <add>, %60, %cst_50 [1] : vector<8x32xf32> to vector<8xf32>
    %62 = vector.shape_cast %61 : vector<8xf32> to vector<8x1xf32>
    %cst_51 = arith.constant 3.200000e+01 : f32
    %63 = vector.broadcast %cst_51 : f32 to vector<8x1xf32>
    %64 = arith.divf %62, %63 : vector<8x1xf32>
    %65 = vector.broadcast %57 : vector<8x1xf32> to vector<8x32xf32>
    %66 = arith.subf %49, %65 : vector<8x32xf32>
    %cst_52 = arith.constant 9.99999974E-6 : f32
    %67 = vector.broadcast %cst_52 : f32 to vector<8x1xf32>
    %68 = arith.addf %64, %67 : vector<8x1xf32>
    %69 = math.rsqrt %68 : vector<8x1xf32>
    %70 = vector.broadcast %69 : vector<8x1xf32> to vector<8x32xf32>
    %71 = arith.mulf %66, %70 : vector<8x32xf32>
    %72 = vector.broadcast %51 : vector<1x32xf32> to vector<8x32xf32>
    %73 = arith.mulf %71, %72 : vector<8x32xf32>
    %74 = vector.broadcast %53 : vector<1x32xf32> to vector<8x32xf32>
    %75 = arith.addf %73, %74 : vector<8x32xf32>
    %c0_53 = arith.constant 0 : index
    %c0_54 = arith.constant 0 : index
    %c0_55 = arith.constant 0 : index
    %76 = vector.load %arg13[%c0_53, %c0_54, %c0_55] : memref<1x32x64xf32, #tpu.memory_space<vmem>>, vector<1x32x64xf32>
    %77 = vector.shape_cast %76 : vector<1x32x64xf32> to vector<32x64xf32>
    %cst_56 = arith.constant dense<0.000000e+00> : vector<8x64xf32>
    %78 = tpu.matmul %75, %77, %cst_56 {dimension_numbers = #tpu.dot_dimension_numbers<[1], [0], [0], [1], [0, 0, 1, 1], [], []>} : vector<8x32xf32>, vector<32x64xf32>, vector<8x64xf32> -> vector<8x64xf32>
    %c0_57 = arith.constant 0 : index
    %c0_58 = arith.constant 0 : index
    %c0_59 = arith.constant 0 : index
    %79 = vector.load %arg14[%c0_57, %c0_58, %c0_59] : memref<1x1x64xf32, #tpu.memory_space<vmem>>, vector<1x1x64xf32>
    %80 = vector.shape_cast %79 : vector<1x1x64xf32> to vector<1x64xf32>
    %81 = vector.broadcast %80 : vector<1x64xf32> to vector<8x64xf32>
    %82 = arith.addf %78, %81 : vector<8x64xf32>
    %cst_60 = arith.constant 0.000000e+00 : f32
    %83 = vector.broadcast %cst_60 : f32 to vector<8x64xf32>
    %84 = arith.maximumf %82, %83 : vector<8x64xf32>
    %c0_61 = arith.constant 0 : index
    %c0_62 = arith.constant 0 : index
    %c0_63 = arith.constant 0 : index
    %85 = vector.load %arg15[%c0_61, %c0_62, %c0_63] : memref<1x64x32xf32, #tpu.memory_space<vmem>>, vector<1x64x32xf32>
    %86 = vector.shape_cast %85 : vector<1x64x32xf32> to vector<64x32xf32>
    %cst_64 = arith.constant dense<0.000000e+00> : vector<8x32xf32>
    %87 = tpu.matmul %84, %86, %cst_64 {dimension_numbers = #tpu.dot_dimension_numbers<[1], [0], [0], [1], [0, 0, 1, 1], [], []>} : vector<8x64xf32>, vector<64x32xf32>, vector<8x32xf32> -> vector<8x32xf32>
    %c0_65 = arith.constant 0 : index
    %c0_66 = arith.constant 0 : index
    %c0_67 = arith.constant 0 : index
    %88 = vector.load %arg16[%c0_65, %c0_66, %c0_67] : memref<1x1x32xf32, #tpu.memory_space<vmem>>, vector<1x1x32xf32>
    %89 = vector.shape_cast %88 : vector<1x1x32xf32> to vector<1x32xf32>
    %90 = vector.broadcast %89 : vector<1x32xf32> to vector<8x32xf32>
    %91 = arith.addf %87, %90 : vector<8x32xf32>
    %92 = arith.addf %75, %91 : vector<8x32xf32>
    %c0_68 = arith.constant 0 : index
    %c0_69 = arith.constant 0 : index
    %c0_70 = arith.constant 0 : index
    %93 = vector.load %arg17[%c0_68, %c0_69, %c0_70] : memref<1x1x32xf32, #tpu.memory_space<vmem>>, vector<1x1x32xf32>
    %94 = vector.shape_cast %93 : vector<1x1x32xf32> to vector<1x32xf32>
    %c0_71 = arith.constant 0 : index
    %c0_72 = arith.constant 0 : index
    %c0_73 = arith.constant 0 : index
    %95 = vector.load %arg18[%c0_71, %c0_72, %c0_73] : memref<1x1x32xf32, #tpu.memory_space<vmem>>, vector<1x1x32xf32>
    %96 = vector.shape_cast %95 : vector<1x1x32xf32> to vector<1x32xf32>
    %cst_74 = arith.constant dense<0.000000e+00> : vector<8xf32>
    %97 = vector.multi_reduction <add>, %92, %cst_74 [1] : vector<8x32xf32> to vector<8xf32>
    %98 = vector.shape_cast %97 : vector<8xf32> to vector<8x1xf32>
    %cst_75 = arith.constant 3.200000e+01 : f32
    %99 = vector.broadcast %cst_75 : f32 to vector<8x1xf32>
    %100 = arith.divf %98, %99 : vector<8x1xf32>
    %101 = vector.broadcast %100 : vector<8x1xf32> to vector<8x32xf32>
    %102 = arith.subf %92, %101 : vector<8x32xf32>
    %103 = arith.mulf %102, %102 : vector<8x32xf32>
    %cst_76 = arith.constant dense<0.000000e+00> : vector<8xf32>
    %104 = vector.multi_reduction <add>, %103, %cst_76 [1] : vector<8x32xf32> to vector<8xf32>
    %105 = vector.shape_cast %104 : vector<8xf32> to vector<8x1xf32>
    %cst_77 = arith.constant 3.200000e+01 : f32
    %106 = vector.broadcast %cst_77 : f32 to vector<8x1xf32>
    %107 = arith.divf %105, %106 : vector<8x1xf32>
    %108 = vector.broadcast %100 : vector<8x1xf32> to vector<8x32xf32>
    %109 = arith.subf %92, %108 : vector<8x32xf32>
    %cst_78 = arith.constant 9.99999974E-6 : f32
    %110 = vector.broadcast %cst_78 : f32 to vector<8x1xf32>
    %111 = arith.addf %107, %110 : vector<8x1xf32>
    %112 = math.rsqrt %111 : vector<8x1xf32>
    %113 = vector.broadcast %112 : vector<8x1xf32> to vector<8x32xf32>
    %114 = arith.mulf %109, %113 : vector<8x32xf32>
    %115 = vector.broadcast %94 : vector<1x32xf32> to vector<8x32xf32>
    %116 = arith.mulf %114, %115 : vector<8x32xf32>
    %117 = vector.broadcast %96 : vector<1x32xf32> to vector<8x32xf32>
    %118 = arith.addf %116, %117 : vector<8x32xf32>
    %c0_79 = arith.constant 0 : index
    %c0_80 = arith.constant 0 : index
    %119 = vector.load %arg26[%c0_79, %c0_80] : memref<8x32xf32, #tpu.memory_space<vmem>>, vector<8x32xf32>
    tpu.vector_store %arg26[%c0_79, %c0_80], %118 {strides = array<i32>} : memref<8x32xf32, #tpu.memory_space<vmem>>, vector<8x32xf32>,
    %c1_i32 = arith.constant 1 : i32
    %120 = arith.cmpi eq, %arg1, %c1_i32 : i32
    %121 = arith.extui %120 : i1 to i32
    %c0_i32_81 = arith.constant 0 : i32
    %122 = arith.cmpi ne, %121, %c0_i32_81 : i32
    scf.if %122 {
      %cst_82 = arith.constant dense<0xFF800000> : vector<32xf32>
      %123 = vector.multi_reduction <maximumf>, %118, %cst_82 [0] : vector<8x32xf32> to vector<32xf32>
      %124 = vector.shape_cast %123 : vector<32xf32> to vector<1x32xf32>
      %cst_83 = arith.constant dense<0x7F800000> : vector<32xf32>
      %125 = vector.multi_reduction <minimumf>, %118, %cst_83 [0] : vector<8x32xf32> to vector<32xf32>
      %126 = vector.shape_cast %125 : vector<32xf32> to vector<1x32xf32>
      %cst_84 = arith.constant dense<0.000000e+00> : vector<32xf32>
      %127 = vector.multi_reduction <add>, %118, %cst_84 [0] : vector<8x32xf32> to vector<32xf32>
      %128 = vector.shape_cast %127 : vector<32xf32> to vector<1x32xf32>
      %cst_85 = arith.constant 8.000000e+00 : f32
      %129 = vector.broadcast %cst_85 : f32 to vector<1x32xf32>
      %130 = arith.divf %128, %129 : vector<1x32xf32>
      %c0_86 = arith.constant 0 : index
      %c0_87 = arith.constant 0 : index
      %131 = vector.load %arg19[%c0_86, %c0_87] : memref<32x32xf32, #tpu.memory_space<vmem>>, vector<32x32xf32>
      %cst_88 = arith.constant dense<0.000000e+00> : vector<1x32xf32>
      %132 = tpu.matmul %124, %131, %cst_88 {dimension_numbers = #tpu.dot_dimension_numbers<[1], [0], [0], [1], [0, 0, 1, 1], [], []>} : vector<1x32xf32>, vector<32x32xf32>, vector<1x32xf32> -> vector<1x32xf32>
      %c0_89 = arith.constant 0 : index
      %c0_90 = arith.constant 0 : index
      %133 = vector.load %arg20[%c0_89, %c0_90] : memref<32x32xf32, #tpu.memory_space<vmem>>, vector<32x32xf32>
      %cst_91 = arith.constant dense<0.000000e+00> : vector<1x32xf32>
      %134 = tpu.matmul %126, %133, %cst_91 {dimension_numbers = #tpu.dot_dimension_numbers<[1], [0], [0], [1], [0, 0, 1, 1], [], []>} : vector<1x32xf32>, vector<32x32xf32>, vector<1x32xf32> -> vector<1x32xf32>
      %135 = arith.addf %132, %134 : vector<1x32xf32>
      %c0_92 = arith.constant 0 : index
      %c0_93 = arith.constant 0 : index
      %136 = vector.load %arg21[%c0_92, %c0_93] : memref<32x32xf32, #tpu.memory_space<vmem>>, vector<32x32xf32>
      %cst_94 = arith.constant dense<0.000000e+00> : vector<1x32xf32>
      %137 = tpu.matmul %130, %136, %cst_94 {dimension_numbers = #tpu.dot_dimension_numbers<[1], [0], [0], [1], [0, 0, 1, 1], [], []>} : vector<1x32xf32>, vector<32x32xf32>, vector<1x32xf32> -> vector<1x32xf32>
      %138 = arith.addf %135, %137 : vector<1x32xf32>
      %c0_95 = arith.constant 0 : index
      %c0_96 = arith.constant 0 : index
      %139 = vector.load %arg22[%c0_95, %c0_96] : memref<1x32xf32, #tpu.memory_space<vmem>>, vector<1x32xf32>
      %140 = arith.addf %138, %139 : vector<1x32xf32>
      %cst_97 = arith.constant 0.000000e+00 : f32
      %141 = vector.broadcast %cst_97 : f32 to vector<1x32xf32>
      %142 = arith.maximumf %140, %141 : vector<1x32xf32>
      %c0_98 = arith.constant 0 : index
      %c0_99 = arith.constant 0 : index
      %143 = vector.load %arg23[%c0_98, %c0_99] : memref<32x3xf32, #tpu.memory_space<vmem>>, vector<32x3xf32>
      %cst_100 = arith.constant dense<0.000000e+00> : vector<1x3xf32>
      %144 = tpu.matmul %142, %143, %cst_100 {dimension_numbers = #tpu.dot_dimension_numbers<[1], [0], [0], [1], [0, 0, 1, 1], [], []>} : vector<1x32xf32>, vector<32x3xf32>, vector<1x3xf32> -> vector<1x3xf32>
      %c0_101 = arith.constant 0 : index
      %c0_102 = arith.constant 0 : index
      %145 = vector.load %arg24[%c0_101, %c0_102] : memref<1x3xf32, #tpu.memory_space<vmem>>, vector<1x3xf32>
      %146 = arith.addf %144, %145 : vector<1x3xf32>
      %c0_103 = arith.constant 0 : index
      %c0_104 = arith.constant 0 : index
      %c0_105 = arith.constant 0 : index
      %147 = vector.load %arg25[%c0_103, %c0_104, %c0_105] : memref<1x1x3xf32, #tpu.memory_space<vmem>>, vector<1x1x3xf32>
      %148 = vector.shape_cast %147 : vector<1x1x3xf32> to vector<1x3xf32>
      %149 = vector.shape_cast %146 : vector<1x3xf32> to vector<1x1x3xf32>
      tpu.vector_store %arg25[%c0_103, %c0_104, %c0_105], %149 {strides = array<i32>} : memref<1x1x3xf32, #tpu.memory_space<vmem>>, vector<1x1x3xf32>,
    } else {
    }
    return
  }
  func.func @transform_0(%arg0: i32, %arg1: i32) -> (i32, i32, i32) {
    %c0_i32 = arith.constant 0 : i32
    %c0_i32_0 = arith.constant 0 : i32
    %c0_i32_1 = arith.constant 0 : i32
    return %arg0, %c0_i32, %c0_i32_0 : i32, i32, i32
  }
  func.func @transform_1(%arg0: i32, %arg1: i32) -> (i32, i32, i32, i32) {
    %c0_i32 = arith.constant 0 : i32
    %c0_i32_0 = arith.constant 0 : i32
    %c0_i32_1 = arith.constant 0 : i32
    %c0_i32_2 = arith.constant 0 : i32
    return %arg1, %c0_i32, %c0_i32_0, %c0_i32_1 : i32, i32, i32, i32
  }
  func.func @transform_2(%arg0: i32, %arg1: i32) -> (i32, i32, i32, i32) {
    %c0_i32 = arith.constant 0 : i32
    %c0_i32_0 = arith.constant 0 : i32
    %c0_i32_1 = arith.constant 0 : i32
    %c0_i32_2 = arith.constant 0 : i32
    return %arg1, %c0_i32, %c0_i32_0, %c0_i32_1 : i32, i32, i32, i32
  }
  func.func @transform_3(%arg0: i32, %arg1: i32) -> (i32, i32, i32, i32) {
    %c0_i32 = arith.constant 0 : i32
    %c0_i32_0 = arith.constant 0 : i32
    %c0_i32_1 = arith.constant 0 : i32
    %c0_i32_2 = arith.constant 0 : i32
    return %arg1, %c0_i32, %c0_i32_0, %c0_i32_1 : i32, i32, i32, i32
  }
  func.func @transform_4(%arg0: i32, %arg1: i32) -> (i32, i32, i32, i32) {
    %c0_i32 = arith.constant 0 : i32
    %c0_i32_0 = arith.constant 0 : i32
    %c0_i32_1 = arith.constant 0 : i32
    %c0_i32_2 = arith.constant 0 : i32
    return %arg1, %c0_i32, %c0_i32_0, %c0_i32_1 : i32, i32, i32, i32
  }
  func.func @transform_5(%arg0: i32, %arg1: i32) -> (i32, i32, i32, i32) {
    %c0_i32 = arith.constant 0 : i32
    %c0_i32_0 = arith.constant 0 : i32
    %c0_i32_1 = arith.constant 0 : i32
    %c0_i32_2 = arith.constant 0 : i32
    return %arg1, %c0_i32, %c0_i32_0, %c0_i32_1 : i32, i32, i32, i32
  }
  func.func @transform_6(%arg0: i32, %arg1: i32) -> (i32, i32, i32, i32) {
    %c0_i32 = arith.constant 0 : i32
    %c0_i32_0 = arith.constant 0 : i32
    %c0_i32_1 = arith.constant 0 : i32
    %c0_i32_2 = arith.constant 0 : i32
    return %arg1, %c0_i32, %c0_i32_0, %c0_i32_1 : i32, i32, i32, i32
  }
  func.func @transform_7(%arg0: i32, %arg1: i32) -> (i32, i32, i32, i32) {
    %c0_i32 = arith.constant 0 : i32
    %c0_i32_0 = arith.constant 0 : i32
    %c0_i32_1 = arith.constant 0 : i32
    %c0_i32_2 = arith.constant 0 : i32
    return %arg1, %c0_i32, %c0_i32_0, %c0_i32_1 : i32, i32, i32, i32
  }
  func.func @transform_8(%arg0: i32, %arg1: i32) -> (i32, i32, i32) {
    %c0_i32 = arith.constant 0 : i32
    %c0_i32_0 = arith.constant 0 : i32
    %c0_i32_1 = arith.constant 0 : i32
    return %arg1, %c0_i32, %c0_i32_0 : i32, i32, i32
  }
  func.func @transform_9(%arg0: i32, %arg1: i32) -> (i32, i32, i32) {
    %c0_i32 = arith.constant 0 : i32
    %c0_i32_0 = arith.constant 0 : i32
    %c0_i32_1 = arith.constant 0 : i32
    return %arg1, %c0_i32, %c0_i32_0 : i32, i32, i32
  }
  func.func @transform_10(%arg0: i32, %arg1: i32) -> (i32, i32, i32) {
    %c0_i32 = arith.constant 0 : i32
    %c0_i32_0 = arith.constant 0 : i32
    %c0_i32_1 = arith.constant 0 : i32
    return %arg1, %c0_i32, %c0_i32_0 : i32, i32, i32
  }
  func.func @transform_11(%arg0: i32, %arg1: i32) -> (i32, i32, i32) {
    %c0_i32 = arith.constant 0 : i32
    %c0_i32_0 = arith.constant 0 : i32
    %c0_i32_1 = arith.constant 0 : i32
    return %arg1, %c0_i32, %c0_i32_0 : i32, i32, i32
  }
  func.func @transform_12(%arg0: i32, %arg1: i32) -> (i32, i32, i32) {
    %c0_i32 = arith.constant 0 : i32
    %c0_i32_0 = arith.constant 0 : i32
    %c0_i32_1 = arith.constant 0 : i32
    return %arg1, %c0_i32, %c0_i32_0 : i32, i32, i32
  }
  func.func @transform_13(%arg0: i32, %arg1: i32) -> (i32, i32, i32) {
    %c0_i32 = arith.constant 0 : i32
    %c0_i32_0 = arith.constant 0 : i32
    %c0_i32_1 = arith.constant 0 : i32
    return %arg1, %c0_i32, %c0_i32_0 : i32, i32, i32
  }
  func.func @transform_14(%arg0: i32, %arg1: i32) -> (i32, i32, i32) {
    %c0_i32 = arith.constant 0 : i32
    %c0_i32_0 = arith.constant 0 : i32
    %c0_i32_1 = arith.constant 0 : i32
    return %arg1, %c0_i32, %c0_i32_0 : i32, i32, i32
  }
  func.func @transform_15(%arg0: i32, %arg1: i32) -> (i32, i32, i32) {
    %c0_i32 = arith.constant 0 : i32
    %c0_i32_0 = arith.constant 0 : i32
    %c0_i32_1 = arith.constant 0 : i32
    return %arg1, %c0_i32, %c0_i32_0 : i32, i32, i32
  }
  func.func @transform_16(%arg0: i32, %arg1: i32) -> (i32, i32, i32) {
    %c0_i32 = arith.constant 0 : i32
    %c0_i32_0 = arith.constant 0 : i32
    %c0_i32_1 = arith.constant 0 : i32
    return %arg1, %c0_i32, %c0_i32_0 : i32, i32, i32
  }
  func.func @transform_17(%arg0: i32, %arg1: i32) -> (i32, i32) {
    %c0_i32 = arith.constant 0 : i32
    %c0_i32_0 = arith.constant 0 : i32
    %c0_i32_1 = arith.constant 0 : i32
    return %c0_i32, %c0_i32_0 : i32, i32
  }
  func.func @transform_18(%arg0: i32, %arg1: i32) -> (i32, i32) {
    %c0_i32 = arith.constant 0 : i32
    %c0_i32_0 = arith.constant 0 : i32
    %c0_i32_1 = arith.constant 0 : i32
    return %c0_i32, %c0_i32_0 : i32, i32
  }
  func.func @transform_19(%arg0: i32, %arg1: i32) -> (i32, i32) {
    %c0_i32 = arith.constant 0 : i32
    %c0_i32_0 = arith.constant 0 : i32
    %c0_i32_1 = arith.constant 0 : i32
    return %c0_i32, %c0_i32_0 : i32, i32
  }
  func.func @transform_20(%arg0: i32, %arg1: i32) -> (i32, i32) {
    %c0_i32 = arith.constant 0 : i32
    %c0_i32_0 = arith.constant 0 : i32
    %c0_i32_1 = arith.constant 0 : i32
    return %c0_i32, %c0_i32_0 : i32, i32
  }
  func.func @transform_21(%arg0: i32, %arg1: i32) -> (i32, i32) {
    %c0_i32 = arith.constant 0 : i32
    %c0_i32_0 = arith.constant 0 : i32
    %c0_i32_1 = arith.constant 0 : i32
    return %c0_i32, %c0_i32_0 : i32, i32
  }
  func.func @transform_22(%arg0: i32, %arg1: i32) -> (i32, i32) {
    %c0_i32 = arith.constant 0 : i32
    %c0_i32_0 = arith.constant 0 : i32
    %c0_i32_1 = arith.constant 0 : i32
    return %c0_i32, %c0_i32_0 : i32, i32
  }
  func.func @transform_23(%arg0: i32, %arg1: i32) -> (i32, i32, i32) {
    %c0_i32 = arith.constant 0 : i32
    %c0_i32_0 = arith.constant 0 : i32
    %c0_i32_1 = arith.constant 0 : i32
    return %arg0, %c0_i32, %c0_i32_0 : i32, i32, i32
  }
}

</mosaic_0001>

<llo_original>
// kernel: tpu_custom_call.1
$region0: #{tpu_custom_call.1}
  #allocation0 [shape = 'u32[]', space=smem, size = 0x4, offset = 0x4, fixed_abs, tag = 'smem constant byte address 0x4 - core index']
  #allocation1 [shape = 'u32[144,128]{1,0:T(1,128)}', space=vmem, size = 0x12000, scoped, tag = 'internal scratch']
  #allocation2 [shape = 'f32[8,32]{1,0:T(8,128)}', space=vmem, size = 0x1000, scoped, tag = 'scratch operand']
  %s0 = inlined_call_operand.vmem [shape: f32[2,8,32], index: 0, kind: input, shape index: {}]
  %s1 = inlined_call_operand.vmem [shape: f32[2,4,32,8], index: 1, kind: input, shape index: {}]
  %s2 = inlined_call_operand.vmem [shape: f32[2,4,32,8], index: 2, kind: input, shape index: {}]
  %s3 = inlined_call_operand.vmem [shape: f32[2,4,32,8], index: 3, kind: input, shape index: {}]
  %s4 = inlined_call_operand.vmem [shape: f32[2,4,1,8], index: 4, kind: input, shape index: {}]
  %s5 = inlined_call_operand.vmem [shape: f32[2,4,1,8], index: 5, kind: input, shape index: {}]
  %s6 = inlined_call_operand.vmem [shape: f32[2,4,1,8], index: 6, kind: input, shape index: {}]
  %s7 = inlined_call_operand.vmem [shape: f32[2,4,8,32], index: 7, kind: input, shape index: {}]
  %s8 = inlined_call_operand.vmem [shape: f32[2,1,32], index: 8, kind: input, shape index: {}]
  %s9 = inlined_call_operand.vmem [shape: f32[2,1,32], index: 9, kind: input, shape index: {}]
  %s10 = inlined_call_operand.vmem [shape: f32[2,1,32], index: 10, kind: input, shape index: {}]
  %s11 = inlined_call_operand.vmem [shape: f32[2,32,64], index: 11, kind: input, shape index: {}]
  %s12 = inlined_call_operand.vmem [shape: f32[2,1,64], index: 12, kind: input, shape index: {}]
  %s13 = inlined_call_operand.vmem [shape: f32[2,64,32], index: 13, kind: input, shape index: {}]
  %s14 = inlined_call_operand.vmem [shape: f32[2,1,32], index: 14, kind: input, shape index: {}]
  %s15 = inlined_call_operand.vmem [shape: f32[2,1,32], index: 15, kind: input, shape index: {}]
  %s16 = inlined_call_operand.vmem [shape: f32[2,1,32], index: 16, kind: input, shape index: {}]
  %s17 = inlined_call_operand.vmem [shape: f32[32,32], index: 17, kind: input, shape index: {}]
  %s18 = inlined_call_operand.vmem [shape: f32[32,32], index: 18, kind: input, shape index: {}]
  %s19 = inlined_call_operand.vmem [shape: f32[32,32], index: 19, kind: input, shape index: {}]
  %s20 = inlined_call_operand.vmem [shape: f32[1,32], index: 20, kind: input, shape index: {}]
  %s21 = inlined_call_operand.vmem [shape: f32[32,3], index: 21, kind: input, shape index: {}]
  %s22 = inlined_call_operand.vmem [shape: f32[1,3], index: 22, kind: input, shape index: {}]
  %s23 = inlined_call_operand.hbm [shape: f32[2,1,3], index: 23, kind: output, shape index: {}]
  %s24 = sld [smem:[#allocation0]]
  $region133: #{tpu_custom_call.1} parent=0
    _
  %s26 = ssub.s32 1, %s24
  %s27 = scalar_select 0, %s26, %s24
  $region1: #{tpu_custom_call.1} parent=0
    #allocation3 [shape = 'u8[1024]{0}', space=vmem, size = 0x400, scoped, tag = 'output window, operand 0']
    #allocation4 [shape = 's32[2]{0}', space=sflag, size = 0x8, scoped, tag = 'scoped memory for tpu_custom_call.1']
    %28 = vsyncpa [#allocation4], 0
    %s29 = scalar_lea.sflag [#allocation4], 1
    %30 = vsyncpa %s29, 0
    loop: start=0, step=1, limit=6
    $region2: #{tpu_custom_call.1} parent=1 // loop_pre_header
      _
    $region3: #{tpu_custom_call.1} parent=1 // loop_header
      %s32 = sphi 0, %s36
      %p33 = scmp.ge.s32.totalorder %s32, 6
      %s39 = sphi 0, %s51
      %s40 = sphi 0, %s47
      %s41 = sphi 0, %s39
      %s42 = sphi 0, %s40
      %s43 = sphi 0, %s41
      %s44 = sphi 0, %s42
      %s54 = sphi 0, %s56
      %s57 = sphi 0, %s54
      %s58 = sphi 0, %s57
      %s74 = sphi 0, %s58
      %s80 = sphi 0, %s82
      %s83 = sphi 0, %s80
      %s84 = sphi 0, %s83
      %s100 = sphi 0, %s84
      %s106 = sphi 0, %s108
      %s109 = sphi 0, %s106
      %s110 = sphi 0, %s109
      %s126 = sphi 0, %s110
      %s132 = sphi 0, %s134
      %s135 = sphi 0, %s132
      %s136 = sphi 0, %s135
      %s152 = sphi 0, %s136
      %s158 = sphi 0, %s160
      %s161 = sphi 0, %s158
      %s162 = sphi 0, %s161
      %s178 = sphi 0, %s162
      %s184 = sphi 0, %s186
      %s187 = sphi 0, %s184
      %s188 = sphi 0, %s187
      %s204 = sphi 0, %s188
      %s210 = sphi 0, %s212
      %s213 = sphi 0, %s210
      %s214 = sphi 0, %s213
      %s230 = sphi 0, %s214
      %s236 = sphi 0, %s238
      %s239 = sphi 0, %s236
      %s240 = sphi 0, %s239
      %s256 = sphi 0, %s240
      %s262 = sphi 0, %s264
      %s265 = sphi 0, %s262
      %s266 = sphi 0, %s265
      %s282 = sphi 0, %s266
      %s288 = sphi 0, %s290
      %s291 = sphi 0, %s288
      %s292 = sphi 0, %s291
      %s308 = sphi 0, %s292
      %s314 = sphi 0, %s316
      %s317 = sphi 0, %s314
      %s318 = sphi 0, %s317
      %s334 = sphi 0, %s318
      %s340 = sphi 0, %s342
      %s343 = sphi 0, %s340
      %s344 = sphi 0, %s343
      %s360 = sphi 0, %s344
      %s366 = sphi 0, %s368
      %s369 = sphi 0, %s366
      %s370 = sphi 0, %s369
      %s386 = sphi 0, %s370
      %s392 = sphi 0, %s394
      %s395 = sphi 0, %s392
      %s396 = sphi 0, %s395
      %s412 = sphi 0, %s396
      %s418 = sphi 0, %s420
      %s421 = sphi 0, %s418
      %s422 = sphi 0, %s421
      %s438 = sphi 0, %s422
      %s444 = sphi 0, %s446
      %s447 = sphi 0, %s444
      %s448 = sphi 0, %s447
      %s464 = sphi 0, %s448
      %s470 = sphi 0, %s472
      %s473 = sphi 0, %s470
      %s474 = sphi 0, %s473
      %s490 = sphi 0, %s474
      %s494 = sphi 0, %s494
      %s496 = sphi 0, %s494
      %s497 = sphi 0, %s496
      %s511 = sphi 0, %s497
      %s515 = sphi 0, %s515
      %s517 = sphi 0, %s515
      %s518 = sphi 0, %s517
      %s532 = sphi 0, %s518
      %s536 = sphi 0, %s536
      %s538 = sphi 0, %s536
      %s539 = sphi 0, %s538
      %s553 = sphi 0, %s539
      %s557 = sphi 0, %s557
      %s559 = sphi 0, %s557
      %s560 = sphi 0, %s559
      %s574 = sphi 0, %s560
      %s578 = sphi 0, %s578
      %s580 = sphi 0, %s578
      %s581 = sphi 0, %s580
      %s595 = sphi 0, %s581
      %s599 = sphi 0, %s599
      %s601 = sphi 0, %s599
      %s602 = sphi 0, %s601
      %s616 = sphi 0, %s602
      %s622 = sphi 0, %s624
      %s625 = sphi 0, %s622
      %s626 = sphi 0, %s625
      %s642 = sphi 0, %s626
    $region4: #{tpu_custom_call.1} parent=1 // loop_header_branch
      %35 = sbr.rel (%p33) target = $region8
    $region5: #{tpu_custom_call.1} parent=1 // loop_body
      %s37 = ssub.s32 %s32, 1
      %s38 = ssub.s32 %s32, 2
      %s45 = sadd.s32 1, %s40
      %p46 = scmp.ge.s32.totalorder %s45, 2
      %s47 = scalar_select %p46, 0, %s45
      %s48 = sadd.s32 1, %s39
      %s49 = scalar_select %p46, %s48, %s39
      %p50 = scmp.ge.s32.totalorder %s49, 2
      %s51 = scalar_select %p50, 0, %s49
      %s52 = ssub.s32 %s39, %s51
      %p53 = scmp.eq.s32.totalorder %s52, 0
      %s55 = sadd.s32 %s54, 1
      %s56 = scalar_select %p53, %s54, %s55
      %p59 = pneg %p53
      %p60 = scmp.eq.s32.totalorder %s32, 3
      %p61 = por %p59, %p60
      %p62 = scmp.ne.s32.totalorder %s54, %s57
      %p63 = scmp.eq.s32.totalorder %s32, 0
      %p64 = por %p62, %p63
      %p65 = scmp.ne.s32.totalorder %s54, %s57
      %p66 = scmp.eq.s32.totalorder %s37, 3
      %p67 = por %p65, %p66
      %p68 = scmp.ne.s32.totalorder %s57, %s58
      %p69 = scmp.eq.s32.totalorder %s37, 0
      %p70 = por %p68, %p69
      %p71 = scmp.ne.s32.totalorder %s57, %s58
      %p72 = scmp.eq.s32.totalorder %s38, 3
      %p73 = por %p71, %p72
      %p75 = scmp.ne.s32.totalorder %s58, %s74
      %p76 = scmp.eq.s32.totalorder %s38, 0
      %p77 = por %p75, %p76
      %s78 = ssub.s32 %s40, %s47
      %p79 = scmp.eq.s32.totalorder %s78, 0
      %s81 = sadd.s32 %s80, 1
      %s82 = scalar_select %p79, %s80, %s81
      %p85 = pneg %p79
      %p86 = scmp.eq.s32.totalorder %s32, 3
      %p87 = por %p85, %p86
      %p88 = scmp.ne.s32.totalorder %s80, %s83
      %p89 = scmp.eq.s32.totalorder %s32, 0
      %p90 = por %p88, %p89
      %p91 = scmp.ne.s32.totalorder %s80, %s83
      %p92 = scmp.eq.s32.totalorder %s37, 3
      %p93 = por %p91, %p92
      %p94 = scmp.ne.s32.totalorder %s83, %s84
      %p95 = scmp.eq.s32.totalorder %s37, 0
      %p96 = por %p94, %p95
      %p97 = scmp.ne.s32.totalorder %s83, %s84
      %p98 = scmp.eq.s32.totalorder %s38, 3
      %p99 = por %p97, %p98
      %p101 = scmp.ne.s32.totalorder %s84, %s100
      %p102 = scmp.eq.s32.totalorder %s38, 0
      %p103 = por %p101, %p102
      %s104 = ssub.s32 %s40, %s47
      %p105 = scmp.eq.s32.totalorder %s104, 0
      %s107 = sadd.s32 %s106, 1
      %s108 = scalar_select %p105, %s106, %s107
      %p111 = pneg %p105
      %p112 = scmp.eq.s32.totalorder %s32, 3
      %p113 = por %p111, %p112
      %p114 = scmp.ne.s32.totalorder %s106, %s109
      %p115 = scmp.eq.s32.totalorder %s32, 0
      %p116 = por %p114, %p115
      %p117 = scmp.ne.s32.totalorder %s106, %s109
      %p118 = scmp.eq.s32.totalorder %s37, 3
      %p119 = por %p117, %p118
      %p120 = scmp.ne.s32.totalorder %s109, %s110
      %p121 = scmp.eq.s32.totalorder %s37, 0
      %p122 = por %p120, %p121
      %p123 = scmp.ne.s32.totalorder %s109, %s110
      %p124 = scmp.eq.s32.totalorder %s38, 3
      %p125 = por %p123, %p124
      %p127 = scmp.ne.s32.totalorder %s110, %s126
      %p128 = scmp.eq.s32.totalorder %s38, 0
      %p129 = por %p127, %p128
      %s130 = ssub.s32 %s40, %s47
      %p131 = scmp.eq.s32.totalorder %s130, 0
      %s133 = sadd.s32 %s132, 1
      %s134 = scalar_select %p131, %s132, %s133
      %p137 = pneg %p131
      %p138 = scmp.eq.s32.totalorder %s32, 3
      %p139 = por %p137, %p138
      %p140 = scmp.ne.s32.totalorder %s132, %s135
      %p141 = scmp.eq.s32.totalorder %s32, 0
      %p142 = por %p140, %p141
      %p143 = scmp.ne.s32.totalorder %s132, %s135
      %p144 = scmp.eq.s32.totalorder %s37, 3
      %p145 = por %p143, %p144
      %p146 = scmp.ne.s32.totalorder %s135, %s136
      %p147 = scmp.eq.s32.totalorder %s37, 0
      %p148 = por %p146, %p147
      %p149 = scmp.ne.s32.totalorder %s135, %s136
      %p150 = scmp.eq.s32.totalorder %s38, 3
      %p151 = por %p149, %p150
      %p153 = scmp.ne.s32.totalorder %s136, %s152
      %p154 = scmp.eq.s32.totalorder %s38, 0
      %p155 = por %p153, %p154
      %s156 = ssub.s32 %s40, %s47
      %p157 = scmp.eq.s32.totalorder %s156, 0
      %s159 = sadd.s32 %s158, 1
      %s160 = scalar_select %p157, %s158, %s159
      %p163 = pneg %p157
      %p164 = scmp.eq.s32.totalorder %s32, 3
      %p165 = por %p163, %p164
      %p166 = scmp.ne.s32.totalorder %s158, %s161
      %p167 = scmp.eq.s32.totalorder %s32, 0
      %p168 = por %p166, %p167
      %p169 = scmp.ne.s32.totalorder %s158, %s161
      %p170 = scmp.eq.s32.totalorder %s37, 3
      %p171 = por %p169, %p170
      %p172 = scmp.ne.s32.totalorder %s161, %s162
      %p173 = scmp.eq.s32.totalorder %s37, 0
      %p174 = por %p172, %p173
      %p175 = scmp.ne.s32.totalorder %s161, %s162
      %p176 = scmp.eq.s32.totalorder %s38, 3
      %p177 = por %p175, %p176
      %p179 = scmp.ne.s32.totalorder %s162, %s178
      %p180 = scmp.eq.s32.totalorder %s38, 0
      %p181 = por %p179, %p180
      %s182 = ssub.s32 %s40, %s47
      %p183 = scmp.eq.s32.totalorder %s182, 0
      %s185 = sadd.s32 %s184, 1
      %s186 = scalar_select %p183, %s184, %s185
      %p189 = pneg %p183
      %p190 = scmp.eq.s32.totalorder %s32, 3
      %p191 = por %p189, %p190
      %p192 = scmp.ne.s32.totalorder %s184, %s187
      %p193 = scmp.eq.s32.totalorder %s32, 0
      %p194 = por %p192, %p193
      %p195 = scmp.ne.s32.totalorder %s184, %s187
      %p196 = scmp.eq.s32.totalorder %s37, 3
      %p197 = por %p195, %p196
      %p198 = scmp.ne.s32.totalorder %s187, %s188
      %p199 = scmp.eq.s32.totalorder %s37, 0
      %p200 = por %p198, %p199
      %p201 = scmp.ne.s32.totalorder %s187, %s188
      %p202 = scmp.eq.s32.totalorder %s38, 3
      %p203 = por %p201, %p202
      %p205 = scmp.ne.s32.totalorder %s188, %s204
      %p206 = scmp.eq.s32.totalorder %s38, 0
      %p207 = por %p205, %p206
      %s208 = ssub.s32 %s40, %s47
      %p209 = scmp.eq.s32.totalorder %s208, 0
      %s211 = sadd.s32 %s210, 1
      %s212 = scalar_select %p209, %s210, %s211
      %p215 = pneg %p209
      %p216 = scmp.eq.s32.totalorder %s32, 3
      %p217 = por %p215, %p216
      %p218 = scmp.ne.s32.totalorder %s210, %s213
      %p219 = scmp.eq.s32.totalorder %s32, 0
      %p220 = por %p218, %p219
      %p221 = scmp.ne.s32.totalorder %s210, %s213
      %p222 = scmp.eq.s32.totalorder %s37, 3
      %p223 = por %p221, %p222
      %p224 = scmp.ne.s32.totalorder %s213, %s214
      %p225 = scmp.eq.s32.totalorder %s37, 0
      %p226 = por %p224, %p225
      %p227 = scmp.ne.s32.totalorder %s213, %s214
      %p228 = scmp.eq.s32.totalorder %s38, 3
      %p229 = por %p227, %p228
      %p231 = scmp.ne.s32.totalorder %s214, %s230
      %p232 = scmp.eq.s32.totalorder %s38, 0
      %p233 = por %p231, %p232
      %s234 = ssub.s32 %s40, %s47
      %p235 = scmp.eq.s32.totalorder %s234, 0
      %s237 = sadd.s32 %s236, 1
      %s238 = scalar_select %p235, %s236, %s237
      %p241 = pneg %p235
      %p242 = scmp.eq.s32.totalorder %s32, 3
      %p243 = por %p241, %p242
      %p244 = scmp.ne.s32.totalorder %s236, %s239
      %p245 = scmp.eq.s32.totalorder %s32, 0
      %p246 = por %p244, %p245
      %p247 = scmp.ne.s32.totalorder %s236, %s239
      %p248 = scmp.eq.s32.totalorder %s37, 3
      %p249 = por %p247, %p248
      %p250 = scmp.ne.s32.totalorder %s239, %s240
      %p251 = scmp.eq.s32.totalorder %s37, 0
      %p252 = por %p250, %p251
      %p253 = scmp.ne.s32.totalorder %s239, %s240
      %p254 = scmp.eq.s32.totalorder %s38, 3
      %p255 = por %p253, %p254
      %p257 = scmp.ne.s32.totalorder %s240, %s256
      %p258 = scmp.eq.s32.totalorder %s38, 0
      %p259 = por %p257, %p258
      %s260 = ssub.s32 %s40, %s47
      %p261 = scmp.eq.s32.totalorder %s260, 0
      %s263 = sadd.s32 %s262, 1
      %s264 = scalar_select %p261, %s262, %s263
      %p267 = pneg %p261
      %p268 = scmp.eq.s32.totalorder %s32, 3
      %p269 = por %p267, %p268
      %p270 = scmp.ne.s32.totalorder %s262, %s265
      %p271 = scmp.eq.s32.totalorder %s32, 0
      %p272 = por %p270, %p271
      %p273 = scmp.ne.s32.totalorder %s262, %s265
      %p274 = scmp.eq.s32.totalorder %s37, 3
      %p275 = por %p273, %p274
      %p276 = scmp.ne.s32.totalorder %s265, %s266
      %p277 = scmp.eq.s32.totalorder %s37, 0
      %p278 = por %p276, %p277
      %p279 = scmp.ne.s32.totalorder %s265, %s266
      %p280 = scmp.eq.s32.totalorder %s38, 3
      %p281 = por %p279, %p280
      %p283 = scmp.ne.s32.totalorder %s266, %s282
      %p284 = scmp.eq.s32.totalorder %s38, 0
      %p285 = por %p283, %p284
      %s286 = ssub.s32 %s40, %s47
      %p287 = scmp.eq.s32.totalorder %s286, 0
      %s289 = sadd.s32 %s288, 1
      %s290 = scalar_select %p287, %s288, %s289
      %p293 = pneg %p287
      %p294 = scmp.eq.s32.totalorder %s32, 3
      %p295 = por %p293, %p294
      %p296 = scmp.ne.s32.totalorder %s288, %s291
      %p297 = scmp.eq.s32.totalorder %s32, 0
      %p298 = por %p296, %p297
      %p299 = scmp.ne.s32.totalorder %s288, %s291
      %p300 = scmp.eq.s32.totalorder %s37, 3
      %p301 = por %p299, %p300
      %p302 = scmp.ne.s32.totalorder %s291, %s292
      %p303 = scmp.eq.s32.totalorder %s37, 0
      %p304 = por %p302, %p303
      %p305 = scmp.ne.s32.totalorder %s291, %s292
      %p306 = scmp.eq.s32.totalorder %s38, 3
      %p307 = por %p305, %p306
      %p309 = scmp.ne.s32.totalorder %s292, %s308
      %p310 = scmp.eq.s32.totalorder %s38, 0
      %p311 = por %p309, %p310
      %s312 = ssub.s32 %s40, %s47
      %p313 = scmp.eq.s32.totalorder %s312, 0
      %s315 = sadd.s32 %s314, 1
      %s316 = scalar_select %p313, %s314, %s315
      %p319 = pneg %p313
      %p320 = scmp.eq.s32.totalorder %s32, 3
      %p321 = por %p319, %p320
      %p322 = scmp.ne.s32.totalorder %s314, %s317
      %p323 = scmp.eq.s32.totalorder %s32, 0
      %p324 = por %p322, %p323
      %p325 = scmp.ne.s32.totalorder %s314, %s317
      %p326 = scmp.eq.s32.totalorder %s37, 3
      %p327 = por %p325, %p326
      %p328 = scmp.ne.s32.totalorder %s317, %s318
      %p329 = scmp.eq.s32.totalorder %s37, 0
      %p330 = por %p328, %p329
      %p331 = scmp.ne.s32.totalorder %s317, %s318
      %p332 = scmp.eq.s32.totalorder %s38, 3
      %p333 = por %p331, %p332
      %p335 = scmp.ne.s32.totalorder %s318, %s334
      %p336 = scmp.eq.s32.totalorder %s38, 0
      %p337 = por %p335, %p336
      %s338 = ssub.s32 %s40, %s47
      %p339 = scmp.eq.s32.totalorder %s338, 0
      %s341 = sadd.s32 %s340, 1
      %s342 = scalar_select %p339, %s340, %s341
      %p345 = pneg %p339
      %p346 = scmp.eq.s32.totalorder %s32, 3
      %p347 = por %p345, %p346
      %p348 = scmp.ne.s32.totalorder %s340, %s343
      %p349 = scmp.eq.s32.totalorder %s32, 0
      %p350 = por %p348, %p349
      %p351 = scmp.ne.s32.totalorder %s340, %s343
      %p352 = scmp.eq.s32.totalorder %s37, 3
      %p353 = por %p351, %p352
      %p354 = scmp.ne.s32.totalorder %s343, %s344
      %p355 = scmp.eq.s32.totalorder %s37, 0
      %p356 = por %p354, %p355
      %p357 = scmp.ne.s32.totalorder %s343, %s344
      %p358 = scmp.eq.s32.totalorder %s38, 3
      %p359 = por %p357, %p358
      %p361 = scmp.ne.s32.totalorder %s344, %s360
      %p362 = scmp.eq.s32.totalorder %s38, 0
      %p363 = por %p361, %p362
      %s364 = ssub.s32 %s40, %s47
      %p365 = scmp.eq.s32.totalorder %s364, 0
      %s367 = sadd.s32 %s366, 1
      %s368 = scalar_select %p365, %s366, %s367
      %p371 = pneg %p365
      %p372 = scmp.eq.s32.totalorder %s32, 3
      %p373 = por %p371, %p372
      %p374 = scmp.ne.s32.totalorder %s366, %s369
      %p375 = scmp.eq.s32.totalorder %s32, 0
      %p376 = por %p374, %p375
      %p377 = scmp.ne.s32.totalorder %s366, %s369
      %p378 = scmp.eq.s32.totalorder %s37, 3
      %p379 = por %p377, %p378
      %p380 = scmp.ne.s32.totalorder %s369, %s370
      %p381 = scmp.eq.s32.totalorder %s37, 0
      %p382 = por %p380, %p381
      %p383 = scmp.ne.s32.totalorder %s369, %s370
      %p384 = scmp.eq.s32.totalorder %s38, 3
      %p385 = por %p383, %p384
      %p387 = scmp.ne.s32.totalorder %s370, %s386
      %p388 = scmp.eq.s32.totalorder %s38, 0
      %p389 = por %p387, %p388
      %s390 = ssub.s32 %s40, %s47
      %p391 = scmp.eq.s32.totalorder %s390, 0
      %s393 = sadd.s32 %s392, 1
      %s394 = scalar_select %p391, %s392, %s393
      %p397 = pneg %p391
      %p398 = scmp.eq.s32.totalorder %s32, 3
      %p399 = por %p397, %p398
      %p400 = scmp.ne.s32.totalorder %s392, %s395
      %p401 = scmp.eq.s32.totalorder %s32, 0
      %p402 = por %p400, %p401
      %p403 = scmp.ne.s32.totalorder %s392, %s395
      %p404 = scmp.eq.s32.totalorder %s37, 3
      %p405 = por %p403, %p404
      %p406 = scmp.ne.s32.totalorder %s395, %s396
      %p407 = scmp.eq.s32.totalorder %s37, 0
      %p408 = por %p406, %p407
      %p409 = scmp.ne.s32.totalorder %s395, %s396
      %p410 = scmp.eq.s32.totalorder %s38, 3
      %p411 = por %p409, %p410
      %p413 = scmp.ne.s32.totalorder %s396, %s412
      %p414 = scmp.eq.s32.totalorder %s38, 0
      %p415 = por %p413, %p414
      %s416 = ssub.s32 %s40, %s47
      %p417 = scmp.eq.s32.totalorder %s416, 0
      %s419 = sadd.s32 %s418, 1
      %s420 = scalar_select %p417, %s418, %s419
      %p423 = pneg %p417
      %p424 = scmp.eq.s32.totalorder %s32, 3
      %p425 = por %p423, %p424
      %p426 = scmp.ne.s32.totalorder %s418, %s421
      %p427 = scmp.eq.s32.totalorder %s32, 0
      %p428 = por %p426, %p427
      %p429 = scmp.ne.s32.totalorder %s418, %s421
      %p430 = scmp.eq.s32.totalorder %s37, 3
      %p431 = por %p429, %p430
      %p432 = scmp.ne.s32.totalorder %s421, %s422
      %p433 = scmp.eq.s32.totalorder %s37, 0
      %p434 = por %p432, %p433
      %p435 = scmp.ne.s32.totalorder %s421, %s422
      %p436 = scmp.eq.s32.totalorder %s38, 3
      %p437 = por %p435, %p436
      %p439 = scmp.ne.s32.totalorder %s422, %s438
      %p440 = scmp.eq.s32.totalorder %s38, 0
      %p441 = por %p439, %p440
      %s442 = ssub.s32 %s40, %s47
      %p443 = scmp.eq.s32.totalorder %s442, 0
      %s445 = sadd.s32 %s444, 1
      %s446 = scalar_select %p443, %s444, %s445
      %p449 = pneg %p443
      %p450 = scmp.eq.s32.totalorder %s32, 3
      %p451 = por %p449, %p450
      %p452 = scmp.ne.s32.totalorder %s444, %s447
      %p453 = scmp.eq.s32.totalorder %s32, 0
      %p454 = por %p452, %p453
      %p455 = scmp.ne.s32.totalorder %s444, %s447
      %p456 = scmp.eq.s32.totalorder %s37, 3
      %p457 = por %p455, %p456
      %p458 = scmp.ne.s32.totalorder %s447, %s448
      %p459 = scmp.eq.s32.totalorder %s37, 0
      %p460 = por %p458, %p459
      %p461 = scmp.ne.s32.totalorder %s447, %s448
      %p462 = scmp.eq.s32.totalorder %s38, 3
      %p463 = por %p461, %p462
      %p465 = scmp.ne.s32.totalorder %s448, %s464
      %p466 = scmp.eq.s32.totalorder %s38, 0
      %p467 = por %p465, %p466
      %s468 = ssub.s32 %s40, %s47
      %p469 = scmp.eq.s32.totalorder %s468, 0
      %s471 = sadd.s32 %s470, 1
      %s472 = scalar_select %p469, %s470, %s471
      %p475 = pneg %p469
      %p476 = scmp.eq.s32.totalorder %s32, 3
      %p477 = por %p475, %p476
      %p478 = scmp.ne.s32.totalorder %s470, %s473
      %p479 = scmp.eq.s32.totalorder %s32, 0
      %p480 = por %p478, %p479
      %p481 = scmp.ne.s32.totalorder %s470, %s473
      %p482 = scmp.eq.s32.totalorder %s37, 3
      %p483 = por %p481, %p482
      %p484 = scmp.ne.s32.totalorder %s473, %s474
      %p485 = scmp.eq.s32.totalorder %s37, 0
      %p486 = por %p484, %p485
      %p487 = scmp.ne.s32.totalorder %s473, %s474
      %p488 = scmp.eq.s32.totalorder %s38, 3
      %p489 = por %p487, %p488
      %p491 = scmp.ne.s32.totalorder %s474, %s490
      %p492 = scmp.eq.s32.totalorder %s38, 0
      %p493 = por %p491, %p492
      %s495 = sadd.s32 %s494, 1
      %p498 = scmp.eq.s32.totalorder %s32, 3
      %p499 = scmp.ne.s32.totalorder %s494, %s496
      %p500 = scmp.eq.s32.totalorder %s32, 0
      %p501 = por %p499, %p500
      %p502 = scmp.ne.s32.totalorder %s494, %s496
      %p503 = scmp.eq.s32.totalorder %s37, 3
      %p504 = por %p502, %p503
      %p505 = scmp.ne.s32.totalorder %s496, %s497
      %p506 = scmp.eq.s32.totalorder %s37, 0
      %p507 = por %p505, %p506
      %p508 = scmp.ne.s32.totalorder %s496, %s497
      %p509 = scmp.eq.s32.totalorder %s38, 3
      %p510 = por %p508, %p509
      %p512 = scmp.ne.s32.totalorder %s497, %s511
      %p513 = scmp.eq.s32.totalorder %s38, 0
      %p514 = por %p512, %p513
      %s516 = sadd.s32 %s515, 1
      %p519 = scmp.eq.s32.totalorder %s32, 3
      %p520 = scmp.ne.s32.totalorder %s515, %s517
      %p521 = scmp.eq.s32.totalorder %s32, 0
      %p522 = por %p520, %p521
      %p523 = scmp.ne.s32.totalorder %s515, %s517
      %p524 = scmp.eq.s32.totalorder %s37, 3
      %p525 = por %p523, %p524
      %p526 = scmp.ne.s32.totalorder %s517, %s518
      %p527 = scmp.eq.s32.totalorder %s37, 0
      %p528 = por %p526, %p527
      %p529 = scmp.ne.s32.totalorder %s517, %s518
      %p530 = scmp.eq.s32.totalorder %s38, 3
      %p531 = por %p529, %p530
      %p533 = scmp.ne.s32.totalorder %s518, %s532
      %p534 = scmp.eq.s32.totalorder %s38, 0
      %p535 = por %p533, %p534
      %s537 = sadd.s32 %s536, 1
      %p540 = scmp.eq.s32.totalorder %s32, 3
      %p541 = scmp.ne.s32.totalorder %s536, %s538
      %p542 = scmp.eq.s32.totalorder %s32, 0
      %p543 = por %p541, %p542
      %p544 = scmp.ne.s32.totalorder %s536, %s538
      %p545 = scmp.eq.s32.totalorder %s37, 3
      %p546 = por %p544, %p545
      %p547 = scmp.ne.s32.totalorder %s538, %s539
      %p548 = scmp.eq.s32.totalorder %s37, 0
      %p549 = por %p547, %p548
      %p550 = scmp.ne.s32.totalorder %s538, %s539
      %p551 = scmp.eq.s32.totalorder %s38, 3
      %p552 = por %p550, %p551
      %p554 = scmp.ne.s32.totalorder %s539, %s553
      %p555 = scmp.eq.s32.totalorder %s38, 0
      %p556 = por %p554, %p555
      %s558 = sadd.s32 %s557, 1
      %p561 = scmp.eq.s32.totalorder %s32, 3
      %p562 = scmp.ne.s32.totalorder %s557, %s559
      %p563 = scmp.eq.s32.totalorder %s32, 0
      %p564 = por %p562, %p563
      %p565 = scmp.ne.s32.totalorder %s557, %s559
      %p566 = scmp.eq.s32.totalorder %s37, 3
      %p567 = por %p565, %p566
      %p568 = scmp.ne.s32.totalorder %s559, %s560
      %p569 = scmp.eq.s32.totalorder %s37, 0
      %p570 = por %p568, %p569
      %p571 = scmp.ne.s32.totalorder %s559, %s560
      %p572 = scmp.eq.s32.totalorder %s38, 3
      %p573 = por %p571, %p572
      %p575 = scmp.ne.s32.totalorder %s560, %s574
      %p576 = scmp.eq.s32.totalorder %s38, 0
      %p577 = por %p575, %p576
      %s579 = sadd.s32 %s578, 1
      %p582 = scmp.eq.s32.totalorder %s32, 3
      %p583 = scmp.ne.s32.totalorder %s578, %s580
      %p584 = scmp.eq.s32.totalorder %s32, 0
      %p585 = por %p583, %p584
      %p586 = scmp.ne.s32.totalorder %s578, %s580
      %p587 = scmp.eq.s32.totalorder %s37, 3
      %p588 = por %p586, %p587
      %p589 = scmp.ne.s32.totalorder %s580, %s581
      %p590 = scmp.eq.s32.totalorder %s37, 0
      %p591 = por %p589, %p590
      %p592 = scmp.ne.s32.totalorder %s580, %s581
      %p593 = scmp.eq.s32.totalorder %s38, 3
      %p594 = por %p592, %p593
      %p596 = scmp.ne.s32.totalorder %s581, %s595
      %p597 = scmp.eq.s32.totalorder %s38, 0
      %p598 = por %p596, %p597
      %s600 = sadd.s32 %s599, 1
      %p603 = scmp.eq.s32.totalorder %s32, 3
      %p604 = scmp.ne.s32.totalorder %s599, %s601
      %p605 = scmp.eq.s32.totalorder %s32, 0
      %p606 = por %p604, %p605
      %p607 = scmp.ne.s32.totalorder %s599, %s601
      %p608 = scmp.eq.s32.totalorder %s37, 3
      %p609 = por %p607, %p608
      %p610 = scmp.ne.s32.totalorder %s601, %s602
      %p611 = scmp.eq.s32.totalorder %s37, 0
      %p612 = por %p610, %p611
      %p613 = scmp.ne.s32.totalorder %s601, %s602
      %p614 = scmp.eq.s32.totalorder %s38, 3
      %p615 = por %p613, %p614
      %p617 = scmp.ne.s32.totalorder %s602, %s616
      %p618 = scmp.eq.s32.totalorder %s38, 0
      %p619 = por %p617, %p618
      %s620 = ssub.s32 %s39, %s51
      %p621 = scmp.eq.s32.totalorder %s620, 0
      %s623 = sadd.s32 %s622, 1
      %s624 = scalar_select %p621, %s622, %s623
      %p627 = pneg %p621
      %p628 = scmp.eq.s32.totalorder %s32, 3
      %p629 = por %p627, %p628
      %p630 = scmp.ne.s32.totalorder %s622, %s625
      %p631 = scmp.eq.s32.totalorder %s32, 0
      %p632 = por %p630, %p631
      %p633 = scmp.ne.s32.totalorder %s622, %s625
      %p634 = scmp.eq.s32.totalorder %s37, 3
      %p635 = por %p633, %p634
      %p636 = scmp.ne.s32.totalorder %s625, %s626
      %p637 = scmp.eq.s32.totalorder %s37, 0
      %p638 = por %p636, %p637
      %p639 = scmp.ne.s32.totalorder %s625, %s626
      %p640 = scmp.eq.s32.totalorder %s38, 3
      %p641 = por %p639, %p640
      %p643 = scmp.ne.s32.totalorder %s626, %s642
      %p644 = scmp.eq.s32.totalorder %s38, 0
      %p645 = por %p643, %p644
      %p646 = scmp.le.s32.totalorder 1, %s32
      %p647 = scmp.lt.s32.totalorder %s32, 5
      %p648 = pnand %p646, %p647
      %p649 = pneg %p648
      // Predicated region
      $region9: #{tpu_custom_call.1} parent=5 // pred_check
        _
      $region10: #{tpu_custom_call.1} parent=5 // pred_check_branch
        %651 = sbr.rel (%p648) target = $region12
      $region11: #{tpu_custom_call.1} parent=5 // pred_region
        %s652 = ssub.s32 %s32, 1
        // Predicated region
        $region13: #{tpu_custom_call.1} parent=11 // pred_check
          %p653 = pneg %p507
        $region14: #{tpu_custom_call.1} parent=11 // pred_check_branch
          %655 = sbr.rel (%p653) target = $region16
        $region15: #{tpu_custom_call.1} parent=11 // pred_region
          _
        $region16: #{tpu_custom_call.1} parent=11 // pred_fallthru
          _
        // Predicated region
        $region17: #{tpu_custom_call.1} parent=11 // pred_check
          %p656 = pneg %p528
        $region18: #{tpu_custom_call.1} parent=11 // pred_check_branch
          %658 = sbr.rel (%p656) target = $region20
        $region19: #{tpu_custom_call.1} parent=11 // pred_region
          _
        $region20: #{tpu_custom_call.1} parent=11 // pred_fallthru
          _
        // Predicated region
        $region21: #{tpu_custom_call.1} parent=11 // pred_check
          %p659 = pneg %p549
        $region22: #{tpu_custom_call.1} parent=11 // pred_check_branch
          %661 = sbr.rel (%p659) target = $region24
        $region23: #{tpu_custom_call.1} parent=11 // pred_region
          _
        $region24: #{tpu_custom_call.1} parent=11 // pred_fallthru
          _
        // Predicated region
        $region25: #{tpu_custom_call.1} parent=11 // pred_check
          %p662 = pneg %p570
        $region26: #{tpu_custom_call.1} parent=11 // pred_check_branch
          %664 = sbr.rel (%p662) target = $region28
        $region27: #{tpu_custom_call.1} parent=11 // pred_region
          _
        $region28: #{tpu_custom_call.1} parent=11 // pred_fallthru
          _
        // Predicated region
        $region29: #{tpu_custom_call.1} parent=11 // pred_check
          %p665 = pneg %p591
        $region30: #{tpu_custom_call.1} parent=11 // pred_check_branch
          %667 = sbr.rel (%p665) target = $region32
        $region31: #{tpu_custom_call.1} parent=11 // pred_region
          _
        $region32: #{tpu_custom_call.1} parent=11 // pred_fallthru
          _
        // Predicated region
        $region33: #{tpu_custom_call.1} parent=11 // pred_check
          %p668 = pneg %p612
        $region34: #{tpu_custom_call.1} parent=11 // pred_check_branch
          %670 = sbr.rel (%p668) target = $region36
        $region35: #{tpu_custom_call.1} parent=11 // pred_region
          _
        $region36: #{tpu_custom_call.1} parent=11 // pred_fallthru
          _
      $region12: #{tpu_custom_call.1} parent=5 // pred_fallthru
        _
      %p671 = scmp.lt.s32.totalorder %s32, 4
      // Predicated region
      $region37: #{tpu_custom_call.1} parent=5 // pred_check
        %p672 = pneg %p671
      $region38: #{tpu_custom_call.1} parent=5 // pred_check_branch
        %674 = sbr.rel (%p672) target = $region40
      $region39: #{tpu_custom_call.1} parent=5 // pred_region
        // Predicated region
        $region41: #{tpu_custom_call.1} parent=39 // pred_check
          %p675 = pneg %p64
        $region42: #{tpu_custom_call.1} parent=39 // pred_check_branch
          %677 = sbr.rel (%p675) target = $region44
        $region43: #{tpu_custom_call.1} parent=39 // pred_region
          %p678 = scmp.lt.s32.totalorder %s39, 1
          %s679 = scalar_select %p678, %s39, 1
          %s680 = smul.addr %s679, 8
          %s681 = scalar_lea.vmem %s0, %s680
        $region44: #{tpu_custom_call.1} parent=39 // pred_fallthru
          _
        // Predicated region
        $region45: #{tpu_custom_call.1} parent=39 // pred_check
          %p682 = pneg %p90
        $region46: #{tpu_custom_call.1} parent=39 // pred_check_branch
          %684 = sbr.rel (%p682) target = $region48
        $region47: #{tpu_custom_call.1} parent=39 // pred_region
          %p685 = scmp.lt.s32.totalorder %s40, 1
          %s686 = scalar_select %p685, %s40, 1
          %s687 = smul.addr %s686, 16
          %s688 = smul.addr %s687, 8
          %s689 = scalar_lea.vmem %s1, %s688
        $region48: #{tpu_custom_call.1} parent=39 // pred_fallthru
          _
        // Predicated region
        $region49: #{tpu_custom_call.1} parent=39 // pred_check
          %p690 = pneg %p116
        $region50: #{tpu_custom_call.1} parent=39 // pred_check_branch
          %692 = sbr.rel (%p690) target = $region52
        $region51: #{tpu_custom_call.1} parent=39 // pred_region
          %p693 = scmp.lt.s32.totalorder %s40, 1
          %s694 = scalar_select %p693, %s40, 1
          %s695 = smul.addr %s694, 16
          %s696 = smul.addr %s695, 8
          %s697 = scalar_lea.vmem %s2, %s696
        $region52: #{tpu_custom_call.1} parent=39 // pred_fallthru
          _
        // Predicated region
        $region53: #{tpu_custom_call.1} parent=39 // pred_check
          %p698 = pneg %p142
        $region54: #{tpu_custom_call.1} parent=39 // pred_check_branch
          %700 = sbr.rel (%p698) target = $region56
        $region55: #{tpu_custom_call.1} parent=39 // pred_region
          %p701 = scmp.lt.s32.totalorder %s40, 1
          %s702 = scalar_select %p701, %s40, 1
          %s703 = smul.addr %s702, 16
          %s704 = smul.addr %s703, 8
          %s705 = scalar_lea.vmem %s3, %s704
        $region56: #{tpu_custom_call.1} parent=39 // pred_fallthru
          _
        // Predicated region
        $region57: #{tpu_custom_call.1} parent=39 // pred_check
          %p706 = pneg %p168
        $region58: #{tpu_custom_call.1} parent=39 // pred_check_branch
          %708 = sbr.rel (%p706) target = $region60
        $region59: #{tpu_custom_call.1} parent=39 // pred_region
          %p709 = scmp.lt.s32.totalorder %s40, 1
          %s710 = scalar_select %p709, %s40, 1
          %s711 = smul.addr %s710, 4
          %s712 = scalar_lea.vmem %s4, %s711
        $region60: #{tpu_custom_call.1} parent=39 // pred_fallthru
          _
        // Predicated region
        $region61: #{tpu_custom_call.1} parent=39 // pred_check
          %p713 = pneg %p194
        $region62: #{tpu_custom_call.1} parent=39 // pred_check_branch
          %715 = sbr.rel (%p713) target = $region64
        $region63: #{tpu_custom_call.1} parent=39 // pred_region
          %p716 = scmp.lt.s32.totalorder %s40, 1
          %s717 = scalar_select %p716, %s40, 1
          %s718 = smul.addr %s717, 4
          %s719 = scalar_lea.vmem %s5, %s718
        $region64: #{tpu_custom_call.1} parent=39 // pred_fallthru
          _
        // Predicated region
        $region65: #{tpu_custom_call.1} parent=39 // pred_check
          %p720 = pneg %p220
        $region66: #{tpu_custom_call.1} parent=39 // pred_check_branch
          %722 = sbr.rel (%p720) target = $region68
        $region67: #{tpu_custom_call.1} parent=39 // pred_region
          %p723 = scmp.lt.s32.totalorder %s40, 1
          %s724 = scalar_select %p723, %s40, 1
          %s725 = smul.addr %s724, 4
          %s726 = scalar_lea.vmem %s6, %s725
        $region68: #{tpu_custom_call.1} parent=39 // pred_fallthru
          _
        // Predicated region
        $region69: #{tpu_custom_call.1} parent=39 // pred_check
          %p727 = pneg %p246
        $region70: #{tpu_custom_call.1} parent=39 // pred_check_branch
          %729 = sbr.rel (%p727) target = $region72
        $region71: #{tpu_custom_call.1} parent=39 // pred_region
          %p730 = scmp.lt.s32.totalorder %s40, 1
          %s731 = scalar_select %p730, %s40, 1
          %s732 = smul.addr %s731, 4
          %s733 = smul.addr %s732, 8
          %s734 = scalar_lea.vmem %s7, %s733
        $region72: #{tpu_custom_call.1} parent=39 // pred_fallthru
          _
        // Predicated region
        $region73: #{tpu_custom_call.1} parent=39 // pred_check
          %p735 = pneg %p272
        $region74: #{tpu_custom_call.1} parent=39 // pred_check_branch
          %737 = sbr.rel (%p735) target = $region76
        $region75: #{tpu_custom_call.1} parent=39 // pred_region
          %p738 = scmp.lt.s32.totalorder %s40, 1
          %s739 = scalar_select %p738, %s40, 1
          %s740 = scalar_lea.vmem %s8, %s739
        $region76: #{tpu_custom_call.1} parent=39 // pred_fallthru
          _
        // Predicated region
        $region77: #{tpu_custom_call.1} parent=39 // pred_check
          %p741 = pneg %p298
        $region78: #{tpu_custom_call.1} parent=39 // pred_check_branch
          %743 = sbr.rel (%p741) target = $region80
        $region79: #{tpu_custom_call.1} parent=39 // pred_region
          %p744 = scmp.lt.s32.totalorder %s40, 1
          %s745 = scalar_select %p744, %s40, 1
          %s746 = scalar_lea.vmem %s9, %s745
        $region80: #{tpu_custom_call.1} parent=39 // pred_fallthru
          _
        // Predicated region
        $region81: #{tpu_custom_call.1} parent=39 // pred_check
          %p747 = pneg %p324
        $region82: #{tpu_custom_call.1} parent=39 // pred_check_branch
          %749 = sbr.rel (%p747) target = $region84
        $region83: #{tpu_custom_call.1} parent=39 // pred_region
          %p750 = scmp.lt.s32.totalorder %s40, 1
          %s751 = scalar_select %p750, %s40, 1
          %s752 = scalar_lea.vmem %s10, %s751
        $region84: #{tpu_custom_call.1} parent=39 // pred_fallthru
          _
        // Predicated region
        $region85: #{tpu_custom_call.1} parent=39 // pred_check
          %p753 = pneg %p350
        $region86: #{tpu_custom_call.1} parent=39 // pred_check_branch
          %755 = sbr.rel (%p753) target = $region88
        $region87: #{tpu_custom_call.1} parent=39 // pred_region
          %p756 = scmp.lt.s32.totalorder %s40, 1
          %s757 = scalar_select %p756, %s40, 1
          %s758 = smul.addr %s757, 4
          %s759 = smul.addr %s758, 8
          %s760 = scalar_lea.vmem %s11, %s759
        $region88: #{tpu_custom_call.1} parent=39 // pred_fallthru
          _
        // Predicated region
        $region89: #{tpu_custom_call.1} parent=39 // pred_check
          %p761 = pneg %p376
        $region90: #{tpu_custom_call.1} parent=39 // pred_check_branch
          %763 = sbr.rel (%p761) target = $region92
        $region91: #{tpu_custom_call.1} parent=39 // pred_region
          %p764 = scmp.lt.s32.totalorder %s40, 1
          %s765 = scalar_select %p764, %s40, 1
          %s766 = scalar_lea.vmem %s12, %s765
        $region92: #{tpu_custom_call.1} parent=39 // pred_fallthru
          _
        // Predicated region
        $region93: #{tpu_custom_call.1} parent=39 // pred_check
          %p767 = pneg %p402
        $region94: #{tpu_custom_call.1} parent=39 // pred_check_branch
          %769 = sbr.rel (%p767) target = $region96
        $region95: #{tpu_custom_call.1} parent=39 // pred_region
          %p770 = scmp.lt.s32.totalorder %s40, 1
          %s771 = scalar_select %p770, %s40, 1
          %s772 = smul.addr %s771, 8
          %s773 = smul.addr %s772, 8
          %s774 = scalar_lea.vmem %s13, %s773
        $region96: #{tpu_custom_call.1} parent=39 // pred_fallthru
          _
        // Predicated region
        $region97: #{tpu_custom_call.1} parent=39 // pred_check
          %p775 = pneg %p428
        $region98: #{tpu_custom_call.1} parent=39 // pred_check_branch
          %777 = sbr.rel (%p775) target = $region100
        $region99: #{tpu_custom_call.1} parent=39 // pred_region
          %p778 = scmp.lt.s32.totalorder %s40, 1
          %s779 = scalar_select %p778, %s40, 1
          %s780 = scalar_lea.vmem %s14, %s779
        $region100: #{tpu_custom_call.1} parent=39 // pred_fallthru
          _
        // Predicated region
        $region101: #{tpu_custom_call.1} parent=39 // pred_check
          %p781 = pneg %p454
        $region102: #{tpu_custom_call.1} parent=39 // pred_check_branch
          %783 = sbr.rel (%p781) target = $region104
        $region103: #{tpu_custom_call.1} parent=39 // pred_region
          %p784 = scmp.lt.s32.totalorder %s40, 1
          %s785 = scalar_select %p784, %s40, 1
          %s786 = scalar_lea.vmem %s15, %s785
        $region104: #{tpu_custom_call.1} parent=39 // pred_fallthru
          _
        // Predicated region
        $region105: #{tpu_custom_call.1} parent=39 // pred_check
          %p787 = pneg %p480
        $region106: #{tpu_custom_call.1} parent=39 // pred_check_branch
          %789 = sbr.rel (%p787) target = $region108
        $region107: #{tpu_custom_call.1} parent=39 // pred_region
          %p790 = scmp.lt.s32.totalorder %s40, 1
          %s791 = scalar_select %p790, %s40, 1
          %s792 = scalar_lea.vmem %s16, %s791
        $region108: #{tpu_custom_call.1} parent=39 // pred_fallthru
          _
      $region40: #{tpu_custom_call.1} parent=5 // pred_fallthru
        _
      %p793 = scmp.le.s32.totalorder 1, %s32
      %p794 = scmp.lt.s32.totalorder %s32, 5
      %p795 = pnand %p793, %p794
      %p796 = pneg %p795
      // Predicated region
      $region109: #{tpu_custom_call.1} parent=5 // pred_check
        _
      $region110: #{tpu_custom_call.1} parent=5 // pred_check_branch
        %798 = sbr.rel (%p795) target = $region112
      $region111: #{tpu_custom_call.1} parent=5 // pred_region
        %s799 = ssub.s32 %s32, 1
        %p800 = scmp.lt.s32.totalorder %s41, 1
        %s801 = scalar_select %p800, %s41, 1
        %s802 = smul.addr %s801, 8
        %s803 = scalar_lea.vmem %s0, %s802
        %p804 = pneg %p70
        %p805 = pneg %p67
        %p806 = scmp.lt.s32.totalorder %s42, 1
        %s807 = scalar_select %p806, %s42, 1
        %s808 = smul.addr %s807, 16
        %s809 = smul.addr %s808, 8
        %s810 = scalar_lea.vmem %s1, %s809
        %p811 = pneg %p96
        %p812 = pneg %p93
        %p813 = scmp.lt.s32.totalorder %s42, 1
        %s814 = scalar_select %p813, %s42, 1
        %s815 = smul.addr %s814, 16
        %s816 = smul.addr %s815, 8
        %s817 = scalar_lea.vmem %s2, %s816
        %p818 = pneg %p122
        %p819 = pneg %p119
        %p820 = scmp.lt.s32.totalorder %s42, 1
        %s821 = scalar_select %p820, %s42, 1
        %s822 = smul.addr %s821, 16
        %s823 = smul.addr %s822, 8
        %s824 = scalar_lea.vmem %s3, %s823
        %p825 = pneg %p148
        %p826 = pneg %p145
        %p827 = scmp.lt.s32.totalorder %s42, 1
        %s828 = scalar_select %p827, %s42, 1
        %s829 = smul.addr %s828, 4
        %s830 = scalar_lea.vmem %s4, %s829
        %p831 = pneg %p174
        %p832 = pneg %p171
        %p833 = scmp.lt.s32.totalorder %s42, 1
        %s834 = scalar_select %p833, %s42, 1
        %s835 = smul.addr %s834, 4
        %s836 = scalar_lea.vmem %s5, %s835
        %p837 = pneg %p200
        %p838 = pneg %p197
        %p839 = scmp.lt.s32.totalorder %s42, 1
        %s840 = scalar_select %p839, %s42, 1
        %s841 = smul.addr %s840, 4
        %s842 = scalar_lea.vmem %s6, %s841
        %p843 = pneg %p226
        %p844 = pneg %p223
        %p845 = scmp.lt.s32.totalorder %s42, 1
        %s846 = scalar_select %p845, %s42, 1
        %s847 = smul.addr %s846, 4
        %s848 = smul.addr %s847, 8
        %s849 = scalar_lea.vmem %s7, %s848
        %p850 = pneg %p252
        %p851 = pneg %p249
        %p852 = scmp.lt.s32.totalorder %s42, 1
        %s853 = scalar_select %p852, %s42, 1
        %s854 = scalar_lea.vmem %s8, %s853
        %p855 = pneg %p278
        %p856 = pneg %p275
        %p857 = scmp.lt.s32.totalorder %s42, 1
        %s858 = scalar_select %p857, %s42, 1
        %s859 = scalar_lea.vmem %s9, %s858
        %p860 = pneg %p304
        %p861 = pneg %p301
        %p862 = scmp.lt.s32.totalorder %s42, 1
        %s863 = scalar_select %p862, %s42, 1
        %s864 = scalar_lea.vmem %s10, %s863
        %p865 = pneg %p330
        %p866 = pneg %p327
        %p867 = scmp.lt.s32.totalorder %s42, 1
        %s868 = scalar_select %p867, %s42, 1
        %s869 = smul.addr %s868, 4
        %s870 = smul.addr %s869, 8
        %s871 = scalar_lea.vmem %s11, %s870
        %p872 = pneg %p356
        %p873 = pneg %p353
        %p874 = scmp.lt.s32.totalorder %s42, 1
        %s875 = scalar_select %p874, %s42, 1
        %s876 = scalar_lea.vmem %s12, %s875
        %p877 = pneg %p382
        %p878 = pneg %p379
        %p879 = scmp.lt.s32.totalorder %s42, 1
        %s880 = scalar_select %p879, %s42, 1
        %s881 = smul.addr %s880, 8
        %s882 = smul.addr %s881, 8
        %s883 = scalar_lea.vmem %s13, %s882
        %p884 = pneg %p408
        %p885 = pneg %p405
        %p886 = scmp.lt.s32.totalorder %s42, 1
        %s887 = scalar_select %p886, %s42, 1
        %s888 = scalar_lea.vmem %s14, %s887
        %p889 = pneg %p434
        %p890 = pneg %p431
        %p891 = scmp.lt.s32.totalorder %s42, 1
        %s892 = scalar_select %p891, %s42, 1
        %s893 = scalar_lea.vmem %s15, %s892
        %p894 = pneg %p460
        %p895 = pneg %p457
        %p896 = scmp.lt.s32.totalorder %s42, 1
        %s897 = scalar_select %p896, %s42, 1
        %s898 = scalar_lea.vmem %s16, %s897
        %p899 = pneg %p486
        %p900 = pneg %p483
        %p901 = pneg %p507
        %p902 = pneg %p504
        %p903 = pneg %p528
        %p904 = pneg %p525
        %p905 = pneg %p549
        %p906 = pneg %p546
        %p907 = pneg %p570
        %p908 = pneg %p567
        %p909 = pneg %p591
        %p910 = pneg %p588
        %p911 = pneg %p612
        %p912 = pneg %p609
        %p913 = pneg %p638
        %p914 = pneg %p635
        %s915 = sand.u32 %s625, 1
        %s916 = scalar_lea.sflag [#allocation4], %s915
        %s917 = sand.u32 %s625, 1
        %s918 = scalar_lea.vmem [#allocation3], %s917
        %p919 = scmp.lt.s32.totalorder %s41, 1
        %s920 = scalar_select %p919, %s41, 1
        %s921 = smul.addr %s920, 8
        %s922 = scalar_lea.vmem %s0, %s921
        %p923 = scmp.lt.s32.totalorder %s42, 1
        %s924 = scalar_select %p923, %s42, 1
        %s925 = smul.addr %s924, 16
        %s926 = smul.addr %s925, 8
        %s927 = scalar_lea.vmem %s1, %s926
        %p928 = scmp.lt.s32.totalorder %s42, 1
        %s929 = scalar_select %p928, %s42, 1
        %s930 = smul.addr %s929, 16
        %s931 = smul.addr %s930, 8
        %s932 = scalar_lea.vmem %s2, %s931
        %p933 = scmp.lt.s32.totalorder %s42, 1
        %s934 = scalar_select %p933, %s42, 1
        %s935 = smul.addr %s934, 16
        %s936 = smul.addr %s935, 8
        %s937 = scalar_lea.vmem %s3, %s936
        %p938 = scmp.lt.s32.totalorder %s42, 1
        %s939 = scalar_select %p938, %s42, 1
        %s940 = smul.addr %s939, 4
        %s941 = scalar_lea.vmem %s4, %s940
        %p942 = scmp.lt.s32.totalorder %s42, 1
        %s943 = scalar_select %p942, %s42, 1
        %s944 = smul.addr %s943, 4
        %s945 = scalar_lea.vmem %s5, %s944
        %p946 = scmp.lt.s32.totalorder %s42, 1
        %s947 = scalar_select %p946, %s42, 1
        %s948 = smul.addr %s947, 4
        %s949 = scalar_lea.vmem %s6, %s948
        %p950 = scmp.lt.s32.totalorder %s42, 1
        %s951 = scalar_select %p950, %s42, 1
        %s952 = smul.addr %s951, 4
        %s953 = smul.addr %s952, 8
        %s954 = scalar_lea.vmem %s7, %s953
        %p955 = scmp.lt.s32.totalorder %s42, 1
        %s956 = scalar_select %p955, %s42, 1
        %s957 = scalar_lea.vmem %s8, %s956
        %p958 = scmp.lt.s32.totalorder %s42, 1
        %s959 = scalar_select %p958, %s42, 1
        %s960 = scalar_lea.vmem %s9, %s959
        %p961 = scmp.lt.s32.totalorder %s42, 1
        %s962 = scalar_select %p961, %s42, 1
        %s963 = scalar_lea.vmem %s10, %s962
        %p964 = scmp.lt.s32.totalorder %s42, 1
        %s965 = scalar_select %p964, %s42, 1
        %s966 = smul.addr %s965, 4
        %s967 = smul.addr %s966, 8
        %s968 = scalar_lea.vmem %s11, %s967
        %p969 = scmp.lt.s32.totalorder %s42, 1
        %s970 = scalar_select %p969, %s42, 1
        %s971 = scalar_lea.vmem %s12, %s970
        %p972 = scmp.lt.s32.totalorder %s42, 1
        %s973 = scalar_select %p972, %s42, 1
        %s974 = smul.addr %s973, 8
        %s975 = smul.addr %s974, 8
        %s976 = scalar_lea.vmem %s13, %s975
        %p977 = scmp.lt.s32.totalorder %s42, 1
        %s978 = scalar_select %p977, %s42, 1
        %s979 = scalar_lea.vmem %s14, %s978
        %p980 = scmp.lt.s32.totalorder %s42, 1
        %s981 = scalar_select %p980, %s42, 1
        %s982 = scalar_lea.vmem %s15, %s981
        %p983 = scmp.lt.s32.totalorder %s42, 1
        %s984 = scalar_select %p983, %s42, 1
        %s985 = scalar_lea.vmem %s16, %s984
        %p986 = scmp.eq.s32.totalorder %s42, 0
        // Predicated region
        $region113: #{tpu_custom_call.1} parent=111 // pred_check
          %p987 = pneg %p986
        $region114: #{tpu_custom_call.1} parent=111 // pred_check_branch
          %989 = sbr.rel (%p987) target = $region116
        $region115: #{tpu_custom_call.1} parent=111 // pred_region
          %v990 = vld [vmem:[%s922] sm:$0xff]
          %vm991 = vcmask 261120
          %992 = vst.msk [vmem:[#allocation2] sm:$0xff] %vm991, %v990
        $region116: #{tpu_custom_call.1} parent=111 // pred_fallthru
          _
        %v993 = vld [vmem:[#allocation2] sm:$0xff]
        %v994 = vld [vmem:[%s927] sm:$0xff]
        %v995 = vld [vmem:[%s927 + $0x8] sm:$0xff]
        %v996 = vld [vmem:[%s927 + $0x10] sm:$0xff]
        %v997 = vld [vmem:[%s927 + $0x18] sm:$0xff]
        %v998 = vld [vmem:[%s927 + $0x20] sm:$0xff]
        %v999 = vld [vmem:[%s927 + $0x28] sm:$0xff]
        %v1000 = vld [vmem:[%s927 + $0x30] sm:$0xff]
        %v1001 = vld [vmem:[%s927 + $0x38] sm:$0xff]
        %v1002 = vld [vmem:[%s927 + $0x40] sm:$0xff]
        %v1003 = vld [vmem:[%s927 + $0x48] sm:$0xff]
        %v1004 = vld [vmem:[%s927 + $0x50] sm:$0xff]
        %v1005 = vld [vmem:[%s927 + $0x58] sm:$0xff]
        %v1006 = vld [vmem:[%s927 + $0x60] sm:$0xff]
        %v1007 = vld [vmem:[%s927 + $0x68] sm:$0xff]
        %v1008 = vld [vmem:[%s927 + $0x70] sm:$0xff]
        %v1009 = vld [vmem:[%s927 + $0x78] sm:$0xff]
        %v1010 = vld [vmem:[%s932] sm:$0xff]
        %v1011 = vld [vmem:[%s932 + $0x8] sm:$0xff]
        %v1012 = vld [vmem:[%s932 + $0x10] sm:$0xff]
        %v1013 = vld [vmem:[%s932 + $0x18] sm:$0xff]
        %v1014 = vld [vmem:[%s932 + $0x20] sm:$0xff]
        %v1015 = vld [vmem:[%s932 + $0x28] sm:$0xff]
        %v1016 = vld [vmem:[%s932 + $0x30] sm:$0xff]
        %v1017 = vld [vmem:[%s932 + $0x38] sm:$0xff]
        %v1018 = vld [vmem:[%s932 + $0x40] sm:$0xff]
        %v1019 = vld [vmem:[%s932 + $0x48] sm:$0xff]
        %v1020 = vld [vmem:[%s932 + $0x50] sm:$0xff]
        %v1021 = vld [vmem:[%s932 + $0x58] sm:$0xff]
        %v1022 = vld [vmem:[%s932 + $0x60] sm:$0xff]
        %v1023 = vld [vmem:[%s932 + $0x68] sm:$0xff]
        %v1024 = vld [vmem:[%s932 + $0x70] sm:$0xff]
        %v1025 = vld [vmem:[%s932 + $0x78] sm:$0xff]
        %v1026 = vld [vmem:[%s937] sm:$0xff]
        %v1027 = vld [vmem:[%s937 + $0x8] sm:$0xff]
        %v1028 = vld [vmem:[%s937 + $0x10] sm:$0xff]
        %v1029 = vld [vmem:[%s937 + $0x18] sm:$0xff]
        %v1030 = vld [vmem:[%s937 + $0x20] sm:$0xff]
        %v1031 = vld [vmem:[%s937 + $0x28] sm:$0xff]
        %v1032 = vld [vmem:[%s937 + $0x30] sm:$0xff]
        %v1033 = vld [vmem:[%s937 + $0x38] sm:$0xff]
        %v1034 = vld [vmem:[%s937 + $0x40] sm:$0xff]
        %v1035 = vld [vmem:[%s937 + $0x48] sm:$0xff]
        %v1036 = vld [vmem:[%s937 + $0x50] sm:$0xff]
        %v1037 = vld [vmem:[%s937 + $0x58] sm:$0xff]
        %v1038 = vld [vmem:[%s937 + $0x60] sm:$0xff]
        %v1039 = vld [vmem:[%s937 + $0x68] sm:$0xff]
        %v1040 = vld [vmem:[%s937 + $0x70] sm:$0xff]
        %v1041 = vld [vmem:[%s937 + $0x78] sm:$0xff]
        %v1042 = vld [vmem:[%s941] sm:$0x1]
        %v1043 = vld [vmem:[%s941 + $0x1] sm:$0x1]
        %v1044 = vld [vmem:[%s941 + $0x2] sm:$0x1]
        %v1045 = vld [vmem:[%s941 + $0x3] sm:$0x1]
        %v1046 = vld [vmem:[%s945] sm:$0x1]
        %v1047 = vld [vmem:[%s945 + $0x1] sm:$0x1]
        %v1048 = vld [vmem:[%s945 + $0x2] sm:$0x1]
        %v1049 = vld [vmem:[%s945 + $0x3] sm:$0x1]
        %v1050 = vld [vmem:[%s949] sm:$0x1]
        %v1051 = vld [vmem:[%s949 + $0x1] sm:$0x1]
        %v1052 = vld [vmem:[%s949 + $0x2] sm:$0x1]
        %v1053 = vld [vmem:[%s949 + $0x3] sm:$0x1]
        %v1054 = vld [vmem:[%s954] sm:$0xff]
        %v1055 = vld [vmem:[%s954 + $0x8] sm:$0xff]
        %v1056 = vld [vmem:[%s954 + $0x10] sm:$0xff]
        %v1057 = vld [vmem:[%s954 + $0x18] sm:$0xff]
        %v1058 = vld [vmem:[%s957] sm:$0x1]
        %v1063 = vlaneseq
        %v1064 = vshrl.u32 %v1063, 7
        %v1065 = vsub.s32 0, %v1064
        %v1066 = vrot.slane %v1042, %v1065
        %v1067 = vlaneseq
        %v1068 = vshrl.u32 %v1067, 7
        %v1069 = vsub.s32 0, %v1068
        %v1070 = vrot.slane %v1043, %v1069
        %v1071 = vlaneseq
        %v1072 = vshrl.u32 %v1071, 7
        %v1073 = vsub.s32 0, %v1072
        %v1074 = vrot.slane %v1044, %v1073
        %v1075 = vlaneseq
        %v1076 = vshrl.u32 %v1075, 7
        %v1077 = vsub.s32 0, %v1076
        %v1078 = vrot.slane %v1045, %v1077
        %vm1083 = vcmask 261120
        %v1085 = vsel %vm1083, %v993, 0
        %1087 = vmatprep.subr.mxu0 0.0
        %1088 = vmatpush1.msra.mxu0 %v994
        %1089 = vmatprep.subr.mxu0 0.0
        %1090 = vmatpush1.msra.mxu0 %v995
        %1091 = vmatprep.subr.mxu0 0.0
        %1092 = vmatpush1.msra.mxu0 %v996
        %1093 = vmatprep.subr.mxu0 0.0
        %1094 = vmatpush1.msra.mxu0 %v997
        %1095 = vmatprep.subr.mxu0 0.0
        %1096 = vmatpush1.msra.mxu0 0.0
        %1097 = vmatprep.subr.mxu0 0.0
        %1098 = vmatpush1.msra.mxu0 0.0
        %1099 = vmatprep.subr.mxu0 0.0
        %1100 = vmatpush1.msra.mxu0 0.0
        %1101 = vmatprep.subr.mxu0 0.0
        %1102 = vmatpush1.msra.mxu0 0.0
        %1103 = vmatprep.subr.mxu0 0.0
        %1104 = vmatpush1.msra.mxu0 0.0
        %1105 = vmatprep.subr.mxu0 0.0
        %1106 = vmatpush1.msra.mxu0 0.0
        %1107 = vmatprep.subr.mxu0 0.0
        %1108 = vmatpush1.msra.mxu0 0.0
        %1109 = vmatprep.subr.mxu0 0.0
        %1110 = vmatpush1.msra.mxu0 0.0
        %1111 = vmatprep.subr.mxu0 0.0
        %1112 = vmatpush1.msra.mxu0 0.0
        %1113 = vmatprep.subr.mxu0 0.0
        %1114 = vmatpush1.msra.mxu0 0.0
        %1115 = vmatprep.subr.mxu0 0.0
        %1116 = vmatpush1.msra.mxu0 0.0
        %1117 = vmatprep.subr.mxu0 0.0
        %1118 = vmatpush1.msra.mxu0 0.0
        %1119 = vmatprep.subr.mxu0 0.0
        %1120 = vmatpush1.msra.mxu0 0.0
        %1121 = vmatprep.subr.mxu0 0.0
        %1122 = vmatpush1.msra.mxu0 0.0
        %1123 = vmatprep.subr.mxu0 0.0
        %1124 = vmatpush1.msra.mxu0 0.0
        %1125 = vmatprep.subr.mxu0 0.0
        %1126 = vmatpush1.msra.mxu0 0.0
        %1127 = vmatprep.subr.mxu0 0.0
        %1128 = vmatpush1.msra.mxu0 0.0
        %1129 = vmatprep.subr.mxu0 0.0
        %1130 = vmatpush1.msra.mxu0 0.0
        %1131 = vmatprep.subr.mxu0 0.0
        %1132 = vmatpush1.msra.mxu0 0.0
        %1133 = vmatprep.subr.mxu0 0.0
        %1134 = vmatpush1.msra.mxu0 0.0
        %1135 = vmatprep.subr.mxu0 0.0
        %1136 = vmatpush1.msra.mxu0 0.0
        %1137 = vmatprep.subr.mxu0 0.0
        %1138 = vmatpush1.msra.mxu0 0.0
        %1139 = vmatprep.subr.mxu0 0.0
        %1140 = vmatpush1.msra.mxu0 0.0
        %1141 = vmatprep.subr.mxu0 0.0
        %1142 = vmatpush1.msra.mxu0 0.0
        %1143 = vmatprep.subr.mxu0 0.0
        %1144 = vmatpush1.msra.mxu0 0.0
        %1145 = vmatprep.subr.mxu0 0.0
        %1146 = vmatpush1.msra.mxu0 0.0
        %1147 = vmatprep.subr.mxu0 0.0
        %1148 = vmatpush1.msra.mxu0 0.0
        %1149 = vmatprep.subr.mxu0 0.0
        %1150 = vmatpush1.msra.mxu0 0.0
        %1151 = vmatprep.mubr.f32.mxu0 0.0
        %1152 = vmatmul.mubr.f32.gmra.mrb[0].mxu0 %v1085
        %v1153 = vpop.f32.mrb[0].mxu0
        %v1154 = vadd.f32 %v1066, %v1153
        %v1155 = vpop.f32.mrb[0].mxu0
        %1156 = vdwg.mxu0
        %1157 = vmatprep.subr.mxu0 0.0
        %1158 = vmatpush1.msra.mxu0 %v998
        %1159 = vmatprep.subr.mxu0 0.0
        %1160 = vmatpush1.msra.mxu0 %v999
        %1161 = vmatprep.subr.mxu0 0.0
        %1162 = vmatpush1.msra.mxu0 %v1000
        %1163 = vmatprep.subr.mxu0 0.0
        %1164 = vmatpush1.msra.mxu0 %v1001
        %1165 = vmatprep.subr.mxu0 0.0
        %1166 = vmatpush1.msra.mxu0 0.0
        %1167 = vmatprep.subr.mxu0 0.0
        %1168 = vmatpush1.msra.mxu0 0.0
        %1169 = vmatprep.subr.mxu0 0.0
        %1170 = vmatpush1.msra.mxu0 0.0
        %1171 = vmatprep.subr.mxu0 0.0
        %1172 = vmatpush1.msra.mxu0 0.0
        %1173 = vmatprep.subr.mxu0 0.0
        %1174 = vmatpush1.msra.mxu0 0.0
        %1175 = vmatprep.subr.mxu0 0.0
        %1176 = vmatpush1.msra.mxu0 0.0
        %1177 = vmatprep.subr.mxu0 0.0
        %1178 = vmatpush1.msra.mxu0 0.0
        %1179 = vmatprep.subr.mxu0 0.0
        %1180 = vmatpush1.msra.mxu0 0.0
        %1181 = vmatprep.subr.mxu0 0.0
        %1182 = vmatpush1.msra.mxu0 0.0
        %1183 = vmatprep.subr.mxu0 0.0
        %1184 = vmatpush1.msra.mxu0 0.0
        %1185 = vmatprep.subr.mxu0 0.0
        %1186 = vmatpush1.msra.mxu0 0.0
        %1187 = vmatprep.subr.mxu0 0.0
        %1188 = vmatpush1.msra.mxu0 0.0
        %1189 = vmatprep.subr.mxu0 0.0
        %1190 = vmatpush1.msra.mxu0 0.0
        %1191 = vmatprep.subr.mxu0 0.0
        %1192 = vmatpush1.msra.mxu0 0.0
        %1193 = vmatprep.subr.mxu0 0.0
        %1194 = vmatpush1.msra.mxu0 0.0
        %1195 = vmatprep.subr.mxu0 0.0
        %1196 = vmatpush1.msra.mxu0 0.0
        %1197 = vmatprep.subr.mxu0 0.0
        %1198 = vmatpush1.msra.mxu0 0.0
        %1199 = vmatprep.subr.mxu0 0.0
        %1200 = vmatpush1.msra.mxu0 0.0
        %1201 = vmatprep.subr.mxu0 0.0
        %1202 = vmatpush1.msra.mxu0 0.0
        %1203 = vmatprep.subr.mxu0 0.0
        %1204 = vmatpush1.msra.mxu0 0.0
        %1205 = vmatprep.subr.mxu0 0.0
        %1206 = vmatpush1.msra.mxu0 0.0
        %1207 = vmatprep.subr.mxu0 0.0
        %1208 = vmatpush1.msra.mxu0 0.0
        %1209 = vmatprep.subr.mxu0 0.0
        %1210 = vmatpush1.msra.mxu0 0.0
        %1211 = vmatprep.subr.mxu0 0.0
        %1212 = vmatpush1.msra.mxu0 0.0
        %1213 = vmatprep.subr.mxu0 0.0
        %1214 = vmatpush1.msra.mxu0 0.0
        %1215 = vmatprep.subr.mxu0 0.0
        %1216 = vmatpush1.msra.mxu0 0.0
        %1217 = vmatprep.subr.mxu0 0.0
        %1218 = vmatpush1.msra.mxu0 0.0
        %1219 = vmatprep.subr.mxu0 0.0
        %1220 = vmatpush1.msra.mxu0 0.0
        %1221 = vmatprep.mubr.f32.mxu0 0.0
        %1222 = vmatmul.mubr.f32.gmra.mrb[0].mxu0 %v1085
        %v1223 = vpop.f32.mrb[0].mxu0
        %v1224 = vadd.f32 %v1070, %v1223
        %v1225 = vpop.f32.mrb[0].mxu0
        %1226 = vdwg.mxu0
        %1227 = vmatprep.subr.mxu0 0.0
        %1228 = vmatpush1.msra.mxu0 %v1002
        %1229 = vmatprep.subr.mxu0 0.0
        %1230 = vmatpush1.msra.mxu0 %v1003
        %1231 = vmatprep.subr.mxu0 0.0
        %1232 = vmatpush1.msra.mxu0 %v1004
        %1233 = vmatprep.subr.mxu0 0.0
        %1234 = vmatpush1.msra.mxu0 %v1005
        %1235 = vmatprep.subr.mxu0 0.0
        %1236 = vmatpush1.msra.mxu0 0.0
        %1237 = vmatprep.subr.mxu0 0.0
        %1238 = vmatpush1.msra.mxu0 0.0
        %1239 = vmatprep.subr.mxu0 0.0
        %1240 = vmatpush1.msra.mxu0 0.0
        %1241 = vmatprep.subr.mxu0 0.0
        %1242 = vmatpush1.msra.mxu0 0.0
        %1243 = vmatprep.subr.mxu0 0.0
        %1244 = vmatpush1.msra.mxu0 0.0
        %1245 = vmatprep.subr.mxu0 0.0
        %1246 = vmatpush1.msra.mxu0 0.0
        %1247 = vmatprep.subr.mxu0 0.0
        %1248 = vmatpush1.msra.mxu0 0.0
        %1249 = vmatprep.subr.mxu0 0.0
        %1250 = vmatpush1.msra.mxu0 0.0
        %1251 = vmatprep.subr.mxu0 0.0
        %1252 = vmatpush1.msra.mxu0 0.0
        %1253 = vmatprep.subr.mxu0 0.0
        %1254 = vmatpush1.msra.mxu0 0.0
        %1255 = vmatprep.subr.mxu0 0.0
        %1256 = vmatpush1.msra.mxu0 0.0
        %1257 = vmatprep.subr.mxu0 0.0
        %1258 = vmatpush1.msra.mxu0 0.0
        %1259 = vmatprep.subr.mxu0 0.0
        %1260 = vmatpush1.msra.mxu0 0.0
        %1261 = vmatprep.subr.mxu0 0.0
        %1262 = vmatpush1.msra.mxu0 0.0
        %1263 = vmatprep.subr.mxu0 0.0
        %1264 = vmatpush1.msra.mxu0 0.0
        %1265 = vmatprep.subr.mxu0 0.0
        %1266 = vmatpush1.msra.mxu0 0.0
        %1267 = vmatprep.subr.mxu0 0.0
        %1268 = vmatpush1.msra.mxu0 0.0
        %1269 = vmatprep.subr.mxu0 0.0
        %1270 = vmatpush1.msra.mxu0 0.0
        %1271 = vmatprep.subr.mxu0 0.0
        %1272 = vmatpush1.msra.mxu0 0.0
        %1273 = vmatprep.subr.mxu0 0.0
        %1274 = vmatpush1.msra.mxu0 0.0
        %1275 = vmatprep.subr.mxu0 0.0
        %1276 = vmatpush1.msra.mxu0 0.0
        %1277 = vmatprep.subr.mxu0 0.0
        %1278 = vmatpush1.msra.mxu0 0.0
        %1279 = vmatprep.subr.mxu0 0.0
        %1280 = vmatpush1.msra.mxu0 0.0
        %1281 = vmatprep.subr.mxu0 0.0
        %1282 = vmatpush1.msra.mxu0 0.0
        %1283 = vmatprep.subr.mxu0 0.0
        %1284 = vmatpush1.msra.mxu0 0.0
        %1285 = vmatprep.subr.mxu0 0.0
        %1286 = vmatpush1.msra.mxu0 0.0
        %1287 = vmatprep.subr.mxu0 0.0
        %1288 = vmatpush1.msra.mxu0 0.0
        %1289 = vmatprep.subr.mxu0 0.0
        %1290 = vmatpush1.msra.mxu0 0.0
        %1291 = vmatprep.mubr.f32.mxu0 0.0
        %1292 = vmatmul.mubr.f32.gmra.mrb[0].mxu0 %v1085
        %v1293 = vpop.f32.mrb[0].mxu0
        %v1294 = vadd.f32 %v1074, %v1293
        %v1295 = vpop.f32.mrb[0].mxu0
        %1296 = vdwg.mxu0
        %1297 = vmatprep.subr.mxu0 0.0
        %1298 = vmatpush1.msra.mxu0 %v1006
        %1299 = vmatprep.subr.mxu0 0.0
        %1300 = vmatpush1.msra.mxu0 %v1007
        %1301 = vmatprep.subr.mxu0 0.0
        %1302 = vmatpush1.msra.mxu0 %v1008
        %1303 = vmatprep.subr.mxu0 0.0
        %1304 = vmatpush1.msra.mxu0 %v1009
        %1305 = vmatprep.subr.mxu0 0.0
        %1306 = vmatpush1.msra.mxu0 0.0
        %1307 = vmatprep.subr.mxu0 0.0
        %1308 = vmatpush1.msra.mxu0 0.0
        %1309 = vmatprep.subr.mxu0 0.0
        %1310 = vmatpush1.msra.mxu0 0.0
        %1311 = vmatprep.subr.mxu0 0.0
        %1312 = vmatpush1.msra.mxu0 0.0
        %1313 = vmatprep.subr.mxu0 0.0
        %1314 = vmatpush1.msra.mxu0 0.0
        %1315 = vmatprep.subr.mxu0 0.0
        %1316 = vmatpush1.msra.mxu0 0.0
        %1317 = vmatprep.subr.mxu0 0.0
        %1318 = vmatpush1.msra.mxu0 0.0
        %1319 = vmatprep.subr.mxu0 0.0
        %1320 = vmatpush1.msra.mxu0 0.0
        %1321 = vmatprep.subr.mxu0 0.0
        %1322 = vmatpush1.msra.mxu0 0.0
        %1323 = vmatprep.subr.mxu0 0.0
        %1324 = vmatpush1.msra.mxu0 0.0
        %1325 = vmatprep.subr.mxu0 0.0
        %1326 = vmatpush1.msra.mxu0 0.0
        %1327 = vmatprep.subr.mxu0 0.0
        %1328 = vmatpush1.msra.mxu0 0.0
        %1329 = vmatprep.subr.mxu0 0.0
        %1330 = vmatpush1.msra.mxu0 0.0
        %1331 = vmatprep.subr.mxu0 0.0
        %1332 = vmatpush1.msra.mxu0 0.0
        %1333 = vmatprep.subr.mxu0 0.0
        %1334 = vmatpush1.msra.mxu0 0.0
        %1335 = vmatprep.subr.mxu0 0.0
        %1336 = vmatpush1.msra.mxu0 0.0
        %1337 = vmatprep.subr.mxu0 0.0
        %1338 = vmatpush1.msra.mxu0 0.0
        %1339 = vmatprep.subr.mxu0 0.0
        %1340 = vmatpush1.msra.mxu0 0.0
        %1341 = vmatprep.subr.mxu0 0.0
        %1342 = vmatpush1.msra.mxu0 0.0
        %1343 = vmatprep.subr.mxu0 0.0
        %1344 = vmatpush1.msra.mxu0 0.0
        %1345 = vmatprep.subr.mxu0 0.0
        %1346 = vmatpush1.msra.mxu0 0.0
        %1347 = vmatprep.subr.mxu0 0.0
        %1348 = vmatpush1.msra.mxu0 0.0
        %1349 = vmatprep.subr.mxu0 0.0
        %1350 = vmatpush1.msra.mxu0 0.0
        %1351 = vmatprep.subr.mxu0 0.0
        %1352 = vmatpush1.msra.mxu0 0.0
        %1353 = vmatprep.subr.mxu0 0.0
        %1354 = vmatpush1.msra.mxu0 0.0
        %1355 = vmatprep.subr.mxu0 0.0
        %1356 = vmatpush1.msra.mxu0 0.0
        %1357 = vmatprep.subr.mxu0 0.0
        %1358 = vmatpush1.msra.mxu0 0.0
        %1359 = vmatprep.subr.mxu0 0.0
        %1360 = vmatpush1.msra.mxu0 0.0
        %1361 = vmatprep.mubr.f32.mxu0 0.0
        %1362 = vmatmul.mubr.f32.gmra.mrb[0].mxu0 %v1085
        %v1363 = vpop.f32.mrb[0].mxu0
        %v1364 = vadd.f32 %v1078, %v1363
        %v1365 = vpop.f32.mrb[0].mxu0
        %1366 = vdwg.mxu0
        %v1371 = vlaneseq
        %v1372 = vshrl.u32 %v1371, 7
        %v1373 = vsub.s32 0, %v1372
        %v1374 = vrot.slane %v1046, %v1373
        %v1375 = vlaneseq
        %v1376 = vshrl.u32 %v1375, 7
        %v1377 = vsub.s32 0, %v1376
        %v1378 = vrot.slane %v1047, %v1377
        %v1379 = vlaneseq
        %v1380 = vshrl.u32 %v1379, 7
        %v1381 = vsub.s32 0, %v1380
        %v1382 = vrot.slane %v1048, %v1381
        %v1383 = vlaneseq
        %v1384 = vshrl.u32 %v1383, 7
        %v1385 = vsub.s32 0, %v1384
        %v1386 = vrot.slane %v1049, %v1385
        %1391 = vmatprep.subr.mxu0 0.0
        %1392 = vmatpush1.msra.mxu0 %v1010
        %1393 = vmatprep.subr.mxu0 0.0
        %1394 = vmatpush1.msra.mxu0 %v1011
        %1395 = vmatprep.subr.mxu0 0.0
        %1396 = vmatpush1.msra.mxu0 %v1012
        %1397 = vmatprep.subr.mxu0 0.0
        %1398 = vmatpush1.msra.mxu0 %v1013
        %1399 = vmatprep.subr.mxu0 0.0
        %1400 = vmatpush1.msra.mxu0 0.0
        %1401 = vmatprep.subr.mxu0 0.0
        %1402 = vmatpush1.msra.mxu0 0.0
        %1403 = vmatprep.subr.mxu0 0.0
        %1404 = vmatpush1.msra.mxu0 0.0
        %1405 = vmatprep.subr.mxu0 0.0
        %1406 = vmatpush1.msra.mxu0 0.0
        %1407 = vmatprep.subr.mxu0 0.0
        %1408 = vmatpush1.msra.mxu0 0.0
        %1409 = vmatprep.subr.mxu0 0.0
        %1410 = vmatpush1.msra.mxu0 0.0
        %1411 = vmatprep.subr.mxu0 0.0
        %1412 = vmatpush1.msra.mxu0 0.0
        %1413 = vmatprep.subr.mxu0 0.0
        %1414 = vmatpush1.msra.mxu0 0.0
        %1415 = vmatprep.subr.mxu0 0.0
        %1416 = vmatpush1.msra.mxu0 0.0
        %1417 = vmatprep.subr.mxu0 0.0
        %1418 = vmatpush1.msra.mxu0 0.0
        %1419 = vmatprep.subr.mxu0 0.0
        %1420 = vmatpush1.msra.mxu0 0.0
        %1421 = vmatprep.subr.mxu0 0.0
        %1422 = vmatpush1.msra.mxu0 0.0
        %1423 = vmatprep.subr.mxu0 0.0
        %1424 = vmatpush1.msra.mxu0 0.0
        %1425 = vmatprep.subr.mxu0 0.0
        %1426 = vmatpush1.msra.mxu0 0.0
        %1427 = vmatprep.subr.mxu0 0.0
        %1428 = vmatpush1.msra.mxu0 0.0
        %1429 = vmatprep.subr.mxu0 0.0
        %1430 = vmatpush1.msra.mxu0 0.0
        %1431 = vmatprep.subr.mxu0 0.0
        %1432 = vmatpush1.msra.mxu0 0.0
        %1433 = vmatprep.subr.mxu0 0.0
        %1434 = vmatpush1.msra.mxu0 0.0
        %1435 = vmatprep.subr.mxu0 0.0
        %1436 = vmatpush1.msra.mxu0 0.0
        %1437 = vmatprep.subr.mxu0 0.0
        %1438 = vmatpush1.msra.mxu0 0.0
        %1439 = vmatprep.subr.mxu0 0.0
        %1440 = vmatpush1.msra.mxu0 0.0
        %1441 = vmatprep.subr.mxu0 0.0
        %1442 = vmatpush1.msra.mxu0 0.0
        %1443 = vmatprep.subr.mxu0 0.0
        %1444 = vmatpush1.msra.mxu0 0.0
        %1445 = vmatprep.subr.mxu0 0.0
        %1446 = vmatpush1.msra.mxu0 0.0
        %1447 = vmatprep.subr.mxu0 0.0
        %1448 = vmatpush1.msra.mxu0 0.0
        %1449 = vmatprep.subr.mxu0 0.0
        %1450 = vmatpush1.msra.mxu0 0.0
        %1451 = vmatprep.subr.mxu0 0.0
        %1452 = vmatpush1.msra.mxu0 0.0
        %1453 = vmatprep.subr.mxu0 0.0
        %1454 = vmatpush1.msra.mxu0 0.0
        %1455 = vmatprep.mubr.f32.mxu0 0.0
        %1456 = vmatmul.mubr.f32.gmra.mrb[0].mxu0 %v1085
        %v1457 = vpop.f32.mrb[0].mxu0
        %v1458 = vadd.f32 %v1374, %v1457
        %v1459 = vpop.f32.mrb[0].mxu0
        %1460 = vdwg.mxu0
        %1461 = vmatprep.subr.mxu0 0.0
        %1462 = vmatpush1.msra.mxu0 %v1014
        %1463 = vmatprep.subr.mxu0 0.0
        %1464 = vmatpush1.msra.mxu0 %v1015
        %1465 = vmatprep.subr.mxu0 0.0
        %1466 = vmatpush1.msra.mxu0 %v1016
        %1467 = vmatprep.subr.mxu0 0.0
        %1468 = vmatpush1.msra.mxu0 %v1017
        %1469 = vmatprep.subr.mxu0 0.0
        %1470 = vmatpush1.msra.mxu0 0.0
        %1471 = vmatprep.subr.mxu0 0.0
        %1472 = vmatpush1.msra.mxu0 0.0
        %1473 = vmatprep.subr.mxu0 0.0
        %1474 = vmatpush1.msra.mxu0 0.0
        %1475 = vmatprep.subr.mxu0 0.0
        %1476 = vmatpush1.msra.mxu0 0.0
        %1477 = vmatprep.subr.mxu0 0.0
        %1478 = vmatpush1.msra.mxu0 0.0
        %1479 = vmatprep.subr.mxu0 0.0
        %1480 = vmatpush1.msra.mxu0 0.0
        %1481 = vmatprep.subr.mxu0 0.0
        %1482 = vmatpush1.msra.mxu0 0.0
        %1483 = vmatprep.subr.mxu0 0.0
        %1484 = vmatpush1.msra.mxu0 0.0
        %1485 = vmatprep.subr.mxu0 0.0
        %1486 = vmatpush1.msra.mxu0 0.0
        %1487 = vmatprep.subr.mxu0 0.0
        %1488 = vmatpush1.msra.mxu0 0.0
        %1489 = vmatprep.subr.mxu0 0.0
        %1490 = vmatpush1.msra.mxu0 0.0
        %1491 = vmatprep.subr.mxu0 0.0
        %1492 = vmatpush1.msra.mxu0 0.0
        %1493 = vmatprep.subr.mxu0 0.0
        %1494 = vmatpush1.msra.mxu0 0.0
        %1495 = vmatprep.subr.mxu0 0.0
        %1496 = vmatpush1.msra.mxu0 0.0
        %1497 = vmatprep.subr.mxu0 0.0
        %1498 = vmatpush1.msra.mxu0 0.0
        %1499 = vmatprep.subr.mxu0 0.0
        %1500 = vmatpush1.msra.mxu0 0.0
        %1501 = vmatprep.subr.mxu0 0.0
        %1502 = vmatpush1.msra.mxu0 0.0
        %1503 = vmatprep.subr.mxu0 0.0
        %1504 = vmatpush1.msra.mxu0 0.0
        %1505 = vmatprep.subr.mxu0 0.0
        %1506 = vmatpush1.msra.mxu0 0.0
        %1507 = vmatprep.subr.mxu0 0.0
        %1508 = vmatpush1.msra.mxu0 0.0
        %1509 = vmatprep.subr.mxu0 0.0
        %1510 = vmatpush1.msra.mxu0 0.0
        %1511 = vmatprep.subr.mxu0 0.0
        %1512 = vmatpush1.msra.mxu0 0.0
        %1513 = vmatprep.subr.mxu0 0.0
        %1514 = vmatpush1.msra.mxu0 0.0
        %1515 = vmatprep.subr.mxu0 0.0
        %1516 = vmatpush1.msra.mxu0 0.0
        %1517 = vmatprep.subr.mxu0 0.0
        %1518 = vmatpush1.msra.mxu0 0.0
        %1519 = vmatprep.subr.mxu0 0.0
        %1520 = vmatpush1.msra.mxu0 0.0
        %1521 = vmatprep.subr.mxu0 0.0
        %1522 = vmatpush1.msra.mxu0 0.0
        %1523 = vmatprep.subr.mxu0 0.0
        %1524 = vmatpush1.msra.mxu0 0.0
        %1525 = vmatprep.mubr.f32.mxu0 0.0
        %1526 = vmatmul.mubr.f32.gmra.mrb[0].mxu0 %v1085
        %v1527 = vpop.f32.mrb[0].mxu0
        %v1528 = vadd.f32 %v1378, %v1527
        %v1529 = vpop.f32.mrb[0].mxu0
        %1530 = vdwg.mxu0
        %1531 = vmatprep.subr.mxu0 0.0
        %1532 = vmatpush1.msra.mxu0 %v1018
        %1533 = vmatprep.subr.mxu0 0.0
        %1534 = vmatpush1.msra.mxu0 %v1019
        %1535 = vmatprep.subr.mxu0 0.0
        %1536 = vmatpush1.msra.mxu0 %v1020
        %1537 = vmatprep.subr.mxu0 0.0
        %1538 = vmatpush1.msra.mxu0 %v1021
        %1539 = vmatprep.subr.mxu0 0.0
        %1540 = vmatpush1.msra.mxu0 0.0
        %1541 = vmatprep.subr.mxu0 0.0
        %1542 = vmatpush1.msra.mxu0 0.0
        %1543 = vmatprep.subr.mxu0 0.0
        %1544 = vmatpush1.msra.mxu0 0.0
        %1545 = vmatprep.subr.mxu0 0.0
        %1546 = vmatpush1.msra.mxu0 0.0
        %1547 = vmatprep.subr.mxu0 0.0
        %1548 = vmatpush1.msra.mxu0 0.0
        %1549 = vmatprep.subr.mxu0 0.0
        %1550 = vmatpush1.msra.mxu0 0.0
        %1551 = vmatprep.subr.mxu0 0.0
        %1552 = vmatpush1.msra.mxu0 0.0
        %1553 = vmatprep.subr.mxu0 0.0
        %1554 = vmatpush1.msra.mxu0 0.0
        %1555 = vmatprep.subr.mxu0 0.0
        %1556 = vmatpush1.msra.mxu0 0.0
        %1557 = vmatprep.subr.mxu0 0.0
        %1558 = vmatpush1.msra.mxu0 0.0
        %1559 = vmatprep.subr.mxu0 0.0
        %1560 = vmatpush1.msra.mxu0 0.0
        %1561 = vmatprep.subr.mxu0 0.0
        %1562 = vmatpush1.msra.mxu0 0.0
        %1563 = vmatprep.subr.mxu0 0.0
        %1564 = vmatpush1.msra.mxu0 0.0
        %1565 = vmatprep.subr.mxu0 0.0
        %1566 = vmatpush1.msra.mxu0 0.0
        %1567 = vmatprep.subr.mxu0 0.0
        %1568 = vmatpush1.msra.mxu0 0.0
        %1569 = vmatprep.subr.mxu0 0.0
        %1570 = vmatpush1.msra.mxu0 0.0
        %1571 = vmatprep.subr.mxu0 0.0
        %1572 = vmatpush1.msra.mxu0 0.0
        %1573 = vmatprep.subr.mxu0 0.0
        %1574 = vmatpush1.msra.mxu0 0.0
        %1575 = vmatprep.subr.mxu0 0.0
        %1576 = vmatpush1.msra.mxu0 0.0
        %1577 = vmatprep.subr.mxu0 0.0
        %1578 = vmatpush1.msra.mxu0 0.0
        %1579 = vmatprep.subr.mxu0 0.0
        %1580 = vmatpush1.msra.mxu0 0.0
        %1581 = vmatprep.subr.mxu0 0.0
        %1582 = vmatpush1.msra.mxu0 0.0
        %1583 = vmatprep.subr.mxu0 0.0
        %1584 = vmatpush1.msra.mxu0 0.0
        %1585 = vmatprep.subr.mxu0 0.0
        %1586 = vmatpush1.msra.mxu0 0.0
        %1587 = vmatprep.subr.mxu0 0.0
        %1588 = vmatpush1.msra.mxu0 0.0
        %1589 = vmatprep.subr.mxu0 0.0
        %1590 = vmatpush1.msra.mxu0 0.0
        %1591 = vmatprep.subr.mxu0 0.0
        %1592 = vmatpush1.msra.mxu0 0.0
        %1593 = vmatprep.subr.mxu0 0.0
        %1594 = vmatpush1.msra.mxu0 0.0
        %1595 = vmatprep.mubr.f32.mxu0 0.0
        %1596 = vmatmul.mubr.f32.gmra.mrb[0].mxu0 %v1085
        %v1597 = vpop.f32.mrb[0].mxu0
        %v1598 = vadd.f32 %v1382, %v1597
        %v1599 = vpop.f32.mrb[0].mxu0
        %1600 = vdwg.mxu0
        %1601 = vmatprep.subr.mxu0 0.0
        %1602 = vmatpush1.msra.mxu0 %v1022
        %1603 = vmatprep.subr.mxu0 0.0
        %1604 = vmatpush1.msra.mxu0 %v1023
        %1605 = vmatprep.subr.mxu0 0.0
        %1606 = vmatpush1.msra.mxu0 %v1024
        %1607 = vmatprep.subr.mxu0 0.0
        %1608 = vmatpush1.msra.mxu0 %v1025
        %1609 = vmatprep.subr.mxu0 0.0
        %1610 = vmatpush1.msra.mxu0 0.0
        %1611 = vmatprep.subr.mxu0 0.0
        %1612 = vmatpush1.msra.mxu0 0.0
        %1613 = vmatprep.subr.mxu0 0.0
        %1614 = vmatpush1.msra.mxu0 0.0
        %1615 = vmatprep.subr.mxu0 0.0
        %1616 = vmatpush1.msra.mxu0 0.0
        %1617 = vmatprep.subr.mxu0 0.0
        %1618 = vmatpush1.msra.mxu0 0.0
        %1619 = vmatprep.subr.mxu0 0.0
        %1620 = vmatpush1.msra.mxu0 0.0
        %1621 = vmatprep.subr.mxu0 0.0
        %1622 = vmatpush1.msra.mxu0 0.0
        %1623 = vmatprep.subr.mxu0 0.0
        %1624 = vmatpush1.msra.mxu0 0.0
        %1625 = vmatprep.subr.mxu0 0.0
        %1626 = vmatpush1.msra.mxu0 0.0
        %1627 = vmatprep.subr.mxu0 0.0
        %1628 = vmatpush1.msra.mxu0 0.0
        %1629 = vmatprep.subr.mxu0 0.0
        %1630 = vmatpush1.msra.mxu0 0.0
        %1631 = vmatprep.subr.mxu0 0.0
        %1632 = vmatpush1.msra.mxu0 0.0
        %1633 = vmatprep.subr.mxu0 0.0
        %1634 = vmatpush1.msra.mxu0 0.0
        %1635 = vmatprep.subr.mxu0 0.0
        %1636 = vmatpush1.msra.mxu0 0.0
        %1637 = vmatprep.subr.mxu0 0.0
        %1638 = vmatpush1.msra.mxu0 0.0
        %1639 = vmatprep.subr.mxu0 0.0
        %1640 = vmatpush1.msra.mxu0 0.0
        %1641 = vmatprep.subr.mxu0 0.0
        %1642 = vmatpush1.msra.mxu0 0.0
        %1643 = vmatprep.subr.mxu0 0.0
        %1644 = vmatpush1.msra.mxu0 0.0
        %1645 = vmatprep.subr.mxu0 0.0
        %1646 = vmatpush1.msra.mxu0 0.0
        %1647 = vmatprep.subr.mxu0 0.0
        %1648 = vmatpush1.msra.mxu0 0.0
        %1649 = vmatprep.subr.mxu0 0.0
        %1650 = vmatpush1.msra.mxu0 0.0
        %1651 = vmatprep.subr.mxu0 0.0
        %1652 = vmatpush1.msra.mxu0 0.0
        %1653 = vmatprep.subr.mxu0 0.0
        %1654 = vmatpush1.msra.mxu0 0.0
        %1655 = vmatprep.subr.mxu0 0.0
        %1656 = vmatpush1.msra.mxu0 0.0
        %1657 = vmatprep.subr.mxu0 0.0
        %1658 = vmatpush1.msra.mxu0 0.0
        %1659 = vmatprep.subr.mxu0 0.0
        %1660 = vmatpush1.msra.mxu0 0.0
        %1661 = vmatprep.subr.mxu0 0.0
        %1662 = vmatpush1.msra.mxu0 0.0
        %1663 = vmatprep.subr.mxu0 0.0
        %1664 = vmatpush1.msra.mxu0 0.0
        %1665 = vmatprep.mubr.f32.mxu0 0.0
        %1666 = vmatmul.mubr.f32.gmra.mrb[0].mxu0 %v1085
        %v1667 = vpop.f32.mrb[0].mxu0
        %v1668 = vadd.f32 %v1386, %v1667
        %v1669 = vpop.f32.mrb[0].mxu0
        %1670 = vdwg.mxu0
        %v1675 = vlaneseq
        %v1676 = vshrl.u32 %v1675, 7
        %v1677 = vsub.s32 0, %v1676
        %v1678 = vrot.slane %v1050, %v1677
        %v1679 = vlaneseq
        %v1680 = vshrl.u32 %v1679, 7
        %v1681 = vsub.s32 0, %v1680
        %v1682 = vrot.slane %v1051, %v1681
        %v1683 = vlaneseq
        %v1684 = vshrl.u32 %v1683, 7
        %v1685 = vsub.s32 0, %v1684
        %v1686 = vrot.slane %v1052, %v1685
        %v1687 = vlaneseq
        %v1688 = vshrl.u32 %v1687, 7
        %v1689 = vsub.s32 0, %v1688
        %v1690 = vrot.slane %v1053, %v1689
        %1695 = vmatprep.subr.mxu0 0.0
        %1696 = vmatpush1.msra.mxu0 %v1026
        %1697 = vmatprep.subr.mxu0 0.0
        %1698 = vmatpush1.msra.mxu0 %v1027
        %1699 = vmatprep.subr.mxu0 0.0
        %1700 = vmatpush1.msra.mxu0 %v1028
        %1701 = vmatprep.subr.mxu0 0.0
        %1702 = vmatpush1.msra.mxu0 %v1029
        %1703 = vmatprep.subr.mxu0 0.0
        %1704 = vmatpush1.msra.mxu0 0.0
        %1705 = vmatprep.subr.mxu0 0.0
        %1706 = vmatpush1.msra.mxu0 0.0
        %1707 = vmatprep.subr.mxu0 0.0
        %1708 = vmatpush1.msra.mxu0 0.0
        %1709 = vmatprep.subr.mxu0 0.0
        %1710 = vmatpush1.msra.mxu0 0.0
        %1711 = vmatprep.subr.mxu0 0.0
        %1712 = vmatpush1.msra.mxu0 0.0
        %1713 = vmatprep.subr.mxu0 0.0
        %1714 = vmatpush1.msra.mxu0 0.0
        %1715 = vmatprep.subr.mxu0 0.0
        %1716 = vmatpush1.msra.mxu0 0.0
        %1717 = vmatprep.subr.mxu0 0.0
        %1718 = vmatpush1.msra.mxu0 0.0
        %1719 = vmatprep.subr.mxu0 0.0
        %1720 = vmatpush1.msra.mxu0 0.0
        %1721 = vmatprep.subr.mxu0 0.0
        %1722 = vmatpush1.msra.mxu0 0.0
        %1723 = vmatprep.subr.mxu0 0.0
        %1724 = vmatpush1.msra.mxu0 0.0
        %1725 = vmatprep.subr.mxu0 0.0
        %1726 = vmatpush1.msra.mxu0 0.0
        %1727 = vmatprep.subr.mxu0 0.0
        %1728 = vmatpush1.msra.mxu0 0.0
        %1729 = vmatprep.subr.mxu0 0.0
        %1730 = vmatpush1.msra.mxu0 0.0
        %1731 = vmatprep.subr.mxu0 0.0
        %1732 = vmatpush1.msra.mxu0 0.0
        %1733 = vmatprep.subr.mxu0 0.0
        %1734 = vmatpush1.msra.mxu0 0.0
        %1735 = vmatprep.subr.mxu0 0.0
        %1736 = vmatpush1.msra.mxu0 0.0
        %1737 = vmatprep.subr.mxu0 0.0
        %1738 = vmatpush1.msra.mxu0 0.0
        %1739 = vmatprep.subr.mxu0 0.0
        %1740 = vmatpush1.msra.mxu0 0.0
        %1741 = vmatprep.subr.mxu0 0.0
        %1742 = vmatpush1.msra.mxu0 0.0
        %1743 = vmatprep.subr.mxu0 0.0
        %1744 = vmatpush1.msra.mxu0 0.0
        %1745 = vmatprep.subr.mxu0 0.0
        %1746 = vmatpush1.msra.mxu0 0.0
        %1747 = vmatprep.subr.mxu0 0.0
        %1748 = vmatpush1.msra.mxu0 0.0
        %1749 = vmatprep.subr.mxu0 0.0
        %1750 = vmatpush1.msra.mxu0 0.0
        %1751 = vmatprep.subr.mxu0 0.0
        %1752 = vmatpush1.msra.mxu0 0.0
        %1753 = vmatprep.subr.mxu0 0.0
        %1754 = vmatpush1.msra.mxu0 0.0
        %1755 = vmatprep.subr.mxu0 0.0
        %1756 = vmatpush1.msra.mxu0 0.0
        %1757 = vmatprep.subr.mxu0 0.0
        %1758 = vmatpush1.msra.mxu0 0.0
        %1759 = vmatprep.mubr.f32.mxu0 0.0
        %1760 = vmatmul.mubr.f32.gmra.mrb[0].mxu0 %v1085
        %v1761 = vpop.f32.mrb[0].mxu0
        %v1762 = vadd.f32 %v1678, %v1761
        %v1763 = vpop.f32.mrb[0].mxu0
        %1764 = vdwg.mxu0
        %1765 = vmatprep.subr.mxu0 0.0
        %1766 = vmatpush1.msra.mxu0 %v1030
        %1767 = vmatprep.subr.mxu0 0.0
        %1768 = vmatpush1.msra.mxu0 %v1031
        %1769 = vmatprep.subr.mxu0 0.0
        %1770 = vmatpush1.msra.mxu0 %v1032
        %1771 = vmatprep.subr.mxu0 0.0
        %1772 = vmatpush1.msra.mxu0 %v1033
        %1773 = vmatprep.subr.mxu0 0.0
        %1774 = vmatpush1.msra.mxu0 0.0
        %1775 = vmatprep.subr.mxu0 0.0
        %1776 = vmatpush1.msra.mxu0 0.0
        %1777 = vmatprep.subr.mxu0 0.0
        %1778 = vmatpush1.msra.mxu0 0.0
        %1779 = vmatprep.subr.mxu0 0.0
        %1780 = vmatpush1.msra.mxu0 0.0
        %1781 = vmatprep.subr.mxu0 0.0
        %1782 = vmatpush1.msra.mxu0 0.0
        %1783 = vmatprep.subr.mxu0 0.0
        %1784 = vmatpush1.msra.mxu0 0.0
        %1785 = vmatprep.subr.mxu0 0.0
        %1786 = vmatpush1.msra.mxu0 0.0
        %1787 = vmatprep.subr.mxu0 0.0
        %1788 = vmatpush1.msra.mxu0 0.0
        %1789 = vmatprep.subr.mxu0 0.0
        %1790 = vmatpush1.msra.mxu0 0.0
        %1791 = vmatprep.subr.mxu0 0.0
        %1792 = vmatpush1.msra.mxu0 0.0
        %1793 = vmatprep.subr.mxu0 0.0
        %1794 = vmatpush1.msra.mxu0 0.0
        %1795 = vmatprep.subr.mxu0 0.0
        %1796 = vmatpush1.msra.mxu0 0.0
        %1797 = vmatprep.subr.mxu0 0.0
        %1798 = vmatpush1.msra.mxu0 0.0
        %1799 = vmatprep.subr.mxu0 0.0
        %1800 = vmatpush1.msra.mxu0 0.0
        %1801 = vmatprep.subr.mxu0 0.0
        %1802 = vmatpush1.msra.mxu0 0.0
        %1803 = vmatprep.subr.mxu0 0.0
        %1804 = vmatpush1.msra.mxu0 0.0
        %1805 = vmatprep.subr.mxu0 0.0
        %1806 = vmatpush1.msra.mxu0 0.0
        %1807 = vmatprep.subr.mxu0 0.0
        %1808 = vmatpush1.msra.mxu0 0.0
        %1809 = vmatprep.subr.mxu0 0.0
        %1810 = vmatpush1.msra.mxu0 0.0
        %1811 = vmatprep.subr.mxu0 0.0
        %1812 = vmatpush1.msra.mxu0 0.0
        %1813 = vmatprep.subr.mxu0 0.0
        %1814 = vmatpush1.msra.mxu0 0.0
        %1815 = vmatprep.subr.mxu0 0.0
        %1816 = vmatpush1.msra.mxu0 0.0
        %1817 = vmatprep.subr.mxu0 0.0
        %1818 = vmatpush1.msra.mxu0 0.0
        %1819 = vmatprep.subr.mxu0 0.0
        %1820 = vmatpush1.msra.mxu0 0.0
        %1821 = vmatprep.subr.mxu0 0.0
        %1822 = vmatpush1.msra.mxu0 0.0
        %1823 = vmatprep.subr.mxu0 0.0
        %1824 = vmatpush1.msra.mxu0 0.0
        %1825 = vmatprep.subr.mxu0 0.0
        %1826 = vmatpush1.msra.mxu0 0.0
        %1827 = vmatprep.subr.mxu0 0.0
        %1828 = vmatpush1.msra.mxu0 0.0
        %1829 = vmatprep.mubr.f32.mxu0 0.0
        %1830 = vmatmul.mubr.f32.gmra.mrb[0].mxu0 %v1085
        %v1831 = vpop.f32.mrb[0].mxu0
        %v1832 = vadd.f32 %v1682, %v1831
        %v1833 = vpop.f32.mrb[0].mxu0
        %1834 = vdwg.mxu0
        %1835 = vmatprep.subr.mxu0 0.0
        %1836 = vmatpush1.msra.mxu0 %v1034
        %1837 = vmatprep.subr.mxu0 0.0
        %1838 = vmatpush1.msra.mxu0 %v1035
        %1839 = vmatprep.subr.mxu0 0.0
        %1840 = vmatpush1.msra.mxu0 %v1036
        %1841 = vmatprep.subr.mxu0 0.0
        %1842 = vmatpush1.msra.mxu0 %v1037
        %1843 = vmatprep.subr.mxu0 0.0
        %1844 = vmatpush1.msra.mxu0 0.0
        %1845 = vmatprep.subr.mxu0 0.0
        %1846 = vmatpush1.msra.mxu0 0.0
        %1847 = vmatprep.subr.mxu0 0.0
        %1848 = vmatpush1.msra.mxu0 0.0
        %1849 = vmatprep.subr.mxu0 0.0
        %1850 = vmatpush1.msra.mxu0 0.0
        %1851 = vmatprep.subr.mxu0 0.0
        %1852 = vmatpush1.msra.mxu0 0.0
        %1853 = vmatprep.subr.mxu0 0.0
        %1854 = vmatpush1.msra.mxu0 0.0
        %1855 = vmatprep.subr.mxu0 0.0
        %1856 = vmatpush1.msra.mxu0 0.0
        %1857 = vmatprep.subr.mxu0 0.0
        %1858 = vmatpush1.msra.mxu0 0.0
        %1859 = vmatprep.subr.mxu0 0.0
        %1860 = vmatpush1.msra.mxu0 0.0
        %1861 = vmatprep.subr.mxu0 0.0
        %1862 = vmatpush1.msra.mxu0 0.0
        %1863 = vmatprep.subr.mxu0 0.0
        %1864 = vmatpush1.msra.mxu0 0.0
        %1865 = vmatprep.subr.mxu0 0.0
        %1866 = vmatpush1.msra.mxu0 0.0
        %1867 = vmatprep.subr.mxu0 0.0
        %1868 = vmatpush1.msra.mxu0 0.0
        %1869 = vmatprep.subr.mxu0 0.0
        %1870 = vmatpush1.msra.mxu0 0.0
        %1871 = vmatprep.subr.mxu0 0.0
        %1872 = vmatpush1.msra.mxu0 0.0
        %1873 = vmatprep.subr.mxu0 0.0
        %1874 = vmatpush1.msra.mxu0 0.0
        %1875 = vmatprep.subr.mxu0 0.0
        %1876 = vmatpush1.msra.mxu0 0.0
        %1877 = vmatprep.subr.mxu0 0.0
        %1878 = vmatpush1.msra.mxu0 0.0
        %1879 = vmatprep.subr.mxu0 0.0
        %1880 = vmatpush1.msra.mxu0 0.0
        %1881 = vmatprep.subr.mxu0 0.0
        %1882 = vmatpush1.msra.mxu0 0.0
        %1883 = vmatprep.subr.mxu0 0.0
        %1884 = vmatpush1.msra.mxu0 0.0
        %1885 = vmatprep.subr.mxu0 0.0
        %1886 = vmatpush1.msra.mxu0 0.0
        %1887 = vmatprep.subr.mxu0 0.0
        %1888 = vmatpush1.msra.mxu0 0.0
        %1889 = vmatprep.subr.mxu0 0.0
        %1890 = vmatpush1.msra.mxu0 0.0
        %1891 = vmatprep.subr.mxu0 0.0
        %1892 = vmatpush1.msra.mxu0 0.0
        %1893 = vmatprep.subr.mxu0 0.0
        %1894 = vmatpush1.msra.mxu0 0.0
        %1895 = vmatprep.subr.mxu0 0.0
        %1896 = vmatpush1.msra.mxu0 0.0
        %1897 = vmatprep.subr.mxu0 0.0
        %1898 = vmatpush1.msra.mxu0 0.0
        %1899 = vmatprep.mubr.f32.mxu0 0.0
        %1900 = vmatmul.mubr.f32.gmra.mrb[0].mxu0 %v1085
        %v1901 = vpop.f32.mrb[0].mxu0
        %v1902 = vadd.f32 %v1686, %v1901
        %v1903 = vpop.f32.mrb[0].mxu0
        %1904 = vdwg.mxu0
        %1905 = vmatprep.subr.mxu0 0.0
        %1906 = vmatpush1.msra.mxu0 %v1038
        %1907 = vmatprep.subr.mxu0 0.0
        %1908 = vmatpush1.msra.mxu0 %v1039
        %1909 = vmatprep.subr.mxu0 0.0
        %1910 = vmatpush1.msra.mxu0 %v1040
        %1911 = vmatprep.subr.mxu0 0.0
        %1912 = vmatpush1.msra.mxu0 %v1041
        %1913 = vmatprep.subr.mxu0 0.0
        %1914 = vmatpush1.msra.mxu0 0.0
        %1915 = vmatprep.subr.mxu0 0.0
        %1916 = vmatpush1.msra.mxu0 0.0
        %1917 = vmatprep.subr.mxu0 0.0
        %1918 = vmatpush1.msra.mxu0 0.0
        %1919 = vmatprep.subr.mxu0 0.0
        %1920 = vmatpush1.msra.mxu0 0.0
        %1921 = vmatprep.subr.mxu0 0.0
        %1922 = vmatpush1.msra.mxu0 0.0
        %1923 = vmatprep.subr.mxu0 0.0
        %1924 = vmatpush1.msra.mxu0 0.0
        %1925 = vmatprep.subr.mxu0 0.0
        %1926 = vmatpush1.msra.mxu0 0.0
        %1927 = vmatprep.subr.mxu0 0.0
        %1928 = vmatpush1.msra.mxu0 0.0
        %1929 = vmatprep.subr.mxu0 0.0
        %1930 = vmatpush1.msra.mxu0 0.0
        %1931 = vmatprep.subr.mxu0 0.0
        %1932 = vmatpush1.msra.mxu0 0.0
        %1933 = vmatprep.subr.mxu0 0.0
        %1934 = vmatpush1.msra.mxu0 0.0
        %1935 = vmatprep.subr.mxu0 0.0
        %1936 = vmatpush1.msra.mxu0 0.0
        %1937 = vmatprep.subr.mxu0 0.0
        %1938 = vmatpush1.msra.mxu0 0.0
        %1939 = vmatprep.subr.mxu0 0.0
        %1940 = vmatpush1.msra.mxu0 0.0
        %1941 = vmatprep.subr.mxu0 0.0
        %1942 = vmatpush1.msra.mxu0 0.0
        %1943 = vmatprep.subr.mxu0 0.0
        %1944 = vmatpush1.msra.mxu0 0.0
        %1945 = vmatprep.subr.mxu0 0.0
        %1946 = vmatpush1.msra.mxu0 0.0
        %1947 = vmatprep.subr.mxu0 0.0
        %1948 = vmatpush1.msra.mxu0 0.0
        %1949 = vmatprep.subr.mxu0 0.0
        %1950 = vmatpush1.msra.mxu0 0.0
        %1951 = vmatprep.subr.mxu0 0.0
        %1952 = vmatpush1.msra.mxu0 0.0
        %1953 = vmatprep.subr.mxu0 0.0
        %1954 = vmatpush1.msra.mxu0 0.0
        %1955 = vmatprep.subr.mxu0 0.0
        %1956 = vmatpush1.msra.mxu0 0.0
        %1957 = vmatprep.subr.mxu0 0.0
        %1958 = vmatpush1.msra.mxu0 0.0
        %1959 = vmatprep.subr.mxu0 0.0
        %1960 = vmatpush1.msra.mxu0 0.0
        %1961 = vmatprep.subr.mxu0 0.0
        %1962 = vmatpush1.msra.mxu0 0.0
        %1963 = vmatprep.subr.mxu0 0.0
        %1964 = vmatpush1.msra.mxu0 0.0
        %1965 = vmatprep.subr.mxu0 0.0
        %1966 = vmatpush1.msra.mxu0 0.0
        %1967 = vmatprep.subr.mxu0 0.0
        %1968 = vmatpush1.msra.mxu0 0.0
        %1969 = vmatprep.mubr.f32.mxu0 0.0
        %1970 = vmatmul.mubr.f32.gmra.mrb[0].mxu0 %v1085
        %v1971 = vpop.f32.mrb[0].mxu0
        %v1972 = vadd.f32 %v1690, %v1971
        %v1973 = vpop.f32.mrb[0].mxu0
        %1974 = vdwg.mxu0
        %vm1975 = vcmask 64512
        %v1977 = vsel %vm1975, %v1154, 0
        %v1980 = vsel %vm1975, %v1458, 0
        %1982 = vmatprep.subr.mxu0 0.0
        %1983 = vmatpush1.xpose.msra.mxu0 %v1980
        %1984 = vmatprep.subr.mxu0 0.0
        %1985 = vmatpush1.xpose.msra.mxu0 0.0
        %1986 = vmatprep.subr.mxu0 0.0
        %1987 = vmatpush1.xpose.msra.mxu0 0.0
        %1988 = vmatprep.subr.mxu0 0.0
        %1989 = vmatpush1.xpose.msra.mxu0 0.0
        %1990 = vmatprep.subr.mxu0 0.0
        %1991 = vmatpush1.xpose.msra.mxu0 0.0
        %1992 = vmatprep.subr.mxu0 0.0
        %1993 = vmatpush1.xpose.msra.mxu0 0.0
        %1994 = vmatprep.subr.mxu0 0.0
        %1995 = vmatpush1.xpose.msra.mxu0 0.0
        %1996 = vmatprep.subr.mxu0 0.0
        %1997 = vmatpush1.xpose.msra.mxu0 0.0
        %1998 = vmatprep.subr.mxu0 0.0
        %1999 = vmatpush1.xpose.msra.mxu0 0.0
        %2000 = vmatprep.subr.mxu0 0.0
        %2001 = vmatpush1.xpose.msra.mxu0 0.0
        %2002 = vmatprep.subr.mxu0 0.0
        %2003 = vmatpush1.xpose.msra.mxu0 0.0
        %2004 = vmatprep.subr.mxu0 0.0
        %2005 = vmatpush1.xpose.msra.mxu0 0.0
        %2006 = vmatprep.subr.mxu0 0.0
        %2007 = vmatpush1.xpose.msra.mxu0 0.0
        %2008 = vmatprep.subr.mxu0 0.0
        %2009 = vmatpush1.xpose.msra.mxu0 0.0
        %2010 = vmatprep.subr.mxu0 0.0
        %2011 = vmatpush1.xpose.msra.mxu0 0.0
        %2012 = vmatprep.subr.mxu0 0.0
        %2013 = vmatpush1.xpose.msra.mxu0 0.0
        %2014 = vmatprep.subr.mxu0 0.0
        %2015 = vmatpush1.xpose.msra.mxu0 0.0
        %2016 = vmatprep.subr.mxu0 0.0
        %2017 = vmatpush1.xpose.msra.mxu0 0.0
        %2018 = vmatprep.subr.mxu0 0.0
        %2019 = vmatpush1.xpose.msra.mxu0 0.0
        %2020 = vmatprep.subr.mxu0 0.0
        %2021 = vmatpush1.xpose.msra.mxu0 0.0
        %2022 = vmatprep.subr.mxu0 0.0
        %2023 = vmatpush1.xpose.msra.mxu0 0.0
        %2024 = vmatprep.subr.mxu0 0.0
        %2025 = vmatpush1.xpose.msra.mxu0 0.0
        %2026 = vmatprep.subr.mxu0 0.0
        %2027 = vmatpush1.xpose.msra.mxu0 0.0
        %2028 = vmatprep.subr.mxu0 0.0
        %2029 = vmatpush1.xpose.msra.mxu0 0.0
        %2030 = vmatprep.subr.mxu0 0.0
        %2031 = vmatpush1.xpose.msra.mxu0 0.0
        %2032 = vmatprep.subr.mxu0 0.0
        %2033 = vmatpush1.xpose.msra.mxu0 0.0
        %2034 = vmatprep.subr.mxu0 0.0
        %2035 = vmatpush1.xpose.msra.mxu0 0.0
        %2036 = vmatprep.subr.mxu0 0.0
        %2037 = vmatpush1.xpose.msra.mxu0 0.0
        %2038 = vmatprep.subr.mxu0 0.0
        %2039 = vmatpush1.xpose.msra.mxu0 0.0
        %2040 = vmatprep.subr.mxu0 0.0
        %2041 = vmatpush1.xpose.msra.mxu0 0.0
        %2042 = vmatprep.subr.mxu0 0.0
        %2043 = vmatpush1.xpose.msra.mxu0 0.0
        %2044 = vmatprep.subr.mxu0 0.0
        %2045 = vmatpush1.xpose.msra.mxu0 0.0
        %2046 = vmatprep.mubr.f32.mxu0 0.0
        %2047 = vmatmul.mubr.f32.gmra.mrb[0].mxu0 %v1977
        %v2048 = vpop.f32.mrb[0].mxu0
        %v2049 = vadd.f32 0.0, %v2048
        %v2050 = vpop.f32.mrb[0].mxu0
        %2051 = vdwg.mxu0
        %v2053 = vsel %vm1975, %v1224, 0
        %v2056 = vsel %vm1975, %v1528, 0
        %2058 = vmatprep.subr.mxu0 0.0
        %2059 = vmatpush1.xpose.msra.mxu0 %v2056
        %2060 = vmatprep.subr.mxu0 0.0
        %2061 = vmatpush1.xpose.msra.mxu0 0.0
        %2062 = vmatprep.subr.mxu0 0.0
        %2063 = vmatpush1.xpose.msra.mxu0 0.0
        %2064 = vmatprep.subr.mxu0 0.0
        %2065 = vmatpush1.xpose.msra.mxu0 0.0
        %2066 = vmatprep.subr.mxu0 0.0
        %2067 = vmatpush1.xpose.msra.mxu0 0.0
        %2068 = vmatprep.subr.mxu0 0.0
        %2069 = vmatpush1.xpose.msra.mxu0 0.0
        %2070 = vmatprep.subr.mxu0 0.0
        %2071 = vmatpush1.xpose.msra.mxu0 0.0
        %2072 = vmatprep.subr.mxu0 0.0
        %2073 = vmatpush1.xpose.msra.mxu0 0.0
        %2074 = vmatprep.subr.mxu0 0.0
        %2075 = vmatpush1.xpose.msra.mxu0 0.0
        %2076 = vmatprep.subr.mxu0 0.0
        %2077 = vmatpush1.xpose.msra.mxu0 0.0
        %2078 = vmatprep.subr.mxu0 0.0
        %2079 = vmatpush1.xpose.msra.mxu0 0.0
        %2080 = vmatprep.subr.mxu0 0.0
        %2081 = vmatpush1.xpose.msra.mxu0 0.0
        %2082 = vmatprep.subr.mxu0 0.0
        %2083 = vmatpush1.xpose.msra.mxu0 0.0
        %2084 = vmatprep.subr.mxu0 0.0
        %2085 = vmatpush1.xpose.msra.mxu0 0.0
        %2086 = vmatprep.subr.mxu0 0.0
        %2087 = vmatpush1.xpose.msra.mxu0 0.0
        %2088 = vmatprep.subr.mxu0 0.0
        %2089 = vmatpush1.xpose.msra.mxu0 0.0
        %2090 = vmatprep.subr.mxu0 0.0
        %2091 = vmatpush1.xpose.msra.mxu0 0.0
        %2092 = vmatprep.subr.mxu0 0.0
        %2093 = vmatpush1.xpose.msra.mxu0 0.0
        %2094 = vmatprep.subr.mxu0 0.0
        %2095 = vmatpush1.xpose.msra.mxu0 0.0
        %2096 = vmatprep.subr.mxu0 0.0
        %2097 = vmatpush1.xpose.msra.mxu0 0.0
        %2098 = vmatprep.subr.mxu0 0.0
        %2099 = vmatpush1.xpose.msra.mxu0 0.0
        %2100 = vmatprep.subr.mxu0 0.0
        %2101 = vmatpush1.xpose.msra.mxu0 0.0
        %2102 = vmatprep.subr.mxu0 0.0
        %2103 = vmatpush1.xpose.msra.mxu0 0.0
        %2104 = vmatprep.subr.mxu0 0.0
        %2105 = vmatpush1.xpose.msra.mxu0 0.0
        %2106 = vmatprep.subr.mxu0 0.0
        %2107 = vmatpush1.xpose.msra.mxu0 0.0
        %2108 = vmatprep.subr.mxu0 0.0
        %2109 = vmatpush1.xpose.msra.mxu0 0.0
        %2110 = vmatprep.subr.mxu0 0.0
        %2111 = vmatpush1.xpose.msra.mxu0 0.0
        %2112 = vmatprep.subr.mxu0 0.0
        %2113 = vmatpush1.xpose.msra.mxu0 0.0
        %2114 = vmatprep.subr.mxu0 0.0
        %2115 = vmatpush1.xpose.msra.mxu0 0.0
        %2116 = vmatprep.subr.mxu0 0.0
        %2117 = vmatpush1.xpose.msra.mxu0 0.0
        %2118 = vmatprep.subr.mxu0 0.0
        %2119 = vmatpush1.xpose.msra.mxu0 0.0
        %2120 = vmatprep.subr.mxu0 0.0
        %2121 = vmatpush1.xpose.msra.mxu0 0.0
        %2122 = vmatprep.mubr.f32.mxu0 0.0
        %2123 = vmatmul.mubr.f32.gmra.mrb[0].mxu0 %v2053
        %v2124 = vpop.f32.mrb[0].mxu0
        %v2125 = vadd.f32 0.0, %v2124
        %v2126 = vpop.f32.mrb[0].mxu0
        %2127 = vdwg.mxu0
        %v2129 = vsel %vm1975, %v1294, 0
        %v2132 = vsel %vm1975, %v1598, 0
        %2134 = vmatprep.subr.mxu0 0.0
        %2135 = vmatpush1.xpose.msra.mxu0 %v2132
        %2136 = vmatprep.subr.mxu0 0.0
        %2137 = vmatpush1.xpose.msra.mxu0 0.0
        %2138 = vmatprep.subr.mxu0 0.0
        %2139 = vmatpush1.xpose.msra.mxu0 0.0
        %2140 = vmatprep.subr.mxu0 0.0
        %2141 = vmatpush1.xpose.msra.mxu0 0.0
        %2142 = vmatprep.subr.mxu0 0.0
        %2143 = vmatpush1.xpose.msra.mxu0 0.0
        %2144 = vmatprep.subr.mxu0 0.0
        %2145 = vmatpush1.xpose.msra.mxu0 0.0
        %2146 = vmatprep.subr.mxu0 0.0
        %2147 = vmatpush1.xpose.msra.mxu0 0.0
        %2148 = vmatprep.subr.mxu0 0.0
        %2149 = vmatpush1.xpose.msra.mxu0 0.0
        %2150 = vmatprep.subr.mxu0 0.0
        %2151 = vmatpush1.xpose.msra.mxu0 0.0
        %2152 = vmatprep.subr.mxu0 0.0
        %2153 = vmatpush1.xpose.msra.mxu0 0.0
        %2154 = vmatprep.subr.mxu0 0.0
        %2155 = vmatpush1.xpose.msra.mxu0 0.0
        %2156 = vmatprep.subr.mxu0 0.0
        %2157 = vmatpush1.xpose.msra.mxu0 0.0
        %2158 = vmatprep.subr.mxu0 0.0
        %2159 = vmatpush1.xpose.msra.mxu0 0.0
        %2160 = vmatprep.subr.mxu0 0.0
        %2161 = vmatpush1.xpose.msra.mxu0 0.0
        %2162 = vmatprep.subr.mxu0 0.0
        %2163 = vmatpush1.xpose.msra.mxu0 0.0
        %2164 = vmatprep.subr.mxu0 0.0
        %2165 = vmatpush1.xpose.msra.mxu0 0.0
        %2166 = vmatprep.subr.mxu0 0.0
        %2167 = vmatpush1.xpose.msra.mxu0 0.0
        %2168 = vmatprep.subr.mxu0 0.0
        %2169 = vmatpush1.xpose.msra.mxu0 0.0
        %2170 = vmatprep.subr.mxu0 0.0
        %2171 = vmatpush1.xpose.msra.mxu0 0.0
        %2172 = vmatprep.subr.mxu0 0.0
        %2173 = vmatpush1.xpose.msra.mxu0 0.0
        %2174 = vmatprep.subr.mxu0 0.0
        %2175 = vmatpush1.xpose.msra.mxu0 0.0
        %2176 = vmatprep.subr.mxu0 0.0
        %2177 = vmatpush1.xpose.msra.mxu0 0.0
        %2178 = vmatprep.subr.mxu0 0.0
        %2179 = vmatpush1.xpose.msra.mxu0 0.0
        %2180 = vmatprep.subr.mxu0 0.0
        %2181 = vmatpush1.xpose.msra.mxu0 0.0
        %2182 = vmatprep.subr.mxu0 0.0
        %2183 = vmatpush1.xpose.msra.mxu0 0.0
        %2184 = vmatprep.subr.mxu0 0.0
        %2185 = vmatpush1.xpose.msra.mxu0 0.0
        %2186 = vmatprep.subr.mxu0 0.0
        %2187 = vmatpush1.xpose.msra.mxu0 0.0
        %2188 = vmatprep.subr.mxu0 0.0
        %2189 = vmatpush1.xpose.msra.mxu0 0.0
        %2190 = vmatprep.subr.mxu0 0.0
        %2191 = vmatpush1.xpose.msra.mxu0 0.0
        %2192 = vmatprep.subr.mxu0 0.0
        %2193 = vmatpush1.xpose.msra.mxu0 0.0
        %2194 = vmatprep.subr.mxu0 0.0
        %2195 = vmatpush1.xpose.msra.mxu0 0.0
        %2196 = vmatprep.subr.mxu0 0.0
        %2197 = vmatpush1.xpose.msra.mxu0 0.0
        %2198 = vmatprep.mubr.f32.mxu0 0.0
        %2199 = vmatmul.mubr.f32.gmra.mrb[0].mxu0 %v2129
        %v2200 = vpop.f32.mrb[0].mxu0
        %v2201 = vadd.f32 0.0, %v2200
        %v2202 = vpop.f32.mrb[0].mxu0
        %2203 = vdwg.mxu0
        %v2205 = vsel %vm1975, %v1364, 0
        %v2208 = vsel %vm1975, %v1668, 0
        %2210 = vmatprep.subr.mxu0 0.0
        %2211 = vmatpush1.xpose.msra.mxu0 %v2208
        %2212 = vmatprep.subr.mxu0 0.0
        %2213 = vmatpush1.xpose.msra.mxu0 0.0
        %2214 = vmatprep.subr.mxu0 0.0
        %2215 = vmatpush1.xpose.msra.mxu0 0.0
        %2216 = vmatprep.subr.mxu0 0.0
        %2217 = vmatpush1.xpose.msra.mxu0 0.0
        %2218 = vmatprep.subr.mxu0 0.0
        %2219 = vmatpush1.xpose.msra.mxu0 0.0
        %2220 = vmatprep.subr.mxu0 0.0
        %2221 = vmatpush1.xpose.msra.mxu0 0.0
        %2222 = vmatprep.subr.mxu0 0.0
        %2223 = vmatpush1.xpose.msra.mxu0 0.0
        %2224 = vmatprep.subr.mxu0 0.0
        %2225 = vmatpush1.xpose.msra.mxu0 0.0
        %2226 = vmatprep.subr.mxu0 0.0
        %2227 = vmatpush1.xpose.msra.mxu0 0.0
        %2228 = vmatprep.subr.mxu0 0.0
        %2229 = vmatpush1.xpose.msra.mxu0 0.0
        %2230 = vmatprep.subr.mxu0 0.0
        %2231 = vmatpush1.xpose.msra.mxu0 0.0
        %2232 = vmatprep.subr.mxu0 0.0
        %2233 = vmatpush1.xpose.msra.mxu0 0.0
        %2234 = vmatprep.subr.mxu0 0.0
        %2235 = vmatpush1.xpose.msra.mxu0 0.0
        %2236 = vmatprep.subr.mxu0 0.0
        %2237 = vmatpush1.xpose.msra.mxu0 0.0
        %2238 = vmatprep.subr.mxu0 0.0
        %2239 = vmatpush1.xpose.msra.mxu0 0.0
        %2240 = vmatprep.subr.mxu0 0.0
        %2241 = vmatpush1.xpose.msra.mxu0 0.0
        %2242 = vmatprep.subr.mxu0 0.0
        %2243 = vmatpush1.xpose.msra.mxu0 0.0
        %2244 = vmatprep.subr.mxu0 0.0
        %2245 = vmatpush1.xpose.msra.mxu0 0.0
        %2246 = vmatprep.subr.mxu0 0.0
        %2247 = vmatpush1.xpose.msra.mxu0 0.0
        %2248 = vmatprep.subr.mxu0 0.0
        %2249 = vmatpush1.xpose.msra.mxu0 0.0
        %2250 = vmatprep.subr.mxu0 0.0
        %2251 = vmatpush1.xpose.msra.mxu0 0.0
        %2252 = vmatprep.subr.mxu0 0.0
        %2253 = vmatpush1.xpose.msra.mxu0 0.0
        %2254 = vmatprep.subr.mxu0 0.0
        %2255 = vmatpush1.xpose.msra.mxu0 0.0
        %2256 = vmatprep.subr.mxu0 0.0
        %2257 = vmatpush1.xpose.msra.mxu0 0.0
        %2258 = vmatprep.subr.mxu0 0.0
        %2259 = vmatpush1.xpose.msra.mxu0 0.0
        %2260 = vmatprep.subr.mxu0 0.0
        %2261 = vmatpush1.xpose.msra.mxu0 0.0
        %2262 = vmatprep.subr.mxu0 0.0
        %2263 = vmatpush1.xpose.msra.mxu0 0.0
        %2264 = vmatprep.subr.mxu0 0.0
        %2265 = vmatpush1.xpose.msra.mxu0 0.0
        %2266 = vmatprep.subr.mxu0 0.0
        %2267 = vmatpush1.xpose.msra.mxu0 0.0
        %2268 = vmatprep.subr.mxu0 0.0
        %2269 = vmatpush1.xpose.msra.mxu0 0.0
        %2270 = vmatprep.subr.mxu0 0.0
        %2271 = vmatpush1.xpose.msra.mxu0 0.0
        %2272 = vmatprep.subr.mxu0 0.0
        %2273 = vmatpush1.xpose.msra.mxu0 0.0
        %2274 = vmatprep.mubr.f32.mxu0 0.0
        %2275 = vmatmul.mubr.f32.gmra.mrb[0].mxu0 %v2205
        %v2276 = vpop.f32.mrb[0].mxu0
        %v2277 = vadd.f32 0.0, %v2276
        %v2278 = vpop.f32.mrb[0].mxu0
        %2279 = vdwg.mxu0
        %v2280 = vmul.f32 %v2049, 0.35355338
        %v2281 = vmul.f32 %v2125, 0.35355338
        %v2282 = vmul.f32 %v2201, 0.35355338
        %v2283 = vmul.f32 %v2277, 0.35355338
        %v2284 = vsel %vm1975, %v2280, -inf
        %2285 = vmax.xlane.f32.xlu0 %v2284
        %v2286 = vpop.xlane.xlu0 %2285
        %v2287 = vsel %vm1975, %v2281, -inf
        %2288 = vmax.xlane.f32.xlu0 %v2287
        %v2289 = vpop.xlane.xlu0 %2288
        %v2290 = vsel %vm1975, %v2282, -inf
        %2291 = vmax.xlane.f32.xlu0 %v2290
        %v2292 = vpop.xlane.xlu0 %2291
        %v2293 = vsel %vm1975, %v2283, -inf
        %2294 = vmax.xlane.f32.xlu0 %v2293
        %v2295 = vpop.xlane.xlu0 %2294
        %v2296 = vsub.f32 %v2280, %v2286
        %v2297 = vsub.f32 %v2281, %v2289
        %v2298 = vsub.f32 %v2282, %v2292
        %v2299 = vsub.f32 %v2283, %v2295
        %v2300 = vmul.f32 %v2296, 1.442695
        %v2301 = vpow.pop %v2300
        %v2302 = vmul.f32 %v2297, 1.442695
        %v2303 = vpow.pop %v2302
        %v2304 = vmul.f32 %v2298, 1.442695
        %v2305 = vpow.pop %v2304
        %v2306 = vmul.f32 %v2299, 1.442695
        %v2307 = vpow.pop %v2306
        %v2308 = vsel %vm1975, %v2301, 0.0
        %2309 = vadd.xlane.f32.xlu0 %v2308
        %v2310 = vpop.xlane.xlu0 %2309
        %v2311 = vsel %vm1975, %v2303, 0.0
        %2312 = vadd.xlane.f32.xlu0 %v2311
        %v2313 = vpop.xlane.xlu0 %2312
        %v2314 = vsel %vm1975, %v2305, 0.0
        %2315 = vadd.xlane.f32.xlu0 %v2314
        %v2316 = vpop.xlane.xlu0 %2315
        %v2317 = vsel %vm1975, %v2307, 0.0
        %2318 = vadd.xlane.f32.xlu0 %v2317
        %v2319 = vpop.xlane.xlu0 %2318
        %v2320 = vrcp.pop %v2310
        %v2321 = vrcp.pop %v2313
        %v2322 = vrcp.pop %v2316
        %v2323 = vrcp.pop %v2319
        %v2324 = vmul.f32 %v2301, %v2320
        %v2325 = vmul.f32 %v2303, %v2321
        %v2326 = vmul.f32 %v2305, %v2322
        %v2327 = vmul.f32 %v2307, %v2323
        %v2329 = vsel %vm1975, %v2324, 0
        %2331 = vmatprep.subr.mxu0 0.0
        %2332 = vmatpush1.msra.mxu0 %v1762
        %2333 = vmatprep.subr.mxu0 0.0
        %2334 = vmatpush1.msra.mxu0 0.0
        %2335 = vmatprep.subr.mxu0 0.0
        %2336 = vmatpush1.msra.mxu0 0.0
        %2337 = vmatprep.subr.mxu0 0.0
        %2338 = vmatpush1.msra.mxu0 0.0
        %2339 = vmatprep.subr.mxu0 0.0
        %2340 = vmatpush1.msra.mxu0 0.0
        %2341 = vmatprep.subr.mxu0 0.0
        %2342 = vmatpush1.msra.mxu0 0.0
        %2343 = vmatprep.subr.mxu0 0.0
        %2344 = vmatpush1.msra.mxu0 0.0
        %2345 = vmatprep.subr.mxu0 0.0
        %2346 = vmatpush1.msra.mxu0 0.0
        %2347 = vmatprep.subr.mxu0 0.0
        %2348 = vmatpush1.msra.mxu0 0.0
        %2349 = vmatprep.subr.mxu0 0.0
        %2350 = vmatpush1.msra.mxu0 0.0
        %2351 = vmatprep.subr.mxu0 0.0
        %2352 = vmatpush1.msra.mxu0 0.0
        %2353 = vmatprep.subr.mxu0 0.0
        %2354 = vmatpush1.msra.mxu0 0.0
        %2355 = vmatprep.subr.mxu0 0.0
        %2356 = vmatpush1.msra.mxu0 0.0
        %2357 = vmatprep.subr.mxu0 0.0
        %2358 = vmatpush1.msra.mxu0 0.0
        %2359 = vmatprep.subr.mxu0 0.0
        %2360 = vmatpush1.msra.mxu0 0.0
        %2361 = vmatprep.subr.mxu0 0.0
        %2362 = vmatpush1.msra.mxu0 0.0
        %2363 = vmatprep.subr.mxu0 0.0
        %2364 = vmatpush1.msra.mxu0 0.0
        %2365 = vmatprep.subr.mxu0 0.0
        %2366 = vmatpush1.msra.mxu0 0.0
        %2367 = vmatprep.subr.mxu0 0.0
        %2368 = vmatpush1.msra.mxu0 0.0
        %2369 = vmatprep.subr.mxu0 0.0
        %2370 = vmatpush1.msra.mxu0 0.0
        %2371 = vmatprep.subr.mxu0 0.0
        %2372 = vmatpush1.msra.mxu0 0.0
        %2373 = vmatprep.subr.mxu0 0.0
        %2374 = vmatpush1.msra.mxu0 0.0
        %2375 = vmatprep.subr.mxu0 0.0
        %2376 = vmatpush1.msra.mxu0 0.0
        %2377 = vmatprep.subr.mxu0 0.0
        %2378 = vmatpush1.msra.mxu0 0.0
        %2379 = vmatprep.subr.mxu0 0.0
        %2380 = vmatpush1.msra.mxu0 0.0
        %2381 = vmatprep.subr.mxu0 0.0
        %2382 = vmatpush1.msra.mxu0 0.0
        %2383 = vmatprep.subr.mxu0 0.0
        %2384 = vmatpush1.msra.mxu0 0.0
        %2385 = vmatprep.subr.mxu0 0.0
        %2386 = vmatpush1.msra.mxu0 0.0
        %2387 = vmatprep.subr.mxu0 0.0
        %2388 = vmatpush1.msra.mxu0 0.0
        %2389 = vmatprep.subr.mxu0 0.0
        %2390 = vmatpush1.msra.mxu0 0.0
        %2391 = vmatprep.subr.mxu0 0.0
        %2392 = vmatpush1.msra.mxu0 0.0
        %2393 = vmatprep.subr.mxu0 0.0
        %2394 = vmatpush1.msra.mxu0 0.0
        %2395 = vmatprep.mubr.f32.mxu0 0.0
        %2396 = vmatmul.mubr.f32.gmra.mrb[0].mxu0 %v2329
        %v2397 = vpop.f32.mrb[0].mxu0
        %v2398 = vadd.f32 0.0, %v2397
        %v2399 = vpop.f32.mrb[0].mxu0
        %2400 = vdwg.mxu0
        %v2402 = vsel %vm1975, %v2325, 0
        %2404 = vmatprep.subr.mxu0 0.0
        %2405 = vmatpush1.msra.mxu0 %v1832
        %2406 = vmatprep.subr.mxu0 0.0
        %2407 = vmatpush1.msra.mxu0 0.0
        %2408 = vmatprep.subr.mxu0 0.0
        %2409 = vmatpush1.msra.mxu0 0.0
        %2410 = vmatprep.subr.mxu0 0.0
        %2411 = vmatpush1.msra.mxu0 0.0
        %2412 = vmatprep.subr.mxu0 0.0
        %2413 = vmatpush1.msra.mxu0 0.0
        %2414 = vmatprep.subr.mxu0 0.0
        %2415 = vmatpush1.msra.mxu0 0.0
        %2416 = vmatprep.subr.mxu0 0.0
        %2417 = vmatpush1.msra.mxu0 0.0
        %2418 = vmatprep.subr.mxu0 0.0
        %2419 = vmatpush1.msra.mxu0 0.0
        %2420 = vmatprep.subr.mxu0 0.0
        %2421 = vmatpush1.msra.mxu0 0.0
        %2422 = vmatprep.subr.mxu0 0.0
        %2423 = vmatpush1.msra.mxu0 0.0
        %2424 = vmatprep.subr.mxu0 0.0
        %2425 = vmatpush1.msra.mxu0 0.0
        %2426 = vmatprep.subr.mxu0 0.0
        %2427 = vmatpush1.msra.mxu0 0.0
        %2428 = vmatprep.subr.mxu0 0.0
        %2429 = vmatpush1.msra.mxu0 0.0
        %2430 = vmatprep.subr.mxu0 0.0
        %2431 = vmatpush1.msra.mxu0 0.0
        %2432 = vmatprep.subr.mxu0 0.0
        %2433 = vmatpush1.msra.mxu0 0.0
        %2434 = vmatprep.subr.mxu0 0.0
        %2435 = vmatpush1.msra.mxu0 0.0
        %2436 = vmatprep.subr.mxu0 0.0
        %2437 = vmatpush1.msra.mxu0 0.0
        %2438 = vmatprep.subr.mxu0 0.0
        %2439 = vmatpush1.msra.mxu0 0.0
        %2440 = vmatprep.subr.mxu0 0.0
        %2441 = vmatpush1.msra.mxu0 0.0
        %2442 = vmatprep.subr.mxu0 0.0
        %2443 = vmatpush1.msra.mxu0 0.0
        %2444 = vmatprep.subr.mxu0 0.0
        %2445 = vmatpush1.msra.mxu0 0.0
        %2446 = vmatprep.subr.mxu0 0.0
        %2447 = vmatpush1.msra.mxu0 0.0
        %2448 = vmatprep.subr.mxu0 0.0
        %2449 = vmatpush1.msra.mxu0 0.0
        %2450 = vmatprep.subr.mxu0 0.0
        %2451 = vmatpush1.msra.mxu0 0.0
        %2452 = vmatprep.subr.mxu0 0.0
        %2453 = vmatpush1.msra.mxu0 0.0
        %2454 = vmatprep.subr.mxu0 0.0
        %2455 = vmatpush1.msra.mxu0 0.0
        %2456 = vmatprep.subr.mxu0 0.0
        %2457 = vmatpush1.msra.mxu0 0.0
        %2458 = vmatprep.subr.mxu0 0.0
        %2459 = vmatpush1.msra.mxu0 0.0
        %2460 = vmatprep.subr.mxu0 0.0
        %2461 = vmatpush1.msra.mxu0 0.0
        %2462 = vmatprep.subr.mxu0 0.0
        %2463 = vmatpush1.msra.mxu0 0.0
        %2464 = vmatprep.subr.mxu0 0.0
        %2465 = vmatpush1.msra.mxu0 0.0
        %2466 = vmatprep.subr.mxu0 0.0
        %2467 = vmatpush1.msra.mxu0 0.0
        %2468 = vmatprep.mubr.f32.mxu0 0.0
        %2469 = vmatmul.mubr.f32.gmra.mrb[0].mxu0 %v2402
        %v2470 = vpop.f32.mrb[0].mxu0
        %v2471 = vadd.f32 0.0, %v2470
        %v2472 = vpop.f32.mrb[0].mxu0
        %2473 = vdwg.mxu0
        %v2475 = vsel %vm1975, %v2326, 0
        %2477 = vmatprep.subr.mxu0 0.0
        %2478 = vmatpush1.msra.mxu0 %v1902
        %2479 = vmatprep.subr.mxu0 0.0
        %2480 = vmatpush1.msra.mxu0 0.0
        %2481 = vmatprep.subr.mxu0 0.0
        %2482 = vmatpush1.msra.mxu0 0.0
        %2483 = vmatprep.subr.mxu0 0.0
        %2484 = vmatpush1.msra.mxu0 0.0
        %2485 = vmatprep.subr.mxu0 0.0
        %2486 = vmatpush1.msra.mxu0 0.0
        %2487 = vmatprep.subr.mxu0 0.0
        %2488 = vmatpush1.msra.mxu0 0.0
        %2489 = vmatprep.subr.mxu0 0.0
        %2490 = vmatpush1.msra.mxu0 0.0
        %2491 = vmatprep.subr.mxu0 0.0
        %2492 = vmatpush1.msra.mxu0 0.0
        %2493 = vmatprep.subr.mxu0 0.0
        %2494 = vmatpush1.msra.mxu0 0.0
        %2495 = vmatprep.subr.mxu0 0.0
        %2496 = vmatpush1.msra.mxu0 0.0
        %2497 = vmatprep.subr.mxu0 0.0
        %2498 = vmatpush1.msra.mxu0 0.0
        %2499 = vmatprep.subr.mxu0 0.0
        %2500 = vmatpush1.msra.mxu0 0.0
        %2501 = vmatprep.subr.mxu0 0.0
        %2502 = vmatpush1.msra.mxu0 0.0
        %2503 = vmatprep.subr.mxu0 0.0
        %2504 = vmatpush1.msra.mxu0 0.0
        %2505 = vmatprep.subr.mxu0 0.0
        %2506 = vmatpush1.msra.mxu0 0.0
        %2507 = vmatprep.subr.mxu0 0.0
        %2508 = vmatpush1.msra.mxu0 0.0
        %2509 = vmatprep.subr.mxu0 0.0
        %2510 = vmatpush1.msra.mxu0 0.0
        %2511 = vmatprep.subr.mxu0 0.0
        %2512 = vmatpush1.msra.mxu0 0.0
        %2513 = vmatprep.subr.mxu0 0.0
        %2514 = vmatpush1.msra.mxu0 0.0
        %2515 = vmatprep.subr.mxu0 0.0
        %2516 = vmatpush1.msra.mxu0 0.0
        %2517 = vmatprep.subr.mxu0 0.0
        %2518 = vmatpush1.msra.mxu0 0.0
        %2519 = vmatprep.subr.mxu0 0.0
        %2520 = vmatpush1.msra.mxu0 0.0
        %2521 = vmatprep.subr.mxu0 0.0
        %2522 = vmatpush1.msra.mxu0 0.0
        %2523 = vmatprep.subr.mxu0 0.0
        %2524 = vmatpush1.msra.mxu0 0.0
        %2525 = vmatprep.subr.mxu0 0.0
        %2526 = vmatpush1.msra.mxu0 0.0
        %2527 = vmatprep.subr.mxu0 0.0
        %2528 = vmatpush1.msra.mxu0 0.0
        %2529 = vmatprep.subr.mxu0 0.0
        %2530 = vmatpush1.msra.mxu0 0.0
        %2531 = vmatprep.subr.mxu0 0.0
        %2532 = vmatpush1.msra.mxu0 0.0
        %2533 = vmatprep.subr.mxu0 0.0
        %2534 = vmatpush1.msra.mxu0 0.0
        %2535 = vmatprep.subr.mxu0 0.0
        %2536 = vmatpush1.msra.mxu0 0.0
        %2537 = vmatprep.subr.mxu0 0.0
        %2538 = vmatpush1.msra.mxu0 0.0
        %2539 = vmatprep.subr.mxu0 0.0
        %2540 = vmatpush1.msra.mxu0 0.0
        %2541 = vmatprep.mubr.f32.mxu0 0.0
        %2542 = vmatmul.mubr.f32.gmra.mrb[0].mxu0 %v2475
        %v2543 = vpop.f32.mrb[0].mxu0
        %v2544 = vadd.f32 0.0, %v2543
        %v2545 = vpop.f32.mrb[0].mxu0
        %2546 = vdwg.mxu0
        %v2548 = vsel %vm1975, %v2327, 0
        %2550 = vmatprep.subr.mxu0 0.0
        %2551 = vmatpush1.msra.mxu0 %v1972
        %2552 = vmatprep.subr.mxu0 0.0
        %2553 = vmatpush1.msra.mxu0 0.0
        %2554 = vmatprep.subr.mxu0 0.0
        %2555 = vmatpush1.msra.mxu0 0.0
        %2556 = vmatprep.subr.mxu0 0.0
        %2557 = vmatpush1.msra.mxu0 0.0
        %2558 = vmatprep.subr.mxu0 0.0
        %2559 = vmatpush1.msra.mxu0 0.0
        %2560 = vmatprep.subr.mxu0 0.0
        %2561 = vmatpush1.msra.mxu0 0.0
        %2562 = vmatprep.subr.mxu0 0.0
        %2563 = vmatpush1.msra.mxu0 0.0
        %2564 = vmatprep.subr.mxu0 0.0
        %2565 = vmatpush1.msra.mxu0 0.0
        %2566 = vmatprep.subr.mxu0 0.0
        %2567 = vmatpush1.msra.mxu0 0.0
        %2568 = vmatprep.subr.mxu0 0.0
        %2569 = vmatpush1.msra.mxu0 0.0
        %2570 = vmatprep.subr.mxu0 0.0
        %2571 = vmatpush1.msra.mxu0 0.0
        %2572 = vmatprep.subr.mxu0 0.0
        %2573 = vmatpush1.msra.mxu0 0.0
        %2574 = vmatprep.subr.mxu0 0.0
        %2575 = vmatpush1.msra.mxu0 0.0
        %2576 = vmatprep.subr.mxu0 0.0
        %2577 = vmatpush1.msra.mxu0 0.0
        %2578 = vmatprep.subr.mxu0 0.0
        %2579 = vmatpush1.msra.mxu0 0.0
        %2580 = vmatprep.subr.mxu0 0.0
        %2581 = vmatpush1.msra.mxu0 0.0
        %2582 = vmatprep.subr.mxu0 0.0
        %2583 = vmatpush1.msra.mxu0 0.0
        %2584 = vmatprep.subr.mxu0 0.0
        %2585 = vmatpush1.msra.mxu0 0.0
        %2586 = vmatprep.subr.mxu0 0.0
        %2587 = vmatpush1.msra.mxu0 0.0
        %2588 = vmatprep.subr.mxu0 0.0
        %2589 = vmatpush1.msra.mxu0 0.0
        %2590 = vmatprep.subr.mxu0 0.0
        %2591 = vmatpush1.msra.mxu0 0.0
        %2592 = vmatprep.subr.mxu0 0.0
        %2593 = vmatpush1.msra.mxu0 0.0
        %2594 = vmatprep.subr.mxu0 0.0
        %2595 = vmatpush1.msra.mxu0 0.0
        %2596 = vmatprep.subr.mxu0 0.0
        %2597 = vmatpush1.msra.mxu0 0.0
        %2598 = vmatprep.subr.mxu0 0.0
        %2599 = vmatpush1.msra.mxu0 0.0
        %2600 = vmatprep.subr.mxu0 0.0
        %2601 = vmatpush1.msra.mxu0 0.0
        %2602 = vmatprep.subr.mxu0 0.0
        %2603 = vmatpush1.msra.mxu0 0.0
        %2604 = vmatprep.subr.mxu0 0.0
        %2605 = vmatpush1.msra.mxu0 0.0
        %2606 = vmatprep.subr.mxu0 0.0
        %2607 = vmatpush1.msra.mxu0 0.0
        %2608 = vmatprep.subr.mxu0 0.0
        %2609 = vmatpush1.msra.mxu0 0.0
        %2610 = vmatprep.subr.mxu0 0.0
        %2611 = vmatpush1.msra.mxu0 0.0
        %2612 = vmatprep.subr.mxu0 0.0
        %2613 = vmatpush1.msra.mxu0 0.0
        %2614 = vmatprep.mubr.f32.mxu0 0.0
        %2615 = vmatmul.mubr.f32.gmra.mrb[0].mxu0 %v2548
        %v2616 = vpop.f32.mrb[0].mxu0
        %v2617 = vadd.f32 0.0, %v2616
        %v2618 = vpop.f32.mrb[0].mxu0
        %2619 = vdwg.mxu0
        %v2621 = vsel %vm1975, %v2398, 0
        %2623 = vmatprep.subr.mxu0 0.0
        %2624 = vmatpush1.msra.mxu0 %v1054
        %2625 = vmatprep.subr.mxu0 0.0
        %2626 = vmatpush1.msra.mxu0 0.0
        %2627 = vmatprep.subr.mxu0 0.0
        %2628 = vmatpush1.msra.mxu0 0.0
        %2629 = vmatprep.subr.mxu0 0.0
        %2630 = vmatpush1.msra.mxu0 0.0
        %2631 = vmatprep.subr.mxu0 0.0
        %2632 = vmatpush1.msra.mxu0 0.0
        %2633 = vmatprep.subr.mxu0 0.0
        %2634 = vmatpush1.msra.mxu0 0.0
        %2635 = vmatprep.subr.mxu0 0.0
        %2636 = vmatpush1.msra.mxu0 0.0
        %2637 = vmatprep.subr.mxu0 0.0
        %2638 = vmatpush1.msra.mxu0 0.0
        %2639 = vmatprep.subr.mxu0 0.0
        %2640 = vmatpush1.msra.mxu0 0.0
        %2641 = vmatprep.subr.mxu0 0.0
        %2642 = vmatpush1.msra.mxu0 0.0
        %2643 = vmatprep.subr.mxu0 0.0
        %2644 = vmatpush1.msra.mxu0 0.0
        %2645 = vmatprep.subr.mxu0 0.0
        %2646 = vmatpush1.msra.mxu0 0.0
        %2647 = vmatprep.subr.mxu0 0.0
        %2648 = vmatpush1.msra.mxu0 0.0
        %2649 = vmatprep.subr.mxu0 0.0
        %2650 = vmatpush1.msra.mxu0 0.0
        %2651 = vmatprep.subr.mxu0 0.0
        %2652 = vmatpush1.msra.mxu0 0.0
        %2653 = vmatprep.subr.mxu0 0.0
        %2654 = vmatpush1.msra.mxu0 0.0
        %2655 = vmatprep.subr.mxu0 0.0
        %2656 = vmatpush1.msra.mxu0 0.0
        %2657 = vmatprep.subr.mxu0 0.0
        %2658 = vmatpush1.msra.mxu0 0.0
        %2659 = vmatprep.subr.mxu0 0.0
        %2660 = vmatpush1.msra.mxu0 0.0
        %2661 = vmatprep.subr.mxu0 0.0
        %2662 = vmatpush1.msra.mxu0 0.0
        %2663 = vmatprep.subr.mxu0 0.0
        %2664 = vmatpush1.msra.mxu0 0.0
        %2665 = vmatprep.subr.mxu0 0.0
        %2666 = vmatpush1.msra.mxu0 0.0
        %2667 = vmatprep.subr.mxu0 0.0
        %2668 = vmatpush1.msra.mxu0 0.0
        %2669 = vmatprep.subr.mxu0 0.0
        %2670 = vmatpush1.msra.mxu0 0.0
        %2671 = vmatprep.subr.mxu0 0.0
        %2672 = vmatpush1.msra.mxu0 0.0
        %2673 = vmatprep.subr.mxu0 0.0
        %2674 = vmatpush1.msra.mxu0 0.0
        %2675 = vmatprep.subr.mxu0 0.0
        %2676 = vmatpush1.msra.mxu0 0.0
        %2677 = vmatprep.subr.mxu0 0.0
        %2678 = vmatpush1.msra.mxu0 0.0
        %2679 = vmatprep.subr.mxu0 0.0
        %2680 = vmatpush1.msra.mxu0 0.0
        %2681 = vmatprep.subr.mxu0 0.0
        %2682 = vmatpush1.msra.mxu0 0.0
        %2683 = vmatprep.subr.mxu0 0.0
        %2684 = vmatpush1.msra.mxu0 0.0
        %2685 = vmatprep.subr.mxu0 0.0
        %2686 = vmatpush1.msra.mxu0 0.0
        %2687 = vmatprep.mubr.f32.mxu0 0.0
        %2688 = vmatmul.mubr.f32.gmra.mrb[0].mxu0 %v2621
        %v2689 = vpop.f32.mrb[0].mxu0
        %v2690 = vadd.f32 0.0, %v2689
        %v2691 = vpop.f32.mrb[0].mxu0
        %2692 = vdwg.mxu0
        %v2694 = vsel %vm1975, %v2471, 0
        %2696 = vmatprep.subr.mxu0 0.0
        %2697 = vmatpush1.msra.mxu0 %v1055
        %2698 = vmatprep.subr.mxu0 0.0
        %2699 = vmatpush1.msra.mxu0 0.0
        %2700 = vmatprep.subr.mxu0 0.0
        %2701 = vmatpush1.msra.mxu0 0.0
        %2702 = vmatprep.subr.mxu0 0.0
        %2703 = vmatpush1.msra.mxu0 0.0
        %2704 = vmatprep.subr.mxu0 0.0
        %2705 = vmatpush1.msra.mxu0 0.0
        %2706 = vmatprep.subr.mxu0 0.0
        %2707 = vmatpush1.msra.mxu0 0.0
        %2708 = vmatprep.subr.mxu0 0.0
        %2709 = vmatpush1.msra.mxu0 0.0
        %2710 = vmatprep.subr.mxu0 0.0
        %2711 = vmatpush1.msra.mxu0 0.0
        %2712 = vmatprep.subr.mxu0 0.0
        %2713 = vmatpush1.msra.mxu0 0.0
        %2714 = vmatprep.subr.mxu0 0.0
        %2715 = vmatpush1.msra.mxu0 0.0
        %2716 = vmatprep.subr.mxu0 0.0
        %2717 = vmatpush1.msra.mxu0 0.0
        %2718 = vmatprep.subr.mxu0 0.0
        %2719 = vmatpush1.msra.mxu0 0.0
        %2720 = vmatprep.subr.mxu0 0.0
        %2721 = vmatpush1.msra.mxu0 0.0
        %2722 = vmatprep.subr.mxu0 0.0
        %2723 = vmatpush1.msra.mxu0 0.0
        %2724 = vmatprep.subr.mxu0 0.0
        %2725 = vmatpush1.msra.mxu0 0.0
        %2726 = vmatprep.subr.mxu0 0.0
        %2727 = vmatpush1.msra.mxu0 0.0
        %2728 = vmatprep.subr.mxu0 0.0
        %2729 = vmatpush1.msra.mxu0 0.0
        %2730 = vmatprep.subr.mxu0 0.0
        %2731 = vmatpush1.msra.mxu0 0.0
        %2732 = vmatprep.subr.mxu0 0.0
        %2733 = vmatpush1.msra.mxu0 0.0
        %2734 = vmatprep.subr.mxu0 0.0
        %2735 = vmatpush1.msra.mxu0 0.0
        %2736 = vmatprep.subr.mxu0 0.0
        %2737 = vmatpush1.msra.mxu0 0.0
        %2738 = vmatprep.subr.mxu0 0.0
        %2739 = vmatpush1.msra.mxu0 0.0
        %2740 = vmatprep.subr.mxu0 0.0
        %2741 = vmatpush1.msra.mxu0 0.0
        %2742 = vmatprep.subr.mxu0 0.0
        %2743 = vmatpush1.msra.mxu0 0.0
        %2744 = vmatprep.subr.mxu0 0.0
        %2745 = vmatpush1.msra.mxu0 0.0
        %2746 = vmatprep.subr.mxu0 0.0
        %2747 = vmatpush1.msra.mxu0 0.0
        %2748 = vmatprep.subr.mxu0 0.0
        %2749 = vmatpush1.msra.mxu0 0.0
        %2750 = vmatprep.subr.mxu0 0.0
        %2751 = vmatpush1.msra.mxu0 0.0
        %2752 = vmatprep.subr.mxu0 0.0
        %2753 = vmatpush1.msra.mxu0 0.0
        %2754 = vmatprep.subr.mxu0 0.0
        %2755 = vmatpush1.msra.mxu0 0.0
        %2756 = vmatprep.subr.mxu0 0.0
        %2757 = vmatpush1.msra.mxu0 0.0
        %2758 = vmatprep.subr.mxu0 0.0
        %2759 = vmatpush1.msra.mxu0 0.0
        %2760 = vmatprep.mubr.f32.mxu0 0.0
        %2761 = vmatmul.mubr.f32.gmra.mrb[0].mxu0 %v2694
        %v2762 = vpop.f32.mrb[0].mxu0
        %v2763 = vadd.f32 0.0, %v2762
        %v2764 = vpop.f32.mrb[0].mxu0
        %2765 = vdwg.mxu0
        %v2767 = vsel %vm1975, %v2544, 0
        %2769 = vmatprep.subr.mxu0 0.0
        %2770 = vmatpush1.msra.mxu0 %v1056
        %2771 = vmatprep.subr.mxu0 0.0
        %2772 = vmatpush1.msra.mxu0 0.0
        %2773 = vmatprep.subr.mxu0 0.0
        %2774 = vmatpush1.msra.mxu0 0.0
        %2775 = vmatprep.subr.mxu0 0.0
        %2776 = vmatpush1.msra.mxu0 0.0
        %2777 = vmatprep.subr.mxu0 0.0
        %2778 = vmatpush1.msra.mxu0 0.0
        %2779 = vmatprep.subr.mxu0 0.0
        %2780 = vmatpush1.msra.mxu0 0.0
        %2781 = vmatprep.subr.mxu0 0.0
        %2782 = vmatpush1.msra.mxu0 0.0
        %2783 = vmatprep.subr.mxu0 0.0
        %2784 = vmatpush1.msra.mxu0 0.0
        %2785 = vmatprep.subr.mxu0 0.0
        %2786 = vmatpush1.msra.mxu0 0.0
        %2787 = vmatprep.subr.mxu0 0.0
        %2788 = vmatpush1.msra.mxu0 0.0
        %2789 = vmatprep.subr.mxu0 0.0
        %2790 = vmatpush1.msra.mxu0 0.0
        %2791 = vmatprep.subr.mxu0 0.0
        %2792 = vmatpush1.msra.mxu0 0.0
        %2793 = vmatprep.subr.mxu0 0.0
        %2794 = vmatpush1.msra.mxu0 0.0
        %2795 = vmatprep.subr.mxu0 0.0
        %2796 = vmatpush1.msra.mxu0 0.0
        %2797 = vmatprep.subr.mxu0 0.0
        %2798 = vmatpush1.msra.mxu0 0.0
        %2799 = vmatprep.subr.mxu0 0.0
        %2800 = vmatpush1.msra.mxu0 0.0
        %2801 = vmatprep.subr.mxu0 0.0
        %2802 = vmatpush1.msra.mxu0 0.0
        %2803 = vmatprep.subr.mxu0 0.0
        %2804 = vmatpush1.msra.mxu0 0.0
        %2805 = vmatprep.subr.mxu0 0.0
        %2806 = vmatpush1.msra.mxu0 0.0
        %2807 = vmatprep.subr.mxu0 0.0
        %2808 = vmatpush1.msra.mxu0 0.0
        %2809 = vmatprep.subr.mxu0 0.0
        %2810 = vmatpush1.msra.mxu0 0.0
        %2811 = vmatprep.subr.mxu0 0.0
        %2812 = vmatpush1.msra.mxu0 0.0
        %2813 = vmatprep.subr.mxu0 0.0
        %2814 = vmatpush1.msra.mxu0 0.0
        %2815 = vmatprep.subr.mxu0 0.0
        %2816 = vmatpush1.msra.mxu0 0.0
        %2817 = vmatprep.subr.mxu0 0.0
        %2818 = vmatpush1.msra.mxu0 0.0
        %2819 = vmatprep.subr.mxu0 0.0
        %2820 = vmatpush1.msra.mxu0 0.0
        %2821 = vmatprep.subr.mxu0 0.0
        %2822 = vmatpush1.msra.mxu0 0.0
        %2823 = vmatprep.subr.mxu0 0.0
        %2824 = vmatpush1.msra.mxu0 0.0
        %2825 = vmatprep.subr.mxu0 0.0
        %2826 = vmatpush1.msra.mxu0 0.0
        %2827 = vmatprep.subr.mxu0 0.0
        %2828 = vmatpush1.msra.mxu0 0.0
        %2829 = vmatprep.subr.mxu0 0.0
        %2830 = vmatpush1.msra.mxu0 0.0
        %2831 = vmatprep.subr.mxu0 0.0
        %2832 = vmatpush1.msra.mxu0 0.0
        %2833 = vmatprep.mubr.f32.mxu0 0.0
        %2834 = vmatmul.mubr.f32.gmra.mrb[0].mxu0 %v2767
        %v2835 = vpop.f32.mrb[0].mxu0
        %v2836 = vadd.f32 0.0, %v2835
        %v2837 = vpop.f32.mrb[0].mxu0
        %2838 = vdwg.mxu0
        %v2840 = vsel %vm1975, %v2617, 0
        %2842 = vmatprep.subr.mxu0 0.0
        %2843 = vmatpush1.msra.mxu0 %v1057
        %2844 = vmatprep.subr.mxu0 0.0
        %2845 = vmatpush1.msra.mxu0 0.0
        %2846 = vmatprep.subr.mxu0 0.0
        %2847 = vmatpush1.msra.mxu0 0.0
        %2848 = vmatprep.subr.mxu0 0.0
        %2849 = vmatpush1.msra.mxu0 0.0
        %2850 = vmatprep.subr.mxu0 0.0
        %2851 = vmatpush1.msra.mxu0 0.0
        %2852 = vmatprep.subr.mxu0 0.0
        %2853 = vmatpush1.msra.mxu0 0.0
        %2854 = vmatprep.subr.mxu0 0.0
        %2855 = vmatpush1.msra.mxu0 0.0
        %2856 = vmatprep.subr.mxu0 0.0
        %2857 = vmatpush1.msra.mxu0 0.0
        %2858 = vmatprep.subr.mxu0 0.0
        %2859 = vmatpush1.msra.mxu0 0.0
        %2860 = vmatprep.subr.mxu0 0.0
        %2861 = vmatpush1.msra.mxu0 0.0
        %2862 = vmatprep.subr.mxu0 0.0
        %2863 = vmatpush1.msra.mxu0 0.0
        %2864 = vmatprep.subr.mxu0 0.0
        %2865 = vmatpush1.msra.mxu0 0.0
        %2866 = vmatprep.subr.mxu0 0.0
        %2867 = vmatpush1.msra.mxu0 0.0
        %2868 = vmatprep.subr.mxu0 0.0
        %2869 = vmatpush1.msra.mxu0 0.0
        %2870 = vmatprep.subr.mxu0 0.0
        %2871 = vmatpush1.msra.mxu0 0.0
        %2872 = vmatprep.subr.mxu0 0.0
        %2873 = vmatpush1.msra.mxu0 0.0
        %2874 = vmatprep.subr.mxu0 0.0
        %2875 = vmatpush1.msra.mxu0 0.0
        %2876 = vmatprep.subr.mxu0 0.0
        %2877 = vmatpush1.msra.mxu0 0.0
        %2878 = vmatprep.subr.mxu0 0.0
        %2879 = vmatpush1.msra.mxu0 0.0
        %2880 = vmatprep.subr.mxu0 0.0
        %2881 = vmatpush1.msra.mxu0 0.0
        %2882 = vmatprep.subr.mxu0 0.0
        %2883 = vmatpush1.msra.mxu0 0.0
        %2884 = vmatprep.subr.mxu0 0.0
        %2885 = vmatpush1.msra.mxu0 0.0
        %2886 = vmatprep.subr.mxu0 0.0
        %2887 = vmatpush1.msra.mxu0 0.0
        %2888 = vmatprep.subr.mxu0 0.0
        %2889 = vmatpush1.msra.mxu0 0.0
        %2890 = vmatprep.subr.mxu0 0.0
        %2891 = vmatpush1.msra.mxu0 0.0
        %2892 = vmatprep.subr.mxu0 0.0
        %2893 = vmatpush1.msra.mxu0 0.0
        %2894 = vmatprep.subr.mxu0 0.0
        %2895 = vmatpush1.msra.mxu0 0.0
        %2896 = vmatprep.subr.mxu0 0.0
        %2897 = vmatpush1.msra.mxu0 0.0
        %2898 = vmatprep.subr.mxu0 0.0
        %2899 = vmatpush1.msra.mxu0 0.0
        %2900 = vmatprep.subr.mxu0 0.0
        %2901 = vmatpush1.msra.mxu0 0.0
        %2902 = vmatprep.subr.mxu0 0.0
        %2903 = vmatpush1.msra.mxu0 0.0
        %2904 = vmatprep.subr.mxu0 0.0
        %2905 = vmatpush1.msra.mxu0 0.0
        %2906 = vmatprep.mubr.f32.mxu0 0.0
        %2907 = vmatmul.mubr.f32.gmra.mrb[0].mxu0 %v2840
        %v2908 = vpop.f32.mrb[0].mxu0
        %v2909 = vadd.f32 0.0, %v2908
        %v2910 = vpop.f32.mrb[0].mxu0
        %2911 = vdwg.mxu0
        %v2912 = vsel %vm1083, %v2690, 0.0
        %v2913 = vsel %vm1083, %v2763, 0.0
        %v2914 = vadd.f32 %v2912, %v2913
        %v2915 = vsel %vm1083, %v2836, 0.0
        %v2916 = vadd.f32 %v2914, %v2915
        %v2917 = vsel %vm1083, %v2909, 0.0
        %v2918 = vadd.f32 %v2916, %v2917
        %v2920 = vlaneseq
        %v2921 = vshrl.u32 %v2920, 7
        %v2922 = vsub.s32 0, %v2921
        %v2923 = vrot.slane %v1058, %v2922
        %v2925 = vadd.f32 %v2918, %v2923
        %v2926 = vadd.f32 %v993, %v2925
        %v2927 = vld [vmem:[%s960] sm:$0x1]
        %v2928 = vld [vmem:[%s963] sm:$0x1]
        %v2929 = vsel %vm1083, %v2926, 0.0
        %2930 = vadd.xlane.f32.xlu0 %v2929
        %v2931 = vpop.xlane.xlu0 %2930
        %v2932 = vrcp.pop 32.0
        %v2933 = vmul.f32 %v2931, %v2932
        %v2934 = vsub.f32 %v2926, %v2933
        %v2935 = vmul.f32 %v2934, %v2934
        %v2936 = vsel %vm1083, %v2935, 0.0
        %2937 = vadd.xlane.f32.xlu0 %v2936
        %v2938 = vpop.xlane.xlu0 %2937
        %v2939 = vmul.f32 %v2938, %v2932
        %v2940 = vadd.f32 %v2939, 1e-05
        %v2941 = vrsqrt.pop %v2940
        %v2942 = vmul.f32 %v2934, %v2941
        %v2944 = vlaneseq
        %v2945 = vshrl.u32 %v2944, 7
        %v2946 = vsub.s32 0, %v2945
        %v2947 = vrot.slane %v2927, %v2946
        %v2949 = vmul.f32 %v2942, %v2947
        %v2951 = vlaneseq
        %v2952 = vshrl.u32 %v2951, 7
        %v2953 = vsub.s32 0, %v2952
        %v2954 = vrot.slane %v2928, %v2953
        %v2956 = vadd.f32 %v2949, %v2954
        %v2957 = vld [vmem:[%s968] sm:$0xff]
        %v2958 = vld [vmem:[%s968 + $0x8] sm:$0xff]
        %v2959 = vld [vmem:[%s968 + $0x10] sm:$0xff]
        %v2960 = vld [vmem:[%s968 + $0x18] sm:$0xff]
        %v2961 = vld [vmem:[%s971] sm:$0x1]
        %v2963 = vlaneseq
        %v2964 = vshrl.u32 %v2963, 7
        %v2965 = vsub.s32 0, %v2964
        %v2966 = vrot.slane %v2961, %v2965
        %v2969 = vsel %vm1083, %v2956, 0
        %2971 = vmatprep.subr.mxu0 0.0
        %2972 = vmatpush1.msra.mxu0 %v2957
        %2973 = vmatprep.subr.mxu0 0.0
        %2974 = vmatpush1.msra.mxu0 %v2958
        %2975 = vmatprep.subr.mxu0 0.0
        %2976 = vmatpush1.msra.mxu0 %v2959
        %2977 = vmatprep.subr.mxu0 0.0
        %2978 = vmatpush1.msra.mxu0 %v2960
        %2979 = vmatprep.subr.mxu0 0.0
        %2980 = vmatpush1.msra.mxu0 0.0
        %2981 = vmatprep.subr.mxu0 0.0
        %2982 = vmatpush1.msra.mxu0 0.0
        %2983 = vmatprep.subr.mxu0 0.0
        %2984 = vmatpush1.msra.mxu0 0.0
        %2985 = vmatprep.subr.mxu0 0.0
        %2986 = vmatpush1.msra.mxu0 0.0
        %2987 = vmatprep.subr.mxu0 0.0
        %2988 = vmatpush1.msra.mxu0 0.0
        %2989 = vmatprep.subr.mxu0 0.0
        %2990 = vmatpush1.msra.mxu0 0.0
        %2991 = vmatprep.subr.mxu0 0.0
        %2992 = vmatpush1.msra.mxu0 0.0
        %2993 = vmatprep.subr.mxu0 0.0
        %2994 = vmatpush1.msra.mxu0 0.0
        %2995 = vmatprep.subr.mxu0 0.0
        %2996 = vmatpush1.msra.mxu0 0.0
        %2997 = vmatprep.subr.mxu0 0.0
        %2998 = vmatpush1.msra.mxu0 0.0
        %2999 = vmatprep.subr.mxu0 0.0
        %3000 = vmatpush1.msra.mxu0 0.0
        %3001 = vmatprep.subr.mxu0 0.0
        %3002 = vmatpush1.msra.mxu0 0.0
        %3003 = vmatprep.subr.mxu0 0.0
        %3004 = vmatpush1.msra.mxu0 0.0
        %3005 = vmatprep.subr.mxu0 0.0
        %3006 = vmatpush1.msra.mxu0 0.0
        %3007 = vmatprep.subr.mxu0 0.0
        %3008 = vmatpush1.msra.mxu0 0.0
        %3009 = vmatprep.subr.mxu0 0.0
        %3010 = vmatpush1.msra.mxu0 0.0
        %3011 = vmatprep.subr.mxu0 0.0
        %3012 = vmatpush1.msra.mxu0 0.0
        %3013 = vmatprep.subr.mxu0 0.0
        %3014 = vmatpush1.msra.mxu0 0.0
        %3015 = vmatprep.subr.mxu0 0.0
        %3016 = vmatpush1.msra.mxu0 0.0
        %3017 = vmatprep.subr.mxu0 0.0
        %3018 = vmatpush1.msra.mxu0 0.0
        %3019 = vmatprep.subr.mxu0 0.0
        %3020 = vmatpush1.msra.mxu0 0.0
        %3021 = vmatprep.subr.mxu0 0.0
        %3022 = vmatpush1.msra.mxu0 0.0
        %3023 = vmatprep.subr.mxu0 0.0
        %3024 = vmatpush1.msra.mxu0 0.0
        %3025 = vmatprep.subr.mxu0 0.0
        %3026 = vmatpush1.msra.mxu0 0.0
        %3027 = vmatprep.subr.mxu0 0.0
        %3028 = vmatpush1.msra.mxu0 0.0
        %3029 = vmatprep.subr.mxu0 0.0
        %3030 = vmatpush1.msra.mxu0 0.0
        %3031 = vmatprep.subr.mxu0 0.0
        %3032 = vmatpush1.msra.mxu0 0.0
        %3033 = vmatprep.subr.mxu0 0.0
        %3034 = vmatpush1.msra.mxu0 0.0
        %3035 = vmatprep.mubr.f32.mxu0 0.0
        %3036 = vmatmul.mubr.f32.gmra.mrb[0].mxu0 %v2969
        %v3037 = vpop.f32.mrb[0].mxu0
        %v3038 = vadd.f32 %v2966, %v3037
        %v3039 = vpop.f32.mrb[0].mxu0
        %3040 = vdwg.mxu0
        %v3041 = vmax.f32 %v3038, 0.0
        %v3042 = vld [vmem:[%s976] sm:$0xff]
        %v3043 = vld [vmem:[%s976 + $0x8] sm:$0xff]
        %v3044 = vld [vmem:[%s976 + $0x10] sm:$0xff]
        %v3045 = vld [vmem:[%s976 + $0x18] sm:$0xff]
        %v3046 = vld [vmem:[%s976 + $0x20] sm:$0xff]
        %v3047 = vld [vmem:[%s976 + $0x28] sm:$0xff]
        %v3048 = vld [vmem:[%s976 + $0x30] sm:$0xff]
        %v3049 = vld [vmem:[%s976 + $0x38] sm:$0xff]
        %v3050 = vld [vmem:[%s979] sm:$0x1]
        %v3052 = vlaneseq
        %v3053 = vshrl.u32 %v3052, 7
        %v3054 = vsub.s32 0, %v3053
        %v3055 = vrot.slane %v3050, %v3054
        %vm3057 = vcmask 523264
        %v3059 = vsel %vm3057, %v3041, 0
        %3061 = vmatprep.subr.mxu0 0.0
        %3062 = vmatpush1.msra.mxu0 %v3042
        %3063 = vmatprep.subr.mxu0 0.0
        %3064 = vmatpush1.msra.mxu0 %v3043
        %3065 = vmatprep.subr.mxu0 0.0
        %3066 = vmatpush1.msra.mxu0 %v3044
        %3067 = vmatprep.subr.mxu0 0.0
        %3068 = vmatpush1.msra.mxu0 %v3045
        %3069 = vmatprep.subr.mxu0 0.0
        %3070 = vmatpush1.msra.mxu0 %v3046
        %3071 = vmatprep.subr.mxu0 0.0
        %3072 = vmatpush1.msra.mxu0 %v3047
        %3073 = vmatprep.subr.mxu0 0.0
        %3074 = vmatpush1.msra.mxu0 %v3048
        %3075 = vmatprep.subr.mxu0 0.0
        %3076 = vmatpush1.msra.mxu0 %v3049
        %3077 = vmatprep.subr.mxu0 0.0
        %3078 = vmatpush1.msra.mxu0 0.0
        %3079 = vmatprep.subr.mxu0 0.0
        %3080 = vmatpush1.msra.mxu0 0.0
        %3081 = vmatprep.subr.mxu0 0.0
        %3082 = vmatpush1.msra.mxu0 0.0
        %3083 = vmatprep.subr.mxu0 0.0
        %3084 = vmatpush1.msra.mxu0 0.0
        %3085 = vmatprep.subr.mxu0 0.0
        %3086 = vmatpush1.msra.mxu0 0.0
        %3087 = vmatprep.subr.mxu0 0.0
        %3088 = vmatpush1.msra.mxu0 0.0
        %3089 = vmatprep.subr.mxu0 0.0
        %3090 = vmatpush1.msra.mxu0 0.0
        %3091 = vmatprep.subr.mxu0 0.0
        %3092 = vmatpush1.msra.mxu0 0.0
        %3093 = vmatprep.subr.mxu0 0.0
        %3094 = vmatpush1.msra.mxu0 0.0
        %3095 = vmatprep.subr.mxu0 0.0
        %3096 = vmatpush1.msra.mxu0 0.0
        %3097 = vmatprep.subr.mxu0 0.0
        %3098 = vmatpush1.msra.mxu0 0.0
        %3099 = vmatprep.subr.mxu0 0.0
        %3100 = vmatpush1.msra.mxu0 0.0
        %3101 = vmatprep.subr.mxu0 0.0
        %3102 = vmatpush1.msra.mxu0 0.0
        %3103 = vmatprep.subr.mxu0 0.0
        %3104 = vmatpush1.msra.mxu0 0.0
        %3105 = vmatprep.subr.mxu0 0.0
        %3106 = vmatpush1.msra.mxu0 0.0
        %3107 = vmatprep.subr.mxu0 0.0
        %3108 = vmatpush1.msra.mxu0 0.0
        %3109 = vmatprep.subr.mxu0 0.0
        %3110 = vmatpush1.msra.mxu0 0.0
        %3111 = vmatprep.subr.mxu0 0.0
        %3112 = vmatpush1.msra.mxu0 0.0
        %3113 = vmatprep.subr.mxu0 0.0
        %3114 = vmatpush1.msra.mxu0 0.0
        %3115 = vmatprep.subr.mxu0 0.0
        %3116 = vmatpush1.msra.mxu0 0.0
        %3117 = vmatprep.subr.mxu0 0.0
        %3118 = vmatpush1.msra.mxu0 0.0
        %3119 = vmatprep.subr.mxu0 0.0
        %3120 = vmatpush1.msra.mxu0 0.0
        %3121 = vmatprep.subr.mxu0 0.0
        %3122 = vmatpush1.msra.mxu0 0.0
        %3123 = vmatprep.subr.mxu0 0.0
        %3124 = vmatpush1.msra.mxu0 0.0
        %3125 = vmatprep.mubr.f32.mxu0 0.0
        %3126 = vmatmul.mubr.f32.gmra.mrb[0].mxu0 %v3059
        %v3127 = vpop.f32.mrb[0].mxu0
        %v3128 = vadd.f32 %v3055, %v3127
        %v3129 = vpop.f32.mrb[0].mxu0
        %3130 = vdwg.mxu0
        %v3131 = vadd.f32 %v2956, %v3128
        %v3132 = vld [vmem:[%s982] sm:$0x1]
        %v3133 = vld [vmem:[%s985] sm:$0x1]
        %v3134 = vsel %vm1083, %v3131, 0.0
        %3135 = vadd.xlane.f32.xlu0 %v3134
        %v3136 = vpop.xlane.xlu0 %3135
        %v3137 = vmul.f32 %v3136, %v2932
        %v3138 = vsub.f32 %v3131, %v3137
        %v3139 = vmul.f32 %v3138, %v3138
        %v3140 = vsel %vm1083, %v3139, 0.0
        %3141 = vadd.xlane.f32.xlu0 %v3140
        %v3142 = vpop.xlane.xlu0 %3141
        %v3143 = vmul.f32 %v3142, %v2932
        %v3144 = vadd.f32 %v3143, 1e-05
        %v3145 = vrsqrt.pop %v3144
        %v3146 = vmul.f32 %v3138, %v3145
        %v3148 = vlaneseq
        %v3149 = vshrl.u32 %v3148, 7
        %v3150 = vsub.s32 0, %v3149
        %v3151 = vrot.slane %v3132, %v3150
        %v3153 = vmul.f32 %v3146, %v3151
        %v3155 = vlaneseq
        %v3156 = vshrl.u32 %v3155, 7
        %v3157 = vsub.s32 0, %v3156
        %v3158 = vrot.slane %v3133, %v3157
        %v3160 = vadd.f32 %v3153, %v3158
        %3161 = vst.msk [vmem:[#allocation2] sm:$0xff] %vm1083, %v3160
        %p3162 = scmp.eq.s32.totalorder %s42, 1
        // Predicated region
        $region117: #{tpu_custom_call.1} parent=111 // pred_check
          %p3163 = pneg %p3162
        $region118: #{tpu_custom_call.1} parent=111 // pred_check_branch
          %3165 = sbr.rel (%p3163) target = $region120
        $region119: #{tpu_custom_call.1} parent=111 // pred_region
          %v3166 = vsel %vm1083, %v3160, -inf
          %v3167 = vrot.slane %v3166, 4
          %v3168 = vmax.f32 %v3166, %v3167
          %v3169 = vrot.slane %v3168, 2
          %v3170 = vmax.f32 %v3168, %v3169
          %v3171 = vrot.slane %v3170, 1
          %v3172 = vmax.f32 %v3170, %v3171
          %v3173 = vsel %vm1083, %v3160, inf
          %v3174 = vrot.slane %v3173, 4
          %v3175 = vmin.f32 %v3173, %v3174
          %v3176 = vrot.slane %v3175, 2
          %v3177 = vmin.f32 %v3175, %v3176
          %v3178 = vrot.slane %v3177, 1
          %v3179 = vmin.f32 %v3177, %v3178
          %v3180 = vsel %vm1083, %v3160, 0.0
          %v3181 = vrot.slane %v3180, 4
          %v3182 = vadd.f32 %v3180, %v3181
          %v3183 = vrot.slane %v3182, 2
          %v3184 = vadd.f32 %v3182, %v3183
          %v3185 = vrot.slane %v3184, 1
          %v3186 = vadd.f32 %v3184, %v3185
          %v3187 = vrcp.pop 8.0
          %v3188 = vmul.f32 %v3186, %v3187
          %v3189 = vld [vmem:[%s17] sm:$0xff]
          %v3190 = vld [vmem:[%s17 + $0x8] sm:$0xff]
          %v3191 = vld [vmem:[%s17 + $0x10] sm:$0xff]
          %v3192 = vld [vmem:[%s17 + $0x18] sm:$0xff]
          %v3193 = vld [vmem:[%s18] sm:$0xff]
          %v3194 = vld [vmem:[%s18 + $0x8] sm:$0xff]
          %v3195 = vld [vmem:[%s18 + $0x10] sm:$0xff]
          %v3196 = vld [vmem:[%s18 + $0x18] sm:$0xff]
          %v3198 = vsel %vm1083, %v3179, 0
          %3200 = vmatprep.subr.mxu0 0.0
          %3201 = vmatpush1.msra.mxu0 %v3193
          %3202 = vmatprep.subr.mxu0 0.0
          %3203 = vmatpush1.msra.mxu0 %v3194
          %3204 = vmatprep.subr.mxu0 0.0
          %3205 = vmatpush1.msra.mxu0 %v3195
          %3206 = vmatprep.subr.mxu0 0.0
          %3207 = vmatpush1.msra.mxu0 %v3196
          %3208 = vmatprep.subr.mxu0 0.0
          %3209 = vmatpush1.msra.mxu0 0.0
          %3210 = vmatprep.subr.mxu0 0.0
          %3211 = vmatpush1.msra.mxu0 0.0
          %3212 = vmatprep.subr.mxu0 0.0
          %3213 = vmatpush1.msra.mxu0 0.0
          %3214 = vmatprep.subr.mxu0 0.0
          %3215 = vmatpush1.msra.mxu0 0.0
          %3216 = vmatprep.subr.mxu0 0.0
          %3217 = vmatpush1.msra.mxu0 0.0
          %3218 = vmatprep.subr.mxu0 0.0
          %3219 = vmatpush1.msra.mxu0 0.0
          %3220 = vmatprep.subr.mxu0 0.0
          %3221 = vmatpush1.msra.mxu0 0.0
          %3222 = vmatprep.subr.mxu0 0.0
          %3223 = vmatpush1.msra.mxu0 0.0
          %3224 = vmatprep.subr.mxu0 0.0
          %3225 = vmatpush1.msra.mxu0 0.0
          %3226 = vmatprep.subr.mxu0 0.0
          %3227 = vmatpush1.msra.mxu0 0.0
          %3228 = vmatprep.subr.mxu0 0.0
          %3229 = vmatpush1.msra.mxu0 0.0
          %3230 = vmatprep.subr.mxu0 0.0
          %3231 = vmatpush1.msra.mxu0 0.0
          %3232 = vmatprep.subr.mxu0 0.0
          %3233 = vmatpush1.msra.mxu0 0.0
          %3234 = vmatprep.subr.mxu0 0.0
          %3235 = vmatpush1.msra.mxu0 0.0
          %3236 = vmatprep.subr.mxu0 0.0
          %3237 = vmatpush1.msra.mxu0 0.0
          %3238 = vmatprep.subr.mxu0 0.0
          %3239 = vmatpush1.msra.mxu0 0.0
          %3240 = vmatprep.subr.mxu0 0.0
          %3241 = vmatpush1.msra.mxu0 0.0
          %3242 = vmatprep.subr.mxu0 0.0
          %3243 = vmatpush1.msra.mxu0 0.0
          %3244 = vmatprep.subr.mxu0 0.0
          %3245 = vmatpush1.msra.mxu0 0.0
          %3246 = vmatprep.subr.mxu0 0.0
          %3247 = vmatpush1.msra.mxu0 0.0
          %3248 = vmatprep.subr.mxu0 0.0
          %3249 = vmatpush1.msra.mxu0 0.0
          %3250 = vmatprep.subr.mxu0 0.0
          %3251 = vmatpush1.msra.mxu0 0.0
          %3252 = vmatprep.subr.mxu0 0.0
          %3253 = vmatpush1.msra.mxu0 0.0
          %3254 = vmatprep.subr.mxu0 0.0
          %3255 = vmatpush1.msra.mxu0 0.0
          %3256 = vmatprep.subr.mxu0 0.0
          %3257 = vmatpush1.msra.mxu0 0.0
          %3258 = vmatprep.subr.mxu0 0.0
          %3259 = vmatpush1.msra.mxu0 0.0
          %3260 = vmatprep.subr.mxu0 0.0
          %3261 = vmatpush1.msra.mxu0 0.0
          %3262 = vmatprep.subr.mxu0 0.0
          %3263 = vmatpush1.msra.mxu0 0.0
          %3264 = vmatprep.mubr.f32.mxu0 0.0
          %3265 = vmatmul.mubr.f32.gmra.mrb[0].mxu0 %v3198
          %v3266 = vpop.f32.mrb[0].mxu0
          %v3267 = vadd.f32 0.0, %v3266
          %v3268 = vpop.f32.mrb[0].mxu0
          %3269 = vdwg.mxu0
          %v3271 = vsel %vm1083, %v3172, 0
          %3273 = vmatprep.subr.mxu0 0.0
          %3274 = vmatpush1.msra.mxu0 %v3189
          %3275 = vmatprep.subr.mxu0 0.0
          %3276 = vmatpush1.msra.mxu0 %v3190
          %3277 = vmatprep.subr.mxu0 0.0
          %3278 = vmatpush1.msra.mxu0 %v3191
          %3279 = vmatprep.subr.mxu0 0.0
          %3280 = vmatpush1.msra.mxu0 %v3192
          %3281 = vmatprep.subr.mxu0 0.0
          %3282 = vmatpush1.msra.mxu0 0.0
          %3283 = vmatprep.subr.mxu0 0.0
          %3284 = vmatpush1.msra.mxu0 0.0
          %3285 = vmatprep.subr.mxu0 0.0
          %3286 = vmatpush1.msra.mxu0 0.0
          %3287 = vmatprep.subr.mxu0 0.0
          %3288 = vmatpush1.msra.mxu0 0.0
          %3289 = vmatprep.subr.mxu0 0.0
          %3290 = vmatpush1.msra.mxu0 0.0
          %3291 = vmatprep.subr.mxu0 0.0
          %3292 = vmatpush1.msra.mxu0 0.0
          %3293 = vmatprep.subr.mxu0 0.0
          %3294 = vmatpush1.msra.mxu0 0.0
          %3295 = vmatprep.subr.mxu0 0.0
          %3296 = vmatpush1.msra.mxu0 0.0
          %3297 = vmatprep.subr.mxu0 0.0
          %3298 = vmatpush1.msra.mxu0 0.0
          %3299 = vmatprep.subr.mxu0 0.0
          %3300 = vmatpush1.msra.mxu0 0.0
          %3301 = vmatprep.subr.mxu0 0.0
          %3302 = vmatpush1.msra.mxu0 0.0
          %3303 = vmatprep.subr.mxu0 0.0
          %3304 = vmatpush1.msra.mxu0 0.0
          %3305 = vmatprep.subr.mxu0 0.0
          %3306 = vmatpush1.msra.mxu0 0.0
          %3307 = vmatprep.subr.mxu0 0.0
          %3308 = vmatpush1.msra.mxu0 0.0
          %3309 = vmatprep.subr.mxu0 0.0
          %3310 = vmatpush1.msra.mxu0 0.0
          %3311 = vmatprep.subr.mxu0 0.0
          %3312 = vmatpush1.msra.mxu0 0.0
          %3313 = vmatprep.subr.mxu0 0.0
          %3314 = vmatpush1.msra.mxu0 0.0
          %3315 = vmatprep.subr.mxu0 0.0
          %3316 = vmatpush1.msra.mxu0 0.0
          %3317 = vmatprep.subr.mxu0 0.0
          %3318 = vmatpush1.msra.mxu0 0.0
          %3319 = vmatprep.subr.mxu0 0.0
          %3320 = vmatpush1.msra.mxu0 0.0
          %3321 = vmatprep.subr.mxu0 0.0
          %3322 = vmatpush1.msra.mxu0 0.0
          %3323 = vmatprep.subr.mxu0 0.0
          %3324 = vmatpush1.msra.mxu0 0.0
          %3325 = vmatprep.subr.mxu0 0.0
          %3326 = vmatpush1.msra.mxu0 0.0
          %3327 = vmatprep.subr.mxu0 0.0
          %3328 = vmatpush1.msra.mxu0 0.0
          %3329 = vmatprep.subr.mxu0 0.0
          %3330 = vmatpush1.msra.mxu0 0.0
          %3331 = vmatprep.subr.mxu0 0.0
          %3332 = vmatpush1.msra.mxu0 0.0
          %3333 = vmatprep.subr.mxu0 0.0
          %3334 = vmatpush1.msra.mxu0 0.0
          %3335 = vmatprep.subr.mxu0 0.0
          %3336 = vmatpush1.msra.mxu0 0.0
          %3337 = vmatprep.mubr.f32.mxu0 0.0
          %3338 = vmatmul.mubr.f32.gmra.mrb[0].mxu0 %v3271
          %v3339 = vpop.f32.mrb[0].mxu0
          %v3340 = vadd.f32 %v3267, %v3339
          %v3341 = vpop.f32.mrb[0].mxu0
          %3342 = vdwg.mxu0
          %v3343 = vld [vmem:[%s19] sm:$0xff]
          %v3344 = vld [vmem:[%s19 + $0x8] sm:$0xff]
          %v3345 = vld [vmem:[%s19 + $0x10] sm:$0xff]
          %v3346 = vld [vmem:[%s19 + $0x18] sm:$0xff]
          %v3348 = vsel %vm1083, %v3188, 0
          %3350 = vmatprep.subr.mxu0 0.0
          %3351 = vmatpush1.msra.mxu0 %v3343
          %3352 = vmatprep.subr.mxu0 0.0
          %3353 = vmatpush1.msra.mxu0 %v3344
          %3354 = vmatprep.subr.mxu0 0.0
          %3355 = vmatpush1.msra.mxu0 %v3345
          %3356 = vmatprep.subr.mxu0 0.0
          %3357 = vmatpush1.msra.mxu0 %v3346
          %3358 = vmatprep.subr.mxu0 0.0
          %3359 = vmatpush1.msra.mxu0 0.0
          %3360 = vmatprep.subr.mxu0 0.0
          %3361 = vmatpush1.msra.mxu0 0.0
          %3362 = vmatprep.subr.mxu0 0.0
          %3363 = vmatpush1.msra.mxu0 0.0
          %3364 = vmatprep.subr.mxu0 0.0
          %3365 = vmatpush1.msra.mxu0 0.0
          %3366 = vmatprep.subr.mxu0 0.0
          %3367 = vmatpush1.msra.mxu0 0.0
          %3368 = vmatprep.subr.mxu0 0.0
          %3369 = vmatpush1.msra.mxu0 0.0
          %3370 = vmatprep.subr.mxu0 0.0
          %3371 = vmatpush1.msra.mxu0 0.0
          %3372 = vmatprep.subr.mxu0 0.0
          %3373 = vmatpush1.msra.mxu0 0.0
          %3374 = vmatprep.subr.mxu0 0.0
          %3375 = vmatpush1.msra.mxu0 0.0
          %3376 = vmatprep.subr.mxu0 0.0
          %3377 = vmatpush1.msra.mxu0 0.0
          %3378 = vmatprep.subr.mxu0 0.0
          %3379 = vmatpush1.msra.mxu0 0.0
          %3380 = vmatprep.subr.mxu0 0.0
          %3381 = vmatpush1.msra.mxu0 0.0
          %3382 = vmatprep.subr.mxu0 0.0
          %3383 = vmatpush1.msra.mxu0 0.0
          %3384 = vmatprep.subr.mxu0 0.0
          %3385 = vmatpush1.msra.mxu0 0.0
          %3386 = vmatprep.subr.mxu0 0.0
          %3387 = vmatpush1.msra.mxu0 0.0
          %3388 = vmatprep.subr.mxu0 0.0
          %3389 = vmatpush1.msra.mxu0 0.0
          %3390 = vmatprep.subr.mxu0 0.0
          %3391 = vmatpush1.msra.mxu0 0.0
          %3392 = vmatprep.subr.mxu0 0.0
          %3393 = vmatpush1.msra.mxu0 0.0
          %3394 = vmatprep.subr.mxu0 0.0
          %3395 = vmatpush1.msra.mxu0 0.0
          %3396 = vmatprep.subr.mxu0 0.0
          %3397 = vmatpush1.msra.mxu0 0.0
          %3398 = vmatprep.subr.mxu0 0.0
          %3399 = vmatpush1.msra.mxu0 0.0
          %3400 = vmatprep.subr.mxu0 0.0
          %3401 = vmatpush1.msra.mxu0 0.0
          %3402 = vmatprep.subr.mxu0 0.0
          %3403 = vmatpush1.msra.mxu0 0.0
          %3404 = vmatprep.subr.mxu0 0.0
          %3405 = vmatpush1.msra.mxu0 0.0
          %3406 = vmatprep.subr.mxu0 0.0
          %3407 = vmatpush1.msra.mxu0 0.0
          %3408 = vmatprep.subr.mxu0 0.0
          %3409 = vmatpush1.msra.mxu0 0.0
          %3410 = vmatprep.subr.mxu0 0.0
          %3411 = vmatpush1.msra.mxu0 0.0
          %3412 = vmatprep.subr.mxu0 0.0
          %3413 = vmatpush1.msra.mxu0 0.0
          %3414 = vmatprep.mubr.f32.mxu0 0.0
          %3415 = vmatmul.mubr.f32.gmra.mrb[0].mxu0 %v3348
          %v3416 = vpop.f32.mrb[0].mxu0
          %v3417 = vadd.f32 0.0, %v3416
          %v3418 = vpop.f32.mrb[0].mxu0
          %3419 = vdwg.mxu0
          %v3420 = vadd.f32 %v3340, %v3417
          %v3421 = vld [vmem:[%s20] sm:$0x1]
          %v3422 = vadd.f32 %v3420, %v3421
          %v3423 = vmax.f32 %v3422, 0.0
          %v3424 = vld [vmem:[%s21] sm:$0xff]
          %v3425 = vld [vmem:[%s21 + $0x8] sm:$0xff]
          %v3426 = vld [vmem:[%s21 + $0x10] sm:$0xff]
          %v3427 = vld [vmem:[%s21 + $0x18] sm:$0xff]
          %v3428 = vld [vmem:[%s22] sm:$0x1]
          %v3430 = vsel %vm1083, %v3423, 0
          %3432 = vmatprep.subr.mxu0 0.0
          %3433 = vmatpush1.msra.mxu0 %v3424
          %3434 = vmatprep.subr.mxu0 0.0
          %3435 = vmatpush1.msra.mxu0 %v3425
          %3436 = vmatprep.subr.mxu0 0.0
          %3437 = vmatpush1.msra.mxu0 %v3426
          %3438 = vmatprep.subr.mxu0 0.0
          %3439 = vmatpush1.msra.mxu0 %v3427
          %3440 = vmatprep.subr.mxu0 0.0
          %3441 = vmatpush1.msra.mxu0 0.0
          %3442 = vmatprep.subr.mxu0 0.0
          %3443 = vmatpush1.msra.mxu0 0.0
          %3444 = vmatprep.subr.mxu0 0.0
          %3445 = vmatpush1.msra.mxu0 0.0
          %3446 = vmatprep.subr.mxu0 0.0
          %3447 = vmatpush1.msra.mxu0 0.0
          %3448 = vmatprep.subr.mxu0 0.0
          %3449 = vmatpush1.msra.mxu0 0.0
          %3450 = vmatprep.subr.mxu0 0.0
          %3451 = vmatpush1.msra.mxu0 0.0
          %3452 = vmatprep.subr.mxu0 0.0
          %3453 = vmatpush1.msra.mxu0 0.0
          %3454 = vmatprep.subr.mxu0 0.0
          %3455 = vmatpush1.msra.mxu0 0.0
          %3456 = vmatprep.subr.mxu0 0.0
          %3457 = vmatpush1.msra.mxu0 0.0
          %3458 = vmatprep.subr.mxu0 0.0
          %3459 = vmatpush1.msra.mxu0 0.0
          %3460 = vmatprep.subr.mxu0 0.0
          %3461 = vmatpush1.msra.mxu0 0.0
          %3462 = vmatprep.subr.mxu0 0.0
          %3463 = vmatpush1.msra.mxu0 0.0
          %3464 = vmatprep.subr.mxu0 0.0
          %3465 = vmatpush1.msra.mxu0 0.0
          %3466 = vmatprep.subr.mxu0 0.0
          %3467 = vmatpush1.msra.mxu0 0.0
          %3468 = vmatprep.subr.mxu0 0.0
          %3469 = vmatpush1.msra.mxu0 0.0
          %3470 = vmatprep.subr.mxu0 0.0
          %3471 = vmatpush1.msra.mxu0 0.0
          %3472 = vmatprep.subr.mxu0 0.0
          %3473 = vmatpush1.msra.mxu0 0.0
          %3474 = vmatprep.subr.mxu0 0.0
          %3475 = vmatpush1.msra.mxu0 0.0
          %3476 = vmatprep.subr.mxu0 0.0
          %3477 = vmatpush1.msra.mxu0 0.0
          %3478 = vmatprep.subr.mxu0 0.0
          %3479 = vmatpush1.msra.mxu0 0.0
          %3480 = vmatprep.subr.mxu0 0.0
          %3481 = vmatpush1.msra.mxu0 0.0
          %3482 = vmatprep.subr.mxu0 0.0
          %3483 = vmatpush1.msra.mxu0 0.0
          %3484 = vmatprep.subr.mxu0 0.0
          %3485 = vmatpush1.msra.mxu0 0.0
          %3486 = vmatprep.subr.mxu0 0.0
          %3487 = vmatpush1.msra.mxu0 0.0
          %3488 = vmatprep.subr.mxu0 0.0
          %3489 = vmatpush1.msra.mxu0 0.0
          %3490 = vmatprep.subr.mxu0 0.0
          %3491 = vmatpush1.msra.mxu0 0.0
          %3492 = vmatprep.subr.mxu0 0.0
          %3493 = vmatpush1.msra.mxu0 0.0
          %3494 = vmatprep.subr.mxu0 0.0
          %3495 = vmatpush1.msra.mxu0 0.0
          %3496 = vmatprep.mubr.f32.mxu0 0.0
          %3497 = vmatmul.mubr.f32.gmra.mrb[0].mxu0 %v3430
          %v3498 = vpop.f32.mrb[0].mxu0
          %v3499 = vadd.f32 %v3428, %v3498
          %v3500 = vpop.f32.mrb[0].mxu0
          %3501 = vdwg.mxu0
          %vm3502 = vcmask 16384
          %3503 = vst.msk [vmem:[%s918] sm:$0x1] %vm3502, %v3499
        $region120: #{tpu_custom_call.1} parent=111 // pred_fallthru
          _
        %s3504 = sand.u32 %s625, 1
        %s3505 = scalar_lea.sflag [#allocation4], %s3504
        %s3506 = sand.u32 %s625, 1
        %s3507 = scalar_lea.vmem [#allocation3], %s3506
        // Predicated region
        $region121: #{tpu_custom_call.1} parent=111 // pred_check
          %p3508 = pneg %p635
        $region122: #{tpu_custom_call.1} parent=111 // pred_check_branch
          %3510 = sbr.rel (%p3508) target = $region124
        $region123: #{tpu_custom_call.1} parent=111 // pred_region
          %s3512 = ssub.s32 16, 16
          %3513 = vsyncadd %s3505, %s3512
          %s3514 = smul.addr %s41, 16
          %s3515 = scalar_lea.hbm %s23, %s3514
          %s3517 = sshll.u32 %s3507, 4
          %s3518 = int_to_ptr.vmem [resolvable:$true] %s3517
          %3520 = dma.vmem_to_hbm [thread:$0]  %s3518, 16, %s3515, %s3505
        $region124: #{tpu_custom_call.1} parent=111 // pred_fallthru
          _
      $region112: #{tpu_custom_call.1} parent=5 // pred_fallthru
        _
      %p3521 = scmp.le.s32.totalorder 2, %s32
      // Predicated region
      $region125: #{tpu_custom_call.1} parent=5 // pred_check
        %p3522 = pneg %p3521
      $region126: #{tpu_custom_call.1} parent=5 // pred_check_branch
        %3524 = sbr.rel (%p3522) target = $region128
      $region127: #{tpu_custom_call.1} parent=5 // pred_region
        %s3525 = ssub.s32 %s32, 2
        // Predicated region
        $region129: #{tpu_custom_call.1} parent=127 // pred_check
          %p3526 = pneg %p641
        $region130: #{tpu_custom_call.1} parent=127 // pred_check_branch
          %3528 = sbr.rel (%p3526) target = $region132
        $region131: #{tpu_custom_call.1} parent=127 // pred_region
          %s3529 = sand.u32 %s626, 1
          %s3530 = scalar_lea.sflag [#allocation4], %s3529
          %s3531 = sand.u32 %s626, 1
          %s3532 = scalar_lea.vmem [#allocation3], %s3531
          %3533 = dma.done %s3530, 16
        $region132: #{tpu_custom_call.1} parent=127 // pred_fallthru
          _
      $region128: #{tpu_custom_call.1} parent=5 // pred_fallthru
        _
    $region6: #{tpu_custom_call.1} parent=1 // loop_footer
      %s36 = sadd.s32 1, %s32
    $region7: #{tpu_custom_call.1} parent=1 // loop_footer_branch
      %31 = sbr.rel target = $region3
    $region8: #{tpu_custom_call.1} parent=1 // loop_exit
      _
    %3534 = vsyncpa [#allocation4], 1
    %s3535 = scalar_lea.sflag [#allocation4], 1
    %3536 = vsyncpa %s3535, 1

</llo_original>
